<compile_context>
chip_gen: v6e
topology: v6e:2x2x1
jax: 0.10.0
libtpu: 0.0.40
codegen_flags: <defaults>
</compile_context>

<pallas_src>
import functools

import jax
import jax.numpy as jnp
from jax import lax
from jax.experimental import pallas as pl
from jax.experimental.pallas import tpu as pltpu

LANES = 128
_HALO = 8          # left-halo width of the depthwise staging scratch (sublane aligned)


def _round_up(x, m):
    return (x + m - 1) // m * m


def _pad_axis(a, axis, new_size, value=0.0):
    pad = [(0, 0)] * a.ndim
    pad[axis] = (0, new_size - a.shape[axis])
    return jnp.pad(a, pad, constant_values=value)


def _pick_row_tile(Ho, W, Cin_p, hidden_p, Cout_p, stride, budget_bytes):
    """Largest output-row tile TH dividing Ho whose per-step working set fits
    the (chip-aware) budget.  TODO(synk): prime Ho falls back to TH=1 (correct
    but slow); support a remainder tile instead."""
    Wo = (W - 1) // stride + 1
    best = 1
    for th in range(1, Ho + 1):
        if Ho % th:
            continue
        L = (th - 1) * stride + 3
        need = (2 * L * W * Cin_p * 4                      # x_tile (double buffered)
                + L * (W + 2 * _HALO) * hidden_p * 2       # h_pad (bf16)
                + L * W * hidden_p * 4                     # h (live f32)
                + 2 * th * Wo * hidden_p * 4               # acc / h2
                + 2 * 2 * th * Wo * Cout_p * 4)            # y + double-buffered out
        if need <= budget_bytes:
            best = th
    return best


def _inverted_residual_kernel(
    # ---- inputs -------------------------------------------------------------
    x_hbm,        # (N*(H+2), W, Cin_p) f32, HBM (memory_space=ANY)
    w_exp_ref,    # (Cin_p, hidden_p) bf16   (BN1 scale folded in)
    b1_ref,       # (1, hidden_p) f32        (BN1 shift)
    w_dw_ref,     # (9, hidden_p) f32        (tap dy*3+dx of the 3x3 depthwise)
    b_dw_ref,     # (1, hidden_p) f32
    w_pw_ref,     # (hidden_p, hidden_p) bf16 (BN2 scale folded in)
    b2_ref,       # (1, hidden_p) f32        (b_pw*s2 + BN2 shift)
    w_proj_ref,   # (hidden_p, Cout_p) bf16  (BN3 scale folded in)
    b3_ref,       # (1, Cout_p) f32          (BN3 shift)
    # ---- outputs ------------------------------------------------------------
    out_ref,      # (1, TH, Wo, Cout_p) f32
    # ---- scratch ------------------------------------------------------------
    x_tile,       # VMEM (2, L, W, Cin_p) f32   -- double-buffered input slab
    h_pad,        # VMEM (L, W+2*_HALO, hidden_p) bf16 -- expanded act, W-padded
    dma_sem,      # DMA semaphores (2,)
    *, Hp2, H, W, Cin_p, Cout_p, hidden_p, stride, TH, use_res,
):
    n = pl.program_id(0)
    it = pl.program_id(1)
    n_tiles = pl.num_programs(1)
    L = (TH - 1) * stride + 3                   # input rows incl. 1-row halos
    Wo = (W - 1) // stride + 1
    slot = it % 2

    def slab(tile_idx, s):
        row0 = n * Hp2 + tile_idx * (TH * stride)
        return pltpu.make_async_copy(x_hbm.at[pl.ds(row0, L)],
                                     x_tile.at[s], dma_sem.at[s])

    # ---- prime / prefetch (double-buffered across the inner, sequential axis)
    @pl.when(it == 0)
    def _():
        slab(it, slot).start()                  # first slab of this image
        # zero the two W-halo columns once per (core, image); never overwritten
        z = jnp.zeros((L, 1, hidden_p), jnp.bfloat16)
        h_pad[:, _HALO - 1:_HALO, :] = z
        h_pad[:, _HALO + W:_HALO + W + 1, :] = z

    slab(it, slot).wait()                       # current slab is ready

    @pl.when(it + 1 < n_tiles)
    def _():
        slab(it + 1, (it + 1) % 2).start()      # overlap next slab with compute
    # TODO(synk): also prefetch the first slab of the next image; needs
    # core-local "is there a next n" knowledge under megacore sharding.

    # ---- 1) expansion 1x1 conv (bf16 MXU, f32 acc) + BN shift + ReLU6 --------
    x = x_tile[slot]                                           # (L, W, Cin_p)
    h = jnp.dot(x.reshape(L * W, Cin_p).astype(jnp.bfloat16), w_exp_ref[...],
                preferred_element_type=jnp.float32)            # (L*W, hidden_p)
    h = h + b1_ref[...]
    h = jnp.clip(h, 0.0, 6.0)

    # ---- 2) stage (bf16) into the sublane-aligned interior of h_pad ----------
    h_pad[:, _HALO:_HALO + W, :] = h.astype(jnp.bfloat16).reshape(L, W, hidden_p)

    # Depthwise zero-padding semantics: rows of h that correspond to the image's
    # H padding must be exactly zero (expand of a zero row is NOT zero).
    row0 = it * (TH * stride)                   # first padded-H row in the slab
    zrow = jnp.zeros((1, W, hidden_p), jnp.bfloat16)

    @pl.when(row0 == 0)
    def _():
        h_pad[0:1, _HALO:_HALO + W, :] = zrow

    @pl.when(row0 + L - 1 == H + 1)
    def _():
        h_pad[L - 1:L, _HALO:_HALO + W, :] = zrow

    # ---- 3) depthwise 3x3 conv (f32 accumulation over 9 bf16 taps) ------------
    # TODO(synk): on v6e/v7x generate the dx shifts with pltpu.roll (XLU) and do
    # the MACs in bf16 to cut vld/VALU pressure.
    w_dw = w_dw_ref[...]                                       # (9, hidden_p)
    acc = jnp.zeros((TH, Wo, hidden_p), jnp.float32)
    if stride == 1:
        for dy in range(3):
            for dx in range(3):
                tap = h_pad[dy:dy + TH, _HALO - 1 + dx:_HALO - 1 + dx + W, :]
                acc = acc + tap.astype(jnp.float32) * w_dw[dy * 3 + dx]
    else:
        p = h_pad[...]
        for dy in range(3):
            for dx in range(3):
                tap = lax.slice(
                    p, (dy, _HALO - 1 + dx, 0),
                    (dy + (TH - 1) * stride + 1,
                     _HALO - 1 + dx + (Wo - 1) * stride + 1, hidden_p),
                    (stride, stride, 1))
                acc = acc + tap.astype(jnp.float32) * w_dw[dy * 3 + dx]
    acc = acc + b_dw_ref[...]

    # ---- 4) pointwise 1x1 conv (+bias, BN folded) + ReLU6 (bf16 MXU) ----------
    h2 = jnp.dot(acc.reshape(TH * Wo, hidden_p).astype(jnp.bfloat16),
                 w_pw_ref[...], preferred_element_type=jnp.float32)
    h2 = h2 + b2_ref[...]
    h2 = jnp.clip(h2, 0.0, 6.0)

    # ---- 5) projection 1x1 conv + BN shift ------------------------------------
    y = jnp.dot(h2.astype(jnp.bfloat16), w_proj_ref[...],
                preferred_element_type=jnp.float32)
    y = y + b3_ref[...]
    y = y.reshape(TH, Wo, Cout_p)

    # ---- 6) residual ----------------------------------------------------------
    if use_res:
        # use_res implies stride == 1 (Wo == W) and Cin_p == Cout_p; the tile's
        # output rows are local input rows 1..TH (rows 0 / L-1 are halo).
        y = y + x[1:TH + 1, :, :]

    out_ref[0] = y.astype(out_ref.dtype)


def _fold_params(params):
    """Fold inference-mode BN scales into the 1x1 conv weights (f32, unpadded).
    Used identically by the kernel wrapper and the pure-JAX reference."""
    f32 = jnp.float32
    s1, b1 = params["bn1_s"].astype(f32), params["bn1_b"].astype(f32)
    s2, b2 = params["bn2_s"].astype(f32), params["bn2_b"].astype(f32)
    s3, b3 = params["bn3_s"].astype(f32), params["bn3_b"].astype(f32)
    return dict(
        w_exp=params["w_exp"].astype(f32) * s1,
        b1=b1,
        w_dw=params["w_dw"].astype(f32),
        b_dw=params["b_dw"].astype(f32),
        w_pw=params["w_pw"].astype(f32) * s2,
        b2=params["b_pw"].astype(f32) * s2 + b2,
        w_proj=params["w_proj"].astype(f32) * s3,
        b3=b3,
    )


def inverted_residual_block(x_nchw, params, *, stride=1, expand_ratio=6):
    """x_nchw: (N, Cin, H, W) float32 -> (N, Cout, Ho, Wo) float32."""
    N, Cin, H, W = x_nchw.shape
    hidden = Cin * expand_ratio
    Cout = params["w_proj"].shape[1]
    use_res = (stride == 1) and (Cin == Cout)
    Ho = (H - 1) // stride + 1
    Wo = (W - 1) // stride + 1

    # Lane-dense channel padding (padded channels provably stay exactly zero).
    Cin_p = _round_up(Cin, LANES)
    hidden_p = _round_up(hidden, LANES)
    Cout_p = _round_up(Cout, LANES)
    # TODO(synk): on v6e/v7x pad hidden to a multiple of 256 when hidden > 128
    # to fill the 2x256^2 MXU (kept at 128 here to avoid extra FLOPs).

    try:
        vmem_cap = int(pltpu.get_tpu_info().vmem_capacity_bytes)
    except Exception:
        vmem_cap = 64 << 20                       # v7x worst case
    slab_budget = max(4 << 20, min(16 << 20, vmem_cap // 8))

    TH = _pick_row_tile(Ho, W, Cin_p, hidden_p, Cout_p, stride, slab_budget)
    n_tiles = Ho // TH
    L = (TH - 1) * stride + 3

    # NHWC, 1-row zero halo in H, channels padded; (N, H+2) flattened so each
    # slab DMA is a single contiguous leading-dim slice.
    # TODO(synk): for chained blocks keep the network NHWC/pre-padded and drop
    # these wrapper transposes; bf16 activations in HBM for non-residual blocks.
    x_nhwc = jnp.transpose(x_nchw, (0, 2, 3, 1)).astype(jnp.float32)
    x_pad = jnp.pad(x_nhwc, ((0, 0), (1, 1), (0, 0), (0, Cin_p - Cin)))
    x_rows = x_pad.reshape(N * (H + 2), W, Cin_p)

    folded = _fold_params(params)
    bf16, f32 = jnp.bfloat16, jnp.float32
    w_exp = _pad_axis(_pad_axis(folded["w_exp"], 0, Cin_p), 1, hidden_p).astype(bf16)
    w_pw = _pad_axis(_pad_axis(folded["w_pw"], 0, hidden_p), 1, hidden_p).astype(bf16)
    w_proj = _pad_axis(_pad_axis(folded["w_proj"], 0, hidden_p), 1, Cout_p).astype(bf16)
    w_dw = _pad_axis(folded["w_dw"], 1, hidden_p).astype(f32)
    b_dw = _pad_axis(folded["b_dw"], 1, hidden_p).astype(f32)
    b1 = _pad_axis(folded["b1"], 1, hidden_p).astype(f32)
    b2 = _pad_axis(folded["b2"], 1, hidden_p).astype(f32)
    b3 = _pad_axis(folded["b3"], 1, Cout_p).astype(f32)

    kernel = functools.partial(
        _inverted_residual_kernel,
        Hp2=H + 2, H=H, W=W, Cin_p=Cin_p, Cout_p=Cout_p, hidden_p=hidden_p,
        stride=stride, TH=TH, use_res=use_res)

    const = lambda n, i: (0, 0)  # noqa: E731  (resident weight blocks)
    in_specs = [
        pl.BlockSpec(memory_space=pl.ANY),                 # x (manual DMA)
        pl.BlockSpec((Cin_p, hidden_p), const),            # w_exp (folded)
        pl.BlockSpec((1, hidden_p), const),                # b1
        pl.BlockSpec((9, hidden_p), const),                # w_dw
        pl.BlockSpec((1, hidden_p), const),                # b_dw
        pl.BlockSpec((hidden_p, hidden_p), const),         # w_pw (folded)
        pl.BlockSpec((1, hidden_p), const),                # b2
        pl.BlockSpec((hidden_p, Cout_p), const),           # w_proj (folded)
        pl.BlockSpec((1, Cout_p), const),                  # b3
    ]
    out_specs = pl.BlockSpec((1, TH, Wo, Cout_p), lambda n, i: (n, i, 0, 0))

    # VMEM budget: scratch + live intermediates + double-buffered out / weights.
    f32b, bf16b = 4, 2
    w_bytes = ((Cin_p * hidden_p + hidden_p * hidden_p + hidden_p * Cout_p) * bf16b
               + (9 + 3) * hidden_p * f32b + Cout_p * f32b)
    est = (2 * L * W * Cin_p * f32b
           + L * (W + 2 * _HALO) * hidden_p * bf16b
           + L * W * hidden_p * f32b
           + 2 * TH * Wo * hidden_p * f32b
           + 3 * TH * Wo * Cout_p * f32b
           + 2 * w_bytes)
    vmem_limit = int(min(max(2 * est, 32 << 20), int(0.8 * vmem_cap)))

    flops = 2 * N * (H * W * Cin * hidden
                     + 9 * Ho * Wo * hidden
                     + Ho * Wo * hidden * hidden
                     + Ho * Wo * hidden * Cout)
    bytes_accessed = (x_rows.size * 4 + N * Ho * Wo * Cout_p * 4
                      + (w_exp.size + w_pw.size + w_proj.size) * 2)
    cost = pl.CostEstimate(flops=flops, transcendentals=0,
                           bytes_accessed=bytes_accessed)

    y_pad = pl.pallas_call(
        kernel,
        out_shape=jax.ShapeDtypeStruct((N, Ho, Wo, Cout_p), jnp.float32),
        grid=(N, n_tiles),
        in_specs=in_specs,
        out_specs=out_specs,
        scratch_shapes=[
            pltpu.VMEM((2, L, W, Cin_p), jnp.float32),
            pltpu.VMEM((L, W + 2 * _HALO, hidden_p), jnp.bfloat16),
            pltpu.SemaphoreType.DMA((2,)),
        ],
        compiler_params=pltpu.CompilerParams(
            dimension_semantics=("parallel", "arbitrary"),
            vmem_limit_bytes=vmem_limit),
        cost_estimate=cost,
    )(x_rows, w_exp, b1, w_dw, b_dw, w_pw, b2, w_proj, b3)

    y = y_pad[:, :, :, :Cout]
    return jnp.transpose(y, (0, 3, 1, 2))


def _fold_bn(gamma, beta, mean, var, eps=1e-5):
    scale = gamma / jnp.sqrt(var + eps)
    shift = beta - mean * scale
    return scale[None, :], shift[None, :]


def make_params(key, in_channels, out_channels, expand_ratio=6):
    hidden = in_channels * expand_ratio
    ks = jax.random.split(key, 16)

    def rnd(k, shape, scale=0.2):
        return (scale * jax.random.normal(k, shape)).astype(jnp.float32)

    w_exp = rnd(ks[0], (in_channels, hidden))       # 1x1 convs as matmul mats
    w_dw = rnd(ks[1], (9, hidden))                  # tap-major depthwise weights
    b_dw = rnd(ks[2], (1, hidden), 0.05)
    w_pw = rnd(ks[3], (hidden, hidden))
    b_pw = rnd(ks[4], (1, hidden), 0.05)
    w_proj = rnd(ks[5], (hidden, out_channels))

    def bn(k, c):
        k1, k2, k3, k4 = jax.random.split(k, 4)
        gamma = 1.0 + 0.1 * jax.random.normal(k1, (c,))
        beta = 0.1 * jax.random.normal(k2, (c,))
        mean = 0.1 * jax.random.normal(k3, (c,))
        var = 0.5 + jax.random.uniform(k4, (c,))
        return _fold_bn(gamma.astype(jnp.float32), beta.astype(jnp.float32),
                        mean.astype(jnp.float32), var.astype(jnp.float32))

    bn1_s, bn1_b = bn(ks[6], hidden)
    bn2_s, bn2_b = bn(ks[7], hidden)
    bn3_s, bn3_b = bn(ks[8], out_channels)

    return dict(w_exp=w_exp, bn1_s=bn1_s, bn1_b=bn1_b,
                w_dw=w_dw, b_dw=b_dw, w_pw=w_pw, b_pw=b_pw,
                bn2_s=bn2_s, bn2_b=bn2_b,
                w_proj=w_proj, bn3_s=bn3_s, bn3_b=bn3_b)


def reference(x_nchw, params, *, stride=1, expand_ratio=6):
    """Pure-JAX reference mirroring the kernel's precision policy exactly:
    BN folded into weights, bf16 MXU matmuls with f32 accumulation, f32 9-tap
    depthwise on bf16-staged h with true zero padding, f32 residual."""
    N, Cin, H, W = x_nchw.shape
    hidden = Cin * expand_ratio
    Cout = params["w_proj"].shape[1]
    use_res = (stride == 1) and (Cin == Cout)
    Ho = (H - 1) // stride + 1
    Wo = (W - 1) // stride + 1
    bf16 = jnp.bfloat16
    folded = _fold_params(params)

    x = jnp.transpose(x_nchw, (0, 2, 3, 1)).astype(jnp.float32)   # NHWC
    h = jnp.einsum("nhwc,cd->nhwd", x.astype(bf16),
                   folded["w_exp"].astype(bf16),
                   preferred_element_type=jnp.float32)
    h = h + folded["b1"][0]
    h = jnp.clip(h, 0.0, 6.0)

    # depthwise 3x3, zero padding, explicit f32 tap sum over bf16-staged h
    hq = jnp.pad(h.astype(bf16), ((0, 0), (1, 1), (1, 1), (0, 0)))
    w_dw = folded["w_dw"]
    acc = jnp.zeros((N, Ho, Wo, hidden), jnp.float32)
    for dy in range(3):
        for dx in range(3):
            tap = lax.slice(hq, (0, dy, dx, 0),
                            (N, dy + (Ho - 1) * stride + 1,
                             dx + (Wo - 1) * stride + 1, hidden),
                            (1, stride, stride, 1))
            acc = acc + tap.astype(jnp.float32) * w_dw[dy * 3 + dx]
    acc = acc + folded["b_dw"][0]

    h2 = jnp.einsum("nhwc,cd->nhwd", acc.astype(bf16),
                    folded["w_pw"].astype(bf16),
                    preferred_element_type=jnp.float32) + folded["b2"][0]
    h2 = jnp.clip(h2, 0.0, 6.0)

    y = jnp.einsum("nhwc,cd->nhwd", h2.astype(bf16),
                   folded["w_proj"].astype(bf16),
                   preferred_element_type=jnp.float32) + folded["b3"][0]
    if use_res:
        y = y + x
    return jnp.transpose(y, (0, 3, 1, 2))


if __name__ == "__main__":
    N, Cin, H, W = 2, 4, 16, 16
    Cout, stride, expand_ratio = 4, 1, 6   # stride=1, Cin==Cout -> residual path

    key = jax.random.PRNGKey(0)
    kx, kp = jax.random.split(key)
    x = jax.random.normal(kx, (N, Cin, H, W), dtype=jnp.float32)
    params = make_params(kp, Cin, Cout, expand_ratio)

    out = inverted_residual_block(x, params, stride=stride,
                                  expand_ratio=expand_ratio)
    out = jax.block_until_ready(out)

    ref = jax.block_until_ready(
        reference(x, params, stride=stride, expand_ratio=expand_ratio))
    assert out.shape == ref.shape == (N, Cout, H, W)
    max_err = float(jnp.max(jnp.abs(out - ref)))
    # Kernel and reference share the same bf16-MXU / bf16-staging policy, so
    # they agree to ~1e-5; tolerance kept loose-ish for cross-backend slack.
    assert jnp.allclose(out, ref, rtol=2e-3, atol=2e-3), max_err

    print("KERNEL_OK")
</pallas_src>

<mosaic_0001>
module attributes {stable_mosaic.version = 11 : i64} {
  func.func @_inverted_residual_kernel(%arg0: i32, %arg1: i32, %arg2: memref<36x16x128xf32, #tpu.memory_space<any>>, %arg3: memref<128x128xbf16, #tpu.memory_space<vmem>>, %arg4: memref<1x128xf32, #tpu.memory_space<vmem>>, %arg5: memref<9x128xf32, #tpu.memory_space<vmem>>, %arg6: memref<1x128xf32, #tpu.memory_space<vmem>>, %arg7: memref<128x128xbf16, #tpu.memory_space<vmem>>, %arg8: memref<1x128xf32, #tpu.memory_space<vmem>>, %arg9: memref<128x128xbf16, #tpu.memory_space<vmem>>, %arg10: memref<1x128xf32, #tpu.memory_space<vmem>>, %arg11: memref<1x16x16x128xf32, #tpu.memory_space<vmem>>, %arg12: memref<2x18x16x128xf32, #tpu.memory_space<vmem>>, %arg13: memref<18x32x128xbf16, #tpu.memory_space<vmem>>, %arg14: memref<2x!tpu.dma_semaphore, #tpu.memory_space<semaphore_mem>>) attributes {dimension_semantics = [#tpu.dimension_semantics<parallel>, #tpu.dimension_semantics<arbitrary>], iteration_bounds = array<i64: 2, 1>, scalar_prefetch = 0 : i64, scratch_operands = 3 : i64, tpu.core_type = #tpu.core_type<tc>, window_params = [{}, {pipeline_mode = #tpu.pipeline_mode<synchronous>, transform_indices = @transform_1, window_bounds = array<i64: 128, 128>}, {pipeline_mode = #tpu.pipeline_mode<synchronous>, transform_indices = @transform_2, window_bounds = array<i64: 1, 128>}, {pipeline_mode = #tpu.pipeline_mode<synchronous>, transform_indices = @transform_3, window_bounds = array<i64: 9, 128>}, {pipeline_mode = #tpu.pipeline_mode<synchronous>, transform_indices = @transform_4, window_bounds = array<i64: 1, 128>}, {pipeline_mode = #tpu.pipeline_mode<synchronous>, transform_indices = @transform_5, window_bounds = array<i64: 128, 128>}, {pipeline_mode = #tpu.pipeline_mode<synchronous>, transform_indices = @transform_6, window_bounds = array<i64: 1, 128>}, {pipeline_mode = #tpu.pipeline_mode<synchronous>, transform_indices = @transform_7, window_bounds = array<i64: 128, 128>}, {pipeline_mode = #tpu.pipeline_mode<synchronous>, transform_indices = @transform_8, window_bounds = array<i64: 1, 128>}, {transform_indices = @transform_9, window_bounds = array<i64: 1, 16, 16, 128>}]} {
    %c2_i32 = arith.constant 2 : i32
    %c0_i32 = arith.constant 0 : i32
    %0 = arith.cmpi eq, %c2_i32, %c0_i32 : i32
    %c1_i32 = arith.constant 1 : i32
    %1 = arith.select %0, %c1_i32, %c2_i32 : i32
    %2 = arith.remsi %arg1, %1 : i32
    %c0_i32_0 = arith.constant 0 : i32
    %3 = arith.cmpi ne, %2, %c0_i32_0 : i32
    %c0_i32_1 = arith.constant 0 : i32
    %4 = arith.cmpi slt, %2, %c0_i32_1 : i32
    %c0_i32_2 = arith.constant 0 : i32
    %5 = arith.cmpi slt, %1, %c0_i32_2 : i32
    %6 = arith.xori %4, %5 : i1
    %7 = arith.andi %6, %3 : i1
    %8 = arith.addi %2, %1 : i32
    %9 = arith.select %7, %8, %2 : i32
    %c0_i32_3 = arith.constant 0 : i32
    %10 = arith.cmpi eq, %arg1, %c0_i32_3 : i32
    %11 = arith.extui %10 : i1 to i32
    %c0_i32_4 = arith.constant 0 : i32
    %12 = arith.cmpi ne, %11, %c0_i32_4 : i32
    scf.if %12 {
      %c18_i32_74 = arith.constant 18 : i32
      %153 = arith.muli %arg0, %c18_i32_74 : i32
      %c16_i32_75 = arith.constant 16 : i32
      %154 = arith.muli %arg1, %c16_i32_75 : i32
      %155 = arith.addi %153, %154 : i32
      %c0_i32_76 = arith.constant 0 : i32
      %c0_i32_77 = arith.constant 0 : i32
      %156 = tpu.memref_slice %arg2[%155, %c0_i32_76, %c0_i32_77] : memref<36x16x128xf32, #tpu.memory_space<any>> -> memref<18x16x128xf32, #tpu.memory_space<any>>
      %c0_i32_78 = arith.constant 0 : i32
      %c0_i32_79 = arith.constant 0 : i32
      %c0_i32_80 = arith.constant 0 : i32
      %157 = tpu.memref_slice %arg12[%9, %c0_i32_78, %c0_i32_79, %c0_i32_80] : memref<2x18x16x128xf32, #tpu.memory_space<vmem>> -> memref<1x18x16x128xf32, #tpu.memory_space<vmem>>
      %158 = tpu.memref_squeeze %157 : memref<1x18x16x128xf32, #tpu.memory_space<vmem>> -> memref<18x16x128xf32, #tpu.memory_space<vmem>>
      %159 = tpu.memref_slice %arg14[%9] : memref<2x!tpu.dma_semaphore, #tpu.memory_space<semaphore_mem>> -> memref<1x!tpu.dma_semaphore, #tpu.memory_space<semaphore_mem>>
      %160 = tpu.memref_squeeze %159 : memref<1x!tpu.dma_semaphore, #tpu.memory_space<semaphore_mem>> -> memref<!tpu.dma_semaphore, #tpu.memory_space<semaphore_mem>>
      tpu.enqueue_dma source(%156 : memref<18x16x128xf32, #tpu.memory_space<any>>) target(%158 : memref<18x16x128xf32, #tpu.memory_space<vmem>>) target_semaphore(%160 : memref<!tpu.dma_semaphore, #tpu.memory_space<semaphore_mem>>)
      %cst_81 = arith.constant 0.000000e+00 : bf16
      %161 = vector.broadcast %cst_81 : bf16 to vector<18x1x128xbf16>
      %c0_82 = arith.constant 0 : index
      %c7_83 = arith.constant 7 : index
      %c0_84 = arith.constant 0 : index
      %162 = vector.load %arg13[%c0_82, %c7_83, %c0_84] : memref<18x32x128xbf16, #tpu.memory_space<vmem>>, vector<18x1x128xbf16>
      tpu.vector_store %arg13[%c0_82, %c7_83, %c0_84], %161 {strides = array<i32>} : memref<18x32x128xbf16, #tpu.memory_space<vmem>>, vector<18x1x128xbf16>,
      %c0_85 = arith.constant 0 : index
      %c24 = arith.constant 24 : index
      %c0_86 = arith.constant 0 : index
      %163 = vector.load %arg13[%c0_85, %c24, %c0_86] : memref<18x32x128xbf16, #tpu.memory_space<vmem>>, vector<18x1x128xbf16>
      tpu.vector_store %arg13[%c0_85, %c24, %c0_86], %161 {strides = array<i32>} : memref<18x32x128xbf16, #tpu.memory_space<vmem>>, vector<18x1x128xbf16>,
    } else {
    }
    %c18_i32 = arith.constant 18 : i32
    %13 = arith.muli %arg0, %c18_i32 : i32
    %c16_i32 = arith.constant 16 : i32
    %14 = arith.muli %arg1, %c16_i32 : i32
    %15 = arith.addi %13, %14 : i32
    %c0_i32_5 = arith.constant 0 : i32
    %c0_i32_6 = arith.constant 0 : i32
    %16 = tpu.memref_slice %arg2[%15, %c0_i32_5, %c0_i32_6] : memref<36x16x128xf32, #tpu.memory_space<any>> -> memref<18x16x128xf32, #tpu.memory_space<any>>
    %c0_i32_7 = arith.constant 0 : i32
    %c0_i32_8 = arith.constant 0 : i32
    %c0_i32_9 = arith.constant 0 : i32
    %17 = tpu.memref_slice %arg12[%9, %c0_i32_7, %c0_i32_8, %c0_i32_9] : memref<2x18x16x128xf32, #tpu.memory_space<vmem>> -> memref<1x18x16x128xf32, #tpu.memory_space<vmem>>
    %18 = tpu.memref_squeeze %17 : memref<1x18x16x128xf32, #tpu.memory_space<vmem>> -> memref<18x16x128xf32, #tpu.memory_space<vmem>>
    %19 = tpu.memref_slice %arg14[%9] : memref<2x!tpu.dma_semaphore, #tpu.memory_space<semaphore_mem>> -> memref<1x!tpu.dma_semaphore, #tpu.memory_space<semaphore_mem>>
    %20 = tpu.memref_squeeze %19 : memref<1x!tpu.dma_semaphore, #tpu.memory_space<semaphore_mem>> -> memref<!tpu.dma_semaphore, #tpu.memory_space<semaphore_mem>>
    tpu.wait_dma2 semaphore(%20 : memref<!tpu.dma_semaphore, #tpu.memory_space<semaphore_mem>>) src(%16 : memref<18x16x128xf32, #tpu.memory_space<any>>) dst(%18 : memref<18x16x128xf32, #tpu.memory_space<vmem>>)
    %c1_i32_10 = arith.constant 1 : i32
    %21 = arith.addi %arg1, %c1_i32_10 : i32
    %c1_i32_11 = arith.constant 1 : i32
    %22 = arith.cmpi slt, %21, %c1_i32_11 : i32
    %23 = arith.extui %22 : i1 to i32
    %c0_i32_12 = arith.constant 0 : i32
    %24 = arith.cmpi ne, %23, %c0_i32_12 : i32
    scf.if %24 {
      %c1_i32_74 = arith.constant 1 : i32
      %153 = arith.addi %arg1, %c1_i32_74 : i32
      %c1_i32_75 = arith.constant 1 : i32
      %154 = arith.addi %arg1, %c1_i32_75 : i32
      %c2_i32_76 = arith.constant 2 : i32
      %c0_i32_77 = arith.constant 0 : i32
      %155 = arith.cmpi eq, %c2_i32_76, %c0_i32_77 : i32
      %c1_i32_78 = arith.constant 1 : i32
      %156 = arith.select %155, %c1_i32_78, %c2_i32_76 : i32
      %157 = arith.remsi %154, %156 : i32
      %c0_i32_79 = arith.constant 0 : i32
      %158 = arith.cmpi ne, %157, %c0_i32_79 : i32
      %c0_i32_80 = arith.constant 0 : i32
      %159 = arith.cmpi slt, %157, %c0_i32_80 : i32
      %c0_i32_81 = arith.constant 0 : i32
      %160 = arith.cmpi slt, %156, %c0_i32_81 : i32
      %161 = arith.xori %159, %160 : i1
      %162 = arith.andi %161, %158 : i1
      %163 = arith.addi %157, %156 : i32
      %164 = arith.select %162, %163, %157 : i32
      %c18_i32_82 = arith.constant 18 : i32
      %165 = arith.muli %arg0, %c18_i32_82 : i32
      %c16_i32_83 = arith.constant 16 : i32
      %166 = arith.muli %153, %c16_i32_83 : i32
      %167 = arith.addi %165, %166 : i32
      %c0_i32_84 = arith.constant 0 : i32
      %c0_i32_85 = arith.constant 0 : i32
      %168 = tpu.memref_slice %arg2[%167, %c0_i32_84, %c0_i32_85] : memref<36x16x128xf32, #tpu.memory_space<any>> -> memref<18x16x128xf32, #tpu.memory_space<any>>
      %c0_i32_86 = arith.constant 0 : i32
      %c0_i32_87 = arith.constant 0 : i32
      %c0_i32_88 = arith.constant 0 : i32
      %169 = tpu.memref_slice %arg12[%164, %c0_i32_86, %c0_i32_87, %c0_i32_88] : memref<2x18x16x128xf32, #tpu.memory_space<vmem>> -> memref<1x18x16x128xf32, #tpu.memory_space<vmem>>
      %170 = tpu.memref_squeeze %169 : memref<1x18x16x128xf32, #tpu.memory_space<vmem>> -> memref<18x16x128xf32, #tpu.memory_space<vmem>>
      %171 = tpu.memref_slice %arg14[%164] : memref<2x!tpu.dma_semaphore, #tpu.memory_space<semaphore_mem>> -> memref<1x!tpu.dma_semaphore, #tpu.memory_space<semaphore_mem>>
      %172 = tpu.memref_squeeze %171 : memref<1x!tpu.dma_semaphore, #tpu.memory_space<semaphore_mem>> -> memref<!tpu.dma_semaphore, #tpu.memory_space<semaphore_mem>>
      tpu.enqueue_dma source(%168 : memref<18x16x128xf32, #tpu.memory_space<any>>) target(%170 : memref<18x16x128xf32, #tpu.memory_space<vmem>>) target_semaphore(%172 : memref<!tpu.dma_semaphore, #tpu.memory_space<semaphore_mem>>)
    } else {
    }
    %25 = arith.index_cast %9 : i32 to index
    %c0 = arith.constant 0 : index
    %c0_13 = arith.constant 0 : index
    %c0_14 = arith.constant 0 : index
    %26 = vector.load %arg12[%25, %c0, %c0_13, %c0_14] : memref<2x18x16x128xf32, #tpu.memory_space<vmem>>, vector<1x18x16x128xf32>
    %27 = vector.shape_cast %26 : vector<1x18x16x128xf32> to vector<18x16x128xf32>
    %28 = vector.shape_cast %27 : vector<18x16x128xf32> to vector<288x128xf32>
    %29 = arith.truncf %28 : vector<288x128xf32> to vector<288x128xbf16>
    %c0_15 = arith.constant 0 : index
    %c0_16 = arith.constant 0 : index
    %30 = vector.load %arg3[%c0_15, %c0_16] : memref<128x128xbf16, #tpu.memory_space<vmem>>, vector<128x128xbf16>
    %cst = arith.constant dense<0.000000e+00> : vector<288x128xf32>
    %31 = tpu.matmul %29, %30, %cst {dimension_numbers = #tpu.dot_dimension_numbers<[1], [0], [0], [1], [0, 0, 1, 1], [], []>} : vector<288x128xbf16>, vector<128x128xbf16>, vector<288x128xf32> -> vector<288x128xf32>
    %c0_17 = arith.constant 0 : index
    %c0_18 = arith.constant 0 : index
    %32 = vector.load %arg4[%c0_17, %c0_18] : memref<1x128xf32, #tpu.memory_space<vmem>>, vector<1x128xf32>
    %33 = vector.broadcast %32 : vector<1x128xf32> to vector<288x128xf32>
    %34 = arith.addf %31, %33 : vector<288x128xf32>
    %cst_19 = arith.constant 0.000000e+00 : f32
    %cst_20 = arith.constant 6.000000e+00 : f32
    %35 = vector.broadcast %cst_19 : f32 to vector<288x128xf32>
    %36 = arith.maximumf %35, %34 : vector<288x128xf32>
    %37 = vector.broadcast %cst_20 : f32 to vector<288x128xf32>
    %38 = arith.minimumf %37, %36 : vector<288x128xf32>
    %39 = arith.truncf %38 : vector<288x128xf32> to vector<288x128xbf16>
    %40 = vector.shape_cast %39 : vector<288x128xbf16> to vector<18x16x128xbf16>
    %c0_21 = arith.constant 0 : index
    %c8 = arith.constant 8 : index
    %c0_22 = arith.constant 0 : index
    %41 = vector.load %arg13[%c0_21, %c8, %c0_22] : memref<18x32x128xbf16, #tpu.memory_space<vmem>>, vector<18x16x128xbf16>
    tpu.vector_store %arg13[%c0_21, %c8, %c0_22], %40 {strides = array<i32>} : memref<18x32x128xbf16, #tpu.memory_space<vmem>>, vector<18x16x128xbf16>,
    %c16_i32_23 = arith.constant 16 : i32
    %42 = arith.muli %arg1, %c16_i32_23 : i32
    %cst_24 = arith.constant 0.000000e+00 : bf16
    %43 = vector.broadcast %cst_24 : bf16 to vector<1x16x128xbf16>
    %c0_i32_25 = arith.constant 0 : i32
    %44 = arith.cmpi eq, %42, %c0_i32_25 : i32
    %45 = arith.extui %44 : i1 to i32
    %c0_i32_26 = arith.constant 0 : i32
    %46 = arith.cmpi ne, %45, %c0_i32_26 : i32
    scf.if %46 {
      %c0_74 = arith.constant 0 : index
      %c8_75 = arith.constant 8 : index
      %c0_76 = arith.constant 0 : index
      %153 = vector.load %arg13[%c0_74, %c8_75, %c0_76] : memref<18x32x128xbf16, #tpu.memory_space<vmem>>, vector<1x16x128xbf16>
      tpu.vector_store %arg13[%c0_74, %c8_75, %c0_76], %43 {strides = array<i32>} : memref<18x32x128xbf16, #tpu.memory_space<vmem>>, vector<1x16x128xbf16>,
    } else {
    }
    %c18_i32_27 = arith.constant 18 : i32
    %47 = arith.addi %42, %c18_i32_27 : i32
    %c1_i32_28 = arith.constant 1 : i32
    %48 = arith.subi %47, %c1_i32_28 : i32
    %c17_i32 = arith.constant 17 : i32
    %49 = arith.cmpi eq, %48, %c17_i32 : i32
    %50 = arith.extui %49 : i1 to i32
    %c0_i32_29 = arith.constant 0 : i32
    %51 = arith.cmpi ne, %50, %c0_i32_29 : i32
    scf.if %51 {
      %c17 = arith.constant 17 : index
      %c8_74 = arith.constant 8 : index
      %c0_75 = arith.constant 0 : index
      %153 = vector.load %arg13[%c17, %c8_74, %c0_75] : memref<18x32x128xbf16, #tpu.memory_space<vmem>>, vector<1x16x128xbf16>
      tpu.vector_store %arg13[%c17, %c8_74, %c0_75], %43 {strides = array<i32>} : memref<18x32x128xbf16, #tpu.memory_space<vmem>>, vector<1x16x128xbf16>,
    } else {
    }
    %c0_30 = arith.constant 0 : index
    %c0_31 = arith.constant 0 : index
    %52 = vector.load %arg5[%c0_30, %c0_31] : memref<9x128xf32, #tpu.memory_space<vmem>>, vector<9x128xf32>
    %cst_32 = arith.constant 0.000000e+00 : f32
    %53 = vector.broadcast %cst_32 : f32 to vector<16x16x128xf32>
    %c0_33 = arith.constant 0 : index
    %c7 = arith.constant 7 : index
    %c0_34 = arith.constant 0 : index
    %54 = vector.load %arg13[%c0_33, %c7, %c0_34] : memref<18x32x128xbf16, #tpu.memory_space<vmem>>, vector<16x16x128xbf16>
    %55 = arith.extf %54 : vector<16x16x128xbf16> to vector<16x16x128xf32>
    %56 = vector.extract_strided_slice %52 {offsets = [0, 0], sizes = [1, 128], strides = [1, 1]} : vector<9x128xf32> to vector<1x128xf32>
    %57 = vector.shape_cast %56 : vector<1x128xf32> to vector<128xf32>
    %58 = vector.shape_cast %57 : vector<128xf32> to vector<1x1x128xf32>
    %59 = vector.broadcast %58 : vector<1x1x128xf32> to vector<16x16x128xf32>
    %60 = arith.mulf %55, %59 : vector<16x16x128xf32>
    %61 = arith.addf %53, %60 : vector<16x16x128xf32>
    %c0_35 = arith.constant 0 : index
    %c8_36 = arith.constant 8 : index
    %c0_37 = arith.constant 0 : index
    %62 = vector.load %arg13[%c0_35, %c8_36, %c0_37] : memref<18x32x128xbf16, #tpu.memory_space<vmem>>, vector<16x16x128xbf16>
    %63 = arith.extf %62 : vector<16x16x128xbf16> to vector<16x16x128xf32>
    %64 = vector.extract_strided_slice %52 {offsets = [1, 0], sizes = [1, 128], strides = [1, 1]} : vector<9x128xf32> to vector<1x128xf32>
    %65 = vector.shape_cast %64 : vector<1x128xf32> to vector<128xf32>
    %66 = vector.shape_cast %65 : vector<128xf32> to vector<1x1x128xf32>
    %67 = vector.broadcast %66 : vector<1x1x128xf32> to vector<16x16x128xf32>
    %68 = arith.mulf %63, %67 : vector<16x16x128xf32>
    %69 = arith.addf %61, %68 : vector<16x16x128xf32>
    %c0_38 = arith.constant 0 : index
    %c9 = arith.constant 9 : index
    %c0_39 = arith.constant 0 : index
    %70 = vector.load %arg13[%c0_38, %c9, %c0_39] : memref<18x32x128xbf16, #tpu.memory_space<vmem>>, vector<16x16x128xbf16>
    %71 = arith.extf %70 : vector<16x16x128xbf16> to vector<16x16x128xf32>
    %72 = vector.extract_strided_slice %52 {offsets = [2, 0], sizes = [1, 128], strides = [1, 1]} : vector<9x128xf32> to vector<1x128xf32>
    %73 = vector.shape_cast %72 : vector<1x128xf32> to vector<128xf32>
    %74 = vector.shape_cast %73 : vector<128xf32> to vector<1x1x128xf32>
    %75 = vector.broadcast %74 : vector<1x1x128xf32> to vector<16x16x128xf32>
    %76 = arith.mulf %71, %75 : vector<16x16x128xf32>
    %77 = arith.addf %69, %76 : vector<16x16x128xf32>
    %c1 = arith.constant 1 : index
    %c7_40 = arith.constant 7 : index
    %c0_41 = arith.constant 0 : index
    %78 = vector.load %arg13[%c1, %c7_40, %c0_41] : memref<18x32x128xbf16, #tpu.memory_space<vmem>>, vector<16x16x128xbf16>
    %79 = arith.extf %78 : vector<16x16x128xbf16> to vector<16x16x128xf32>
    %80 = vector.extract_strided_slice %52 {offsets = [3, 0], sizes = [1, 128], strides = [1, 1]} : vector<9x128xf32> to vector<1x128xf32>
    %81 = vector.shape_cast %80 : vector<1x128xf32> to vector<128xf32>
    %82 = vector.shape_cast %81 : vector<128xf32> to vector<1x1x128xf32>
    %83 = vector.broadcast %82 : vector<1x1x128xf32> to vector<16x16x128xf32>
    %84 = arith.mulf %79, %83 : vector<16x16x128xf32>
    %85 = arith.addf %77, %84 : vector<16x16x128xf32>
    %c1_42 = arith.constant 1 : index
    %c8_43 = arith.constant 8 : index
    %c0_44 = arith.constant 0 : index
    %86 = vector.load %arg13[%c1_42, %c8_43, %c0_44] : memref<18x32x128xbf16, #tpu.memory_space<vmem>>, vector<16x16x128xbf16>
    %87 = arith.extf %86 : vector<16x16x128xbf16> to vector<16x16x128xf32>
    %88 = vector.extract_strided_slice %52 {offsets = [4, 0], sizes = [1, 128], strides = [1, 1]} : vector<9x128xf32> to vector<1x128xf32>
    %89 = vector.shape_cast %88 : vector<1x128xf32> to vector<128xf32>
    %90 = vector.shape_cast %89 : vector<128xf32> to vector<1x1x128xf32>
    %91 = vector.broadcast %90 : vector<1x1x128xf32> to vector<16x16x128xf32>
    %92 = arith.mulf %87, %91 : vector<16x16x128xf32>
    %93 = arith.addf %85, %92 : vector<16x16x128xf32>
    %c1_45 = arith.constant 1 : index
    %c9_46 = arith.constant 9 : index
    %c0_47 = arith.constant 0 : index
    %94 = vector.load %arg13[%c1_45, %c9_46, %c0_47] : memref<18x32x128xbf16, #tpu.memory_space<vmem>>, vector<16x16x128xbf16>
    %95 = arith.extf %94 : vector<16x16x128xbf16> to vector<16x16x128xf32>
    %96 = vector.extract_strided_slice %52 {offsets = [5, 0], sizes = [1, 128], strides = [1, 1]} : vector<9x128xf32> to vector<1x128xf32>
    %97 = vector.shape_cast %96 : vector<1x128xf32> to vector<128xf32>
    %98 = vector.shape_cast %97 : vector<128xf32> to vector<1x1x128xf32>
    %99 = vector.broadcast %98 : vector<1x1x128xf32> to vector<16x16x128xf32>
    %100 = arith.mulf %95, %99 : vector<16x16x128xf32>
    %101 = arith.addf %93, %100 : vector<16x16x128xf32>
    %c2 = arith.constant 2 : index
    %c7_48 = arith.constant 7 : index
    %c0_49 = arith.constant 0 : index
    %102 = vector.load %arg13[%c2, %c7_48, %c0_49] : memref<18x32x128xbf16, #tpu.memory_space<vmem>>, vector<16x16x128xbf16>
    %103 = arith.extf %102 : vector<16x16x128xbf16> to vector<16x16x128xf32>
    %104 = vector.extract_strided_slice %52 {offsets = [6, 0], sizes = [1, 128], strides = [1, 1]} : vector<9x128xf32> to vector<1x128xf32>
    %105 = vector.shape_cast %104 : vector<1x128xf32> to vector<128xf32>
    %106 = vector.shape_cast %105 : vector<128xf32> to vector<1x1x128xf32>
    %107 = vector.broadcast %106 : vector<1x1x128xf32> to vector<16x16x128xf32>
    %108 = arith.mulf %103, %107 : vector<16x16x128xf32>
    %109 = arith.addf %101, %108 : vector<16x16x128xf32>
    %c2_50 = arith.constant 2 : index
    %c8_51 = arith.constant 8 : index
    %c0_52 = arith.constant 0 : index
    %110 = vector.load %arg13[%c2_50, %c8_51, %c0_52] : memref<18x32x128xbf16, #tpu.memory_space<vmem>>, vector<16x16x128xbf16>
    %111 = arith.extf %110 : vector<16x16x128xbf16> to vector<16x16x128xf32>
    %112 = vector.extract_strided_slice %52 {offsets = [7, 0], sizes = [1, 128], strides = [1, 1]} : vector<9x128xf32> to vector<1x128xf32>
    %113 = vector.shape_cast %112 : vector<1x128xf32> to vector<128xf32>
    %114 = vector.shape_cast %113 : vector<128xf32> to vector<1x1x128xf32>
    %115 = vector.broadcast %114 : vector<1x1x128xf32> to vector<16x16x128xf32>
    %116 = arith.mulf %111, %115 : vector<16x16x128xf32>
    %117 = arith.addf %109, %116 : vector<16x16x128xf32>
    %c2_53 = arith.constant 2 : index
    %c9_54 = arith.constant 9 : index
    %c0_55 = arith.constant 0 : index
    %118 = vector.load %arg13[%c2_53, %c9_54, %c0_55] : memref<18x32x128xbf16, #tpu.memory_space<vmem>>, vector<16x16x128xbf16>
    %119 = arith.extf %118 : vector<16x16x128xbf16> to vector<16x16x128xf32>
    %120 = vector.extract_strided_slice %52 {offsets = [8, 0], sizes = [1, 128], strides = [1, 1]} : vector<9x128xf32> to vector<1x128xf32>
    %121 = vector.shape_cast %120 : vector<1x128xf32> to vector<128xf32>
    %122 = vector.shape_cast %121 : vector<128xf32> to vector<1x1x128xf32>
    %123 = vector.broadcast %122 : vector<1x1x128xf32> to vector<16x16x128xf32>
    %124 = arith.mulf %119, %123 : vector<16x16x128xf32>
    %125 = arith.addf %117, %124 : vector<16x16x128xf32>
    %c0_56 = arith.constant 0 : index
    %c0_57 = arith.constant 0 : index
    %126 = vector.load %arg6[%c0_56, %c0_57] : memref<1x128xf32, #tpu.memory_space<vmem>>, vector<1x128xf32>
    %127 = vector.shape_cast %126 : vector<1x128xf32> to vector<1x1x128xf32>
    %128 = vector.broadcast %127 : vector<1x1x128xf32> to vector<16x16x128xf32>
    %129 = arith.addf %125, %128 : vector<16x16x128xf32>
    %130 = vector.shape_cast %129 : vector<16x16x128xf32> to vector<256x128xf32>
    %131 = arith.truncf %130 : vector<256x128xf32> to vector<256x128xbf16>
    %c0_58 = arith.constant 0 : index
    %c0_59 = arith.constant 0 : index
    %132 = vector.load %arg7[%c0_58, %c0_59] : memref<128x128xbf16, #tpu.memory_space<vmem>>, vector<128x128xbf16>
    %cst_60 = arith.constant dense<0.000000e+00> : vector<256x128xf32>
    %133 = tpu.matmul %131, %132, %cst_60 {dimension_numbers = #tpu.dot_dimension_numbers<[1], [0], [0], [1], [0, 0, 1, 1], [], []>} : vector<256x128xbf16>, vector<128x128xbf16>, vector<256x128xf32> -> vector<256x128xf32>
    %c0_61 = arith.constant 0 : index
    %c0_62 = arith.constant 0 : index
    %134 = vector.load %arg8[%c0_61, %c0_62] : memref<1x128xf32, #tpu.memory_space<vmem>>, vector<1x128xf32>
    %135 = vector.broadcast %134 : vector<1x128xf32> to vector<256x128xf32>
    %136 = arith.addf %133, %135 : vector<256x128xf32>
    %cst_63 = arith.constant 0.000000e+00 : f32
    %cst_64 = arith.constant 6.000000e+00 : f32
    %137 = vector.broadcast %cst_63 : f32 to vector<256x128xf32>
    %138 = arith.maximumf %137, %136 : vector<256x128xf32>
    %139 = vector.broadcast %cst_64 : f32 to vector<256x128xf32>
    %140 = arith.minimumf %139, %138 : vector<256x128xf32>
    %141 = arith.truncf %140 : vector<256x128xf32> to vector<256x128xbf16>
    %c0_65 = arith.constant 0 : index
    %c0_66 = arith.constant 0 : index
    %142 = vector.load %arg9[%c0_65, %c0_66] : memref<128x128xbf16, #tpu.memory_space<vmem>>, vector<128x128xbf16>
    %cst_67 = arith.constant dense<0.000000e+00> : vector<256x128xf32>
    %143 = tpu.matmul %141, %142, %cst_67 {dimension_numbers = #tpu.dot_dimension_numbers<[1], [0], [0], [1], [0, 0, 1, 1], [], []>} : vector<256x128xbf16>, vector<128x128xbf16>, vector<256x128xf32> -> vector<256x128xf32>
    %c0_68 = arith.constant 0 : index
    %c0_69 = arith.constant 0 : index
    %144 = vector.load %arg10[%c0_68, %c0_69] : memref<1x128xf32, #tpu.memory_space<vmem>>, vector<1x128xf32>
    %145 = vector.broadcast %144 : vector<1x128xf32> to vector<256x128xf32>
    %146 = arith.addf %143, %145 : vector<256x128xf32>
    %147 = vector.shape_cast %146 : vector<256x128xf32> to vector<16x16x128xf32>
    %148 = vector.extract_strided_slice %27 {offsets = [1, 0, 0], sizes = [16, 16, 128], strides = [1, 1, 1]} : vector<18x16x128xf32> to vector<16x16x128xf32>
    %149 = arith.addf %147, %148 : vector<16x16x128xf32>
    %c0_70 = arith.constant 0 : index
    %c0_71 = arith.constant 0 : index
    %c0_72 = arith.constant 0 : index
    %c0_73 = arith.constant 0 : index
    %150 = vector.load %arg11[%c0_70, %c0_71, %c0_72, %c0_73] : memref<1x16x16x128xf32, #tpu.memory_space<vmem>>, vector<1x16x16x128xf32>
    %151 = vector.shape_cast %150 : vector<1x16x16x128xf32> to vector<16x16x128xf32>
    %152 = vector.shape_cast %149 : vector<16x16x128xf32> to vector<1x16x16x128xf32>
    tpu.vector_store %arg11[%c0_70, %c0_71, %c0_72, %c0_73], %152 {strides = array<i32>} : memref<1x16x16x128xf32, #tpu.memory_space<vmem>>, vector<1x16x16x128xf32>,
    return
  }
  func.func @transform_1(%arg0: i32, %arg1: i32) -> (i32, i32) {
    %c0_i32 = arith.constant 0 : i32
    %c0_i32_0 = arith.constant 0 : i32
    %c0_i32_1 = arith.constant 0 : i32
    return %c0_i32, %c0_i32_0 : i32, i32
  }
  func.func @transform_2(%arg0: i32, %arg1: i32) -> (i32, i32) {
    %c0_i32 = arith.constant 0 : i32
    %c0_i32_0 = arith.constant 0 : i32
    %c0_i32_1 = arith.constant 0 : i32
    return %c0_i32, %c0_i32_0 : i32, i32
  }
  func.func @transform_3(%arg0: i32, %arg1: i32) -> (i32, i32) {
    %c0_i32 = arith.constant 0 : i32
    %c0_i32_0 = arith.constant 0 : i32
    %c0_i32_1 = arith.constant 0 : i32
    return %c0_i32, %c0_i32_0 : i32, i32
  }
  func.func @transform_4(%arg0: i32, %arg1: i32) -> (i32, i32) {
    %c0_i32 = arith.constant 0 : i32
    %c0_i32_0 = arith.constant 0 : i32
    %c0_i32_1 = arith.constant 0 : i32
    return %c0_i32, %c0_i32_0 : i32, i32
  }
  func.func @transform_5(%arg0: i32, %arg1: i32) -> (i32, i32) {
    %c0_i32 = arith.constant 0 : i32
    %c0_i32_0 = arith.constant 0 : i32
    %c0_i32_1 = arith.constant 0 : i32
    return %c0_i32, %c0_i32_0 : i32, i32
  }
  func.func @transform_6(%arg0: i32, %arg1: i32) -> (i32, i32) {
    %c0_i32 = arith.constant 0 : i32
    %c0_i32_0 = arith.constant 0 : i32
    %c0_i32_1 = arith.constant 0 : i32
    return %c0_i32, %c0_i32_0 : i32, i32
  }
  func.func @transform_7(%arg0: i32, %arg1: i32) -> (i32, i32) {
    %c0_i32 = arith.constant 0 : i32
    %c0_i32_0 = arith.constant 0 : i32
    %c0_i32_1 = arith.constant 0 : i32
    return %c0_i32, %c0_i32_0 : i32, i32
  }
  func.func @transform_8(%arg0: i32, %arg1: i32) -> (i32, i32) {
    %c0_i32 = arith.constant 0 : i32
    %c0_i32_0 = arith.constant 0 : i32
    %c0_i32_1 = arith.constant 0 : i32
    return %c0_i32, %c0_i32_0 : i32, i32
  }
  func.func @transform_9(%arg0: i32, %arg1: i32) -> (i32, i32, i32, i32) {
    %c0_i32 = arith.constant 0 : i32
    %c0_i32_0 = arith.constant 0 : i32
    %c0_i32_1 = arith.constant 0 : i32
    return %arg0, %arg1, %c0_i32, %c0_i32_0 : i32, i32, i32, i32
  }
}

</mosaic_0001>

<llo_original>
// kernel: tpu_custom_call.1
$region0: #{tpu_custom_call.1}
  #allocation0 [shape = 'u32[]', space=smem, size = 0x4, offset = 0x4, fixed_abs, tag = 'smem constant byte address 0x4 - core index']
  #allocation1 [shape = 'u32[144,128]{1,0:T(1,128)}', space=vmem, size = 0x12000, scoped, tag = 'internal scratch']
  #allocation2 [shape = 'f32[2,18,16,128]{3,2,1,0:T(8,128)}', space=vmem, size = 0x48000, scoped, tag = 'scratch operand']
  #allocation3 [shape = 'bf16[18,32,128]{2,1,0:T(8,128)(2,1)}', space=vmem, size = 0x24000, scoped, tag = 'scratch operand']
  #allocation4 [shape = 's32[2]{0}', space=sflag, size = 0x8, scoped, tag = 'scratch operand']
  #allocation14 [shape = 's32[]', space=sflag, size = 0x4, offset = 0, fixed_abs, tag = 'sflag constant byte address 0x0 - dummy sync flag']
  #allocation15 [shape = 's32[]', space=sflag, size = 0x4, offset = 0, fixed_abs, tag = 'sflag constant byte address 0x0 - dummy sync flag']
  #allocation16 [shape = 'u32[]', space=smem, size = 0x4, offset = 0x44, fixed_abs, tag = 'smem constant byte address 0x44 - assertion arg 0']
  #allocation17 [shape = 'u32[]', space=smem, size = 0x4, offset = 0x48, fixed_abs, tag = 'smem constant byte address 0x48 - assertion arg 1']
  #allocation18 [shape = 's32[]', space=sflag, size = 0x4, offset = 0, fixed_abs, tag = 'sflag constant byte address 0x0 - dummy sync flag']
  #allocation19 [shape = 's32[]', space=sflag, size = 0x4, offset = 0, fixed_abs, tag = 'sflag constant byte address 0x0 - dummy sync flag']
  %s0 = inlined_call_operand.hbm [shape: f32[36,16,128], index: 0, kind: input, shape index: {}]
  %s1 = inlined_call_operand.hbm [shape: bf16[128,128], index: 1, kind: input, shape index: {}]
  %s2 = inlined_call_operand.vmem [shape: f32[1,128], index: 2, kind: input, shape index: {}]
  %s3 = inlined_call_operand.hbm [shape: f32[9,128], index: 3, kind: input, shape index: {}]
  %s4 = inlined_call_operand.vmem [shape: f32[1,128], index: 4, kind: input, shape index: {}]
  %s5 = inlined_call_operand.hbm [shape: bf16[128,128], index: 5, kind: input, shape index: {}]
  %s6 = inlined_call_operand.vmem [shape: f32[1,128], index: 6, kind: input, shape index: {}]
  %s7 = inlined_call_operand.hbm [shape: bf16[128,128], index: 7, kind: input, shape index: {}]
  %s8 = inlined_call_operand.vmem [shape: f32[1,128], index: 8, kind: input, shape index: {}]
  %s9 = inlined_call_operand.hbm [shape: f32[2,16,16,128], index: 9, kind: output, shape index: {}]
  %s10 = sld [smem:[#allocation0]]
  $region105: #{tpu_custom_call.1} parent=0
    _
  %s12 = ssub.s32 1, %s10
  %s13 = scalar_select 0, %s12, %s10
  $region1: #{tpu_custom_call.1} parent=0
    #allocation5 [shape = 'u8[32768]{0}', space=vmem, size = 0x8000, scoped, tag = 'input window, operand 1, single buffered']
    #allocation6 [shape = 's32[2]{0}', space=sflag, size = 0x8, scoped, tag = 'scoped memory for tpu_custom_call.1']
    #allocation7 [shape = 's32[2]{0}', space=sflag, size = 0x8, scoped, tag = 'scoped memory for tpu_custom_call.1']
    #allocation8 [shape = 'u8[8192]{0}', space=vmem, size = 0x2000, scoped, tag = 'input window, operand 3, single buffered']
    #allocation9 [shape = 's32[1]{0}', space=sflag, size = 0x4, scoped, tag = 'scoped memory for tpu_custom_call.1']
    #allocation10 [shape = 'u8[32768]{0}', space=vmem, size = 0x8000, scoped, tag = 'input window, operand 5, single buffered']
    #allocation11 [shape = 'u8[32768]{0}', space=vmem, size = 0x8000, scoped, tag = 'input window, operand 7, single buffered']
    #allocation12 [shape = 's32[1]{0}', space=sflag, size = 0x4, scoped, tag = 'scoped memory for tpu_custom_call.1']
    #allocation13 [shape = 'u8[262144]{0}', space=vmem, size = 0x40000, scoped, tag = 'output window, operand 0']
    %14 = vsyncpa [#allocation6], 0
    %15 = vsyncpa [#allocation9], 0
    %16 = vsyncpa [#allocation12], 0
    %17 = vsyncpa [#allocation7], 0
    %s18 = scalar_lea.sflag [#allocation7], 1
    %19 = vsyncpa %s18, 0
    loop: start=0, step=1, limit=4
    $region2: #{tpu_custom_call.1} parent=1 // loop_pre_header
      _
    $region3: #{tpu_custom_call.1} parent=1 // loop_header
      %s21 = sphi 0, %s25
      %p22 = scmp.ge.s32.totalorder %s21, 4
      %s28 = sphi 0, %s40
      %s29 = sphi 0, %s36
      %s30 = sphi 0, %s28
      %s31 = sphi 0, %s29
      %s32 = sphi 0, %s30
      %s33 = sphi 0, %s31
      %s41 = sphi 0, %s41
      %s43 = sphi 0, %s41
      %s44 = sphi 0, %s43
      %s58 = sphi 0, %s44
      %s62 = sphi 0, %s62
      %s64 = sphi 0, %s62
      %s65 = sphi 0, %s64
      %s79 = sphi 0, %s65
      %s83 = sphi 0, %s83
      %s85 = sphi 0, %s83
      %s86 = sphi 0, %s85
      %s100 = sphi 0, %s86
      %s104 = sphi 0, %s104
      %s106 = sphi 0, %s104
      %s107 = sphi 0, %s106
      %s121 = sphi 0, %s107
      %s125 = sphi 0, %s125
      %s127 = sphi 0, %s125
      %s128 = sphi 0, %s127
      %s142 = sphi 0, %s128
      %s146 = sphi 0, %s146
      %s148 = sphi 0, %s146
      %s149 = sphi 0, %s148
      %s163 = sphi 0, %s149
      %s167 = sphi 0, %s167
      %s169 = sphi 0, %s167
      %s170 = sphi 0, %s169
      %s184 = sphi 0, %s170
      %s188 = sphi 0, %s188
      %s190 = sphi 0, %s188
      %s191 = sphi 0, %s190
      %s205 = sphi 0, %s191
      %s213 = sphi 0, %s215
      %s216 = sphi 0, %s213
      %s217 = sphi 0, %s216
      %s233 = sphi 0, %s217
    $region4: #{tpu_custom_call.1} parent=1 // loop_header_branch
      %24 = sbr.rel (%p22) target = $region8
    $region5: #{tpu_custom_call.1} parent=1 // loop_body
      %s26 = ssub.s32 %s21, 1
      %s27 = ssub.s32 %s21, 2
      %s34 = sadd.s32 1, %s29
      %p35 = scmp.ge.s32.totalorder %s34, 1
      %s36 = scalar_select %p35, 0, %s34
      %s37 = sadd.s32 1, %s28
      %s38 = scalar_select %p35, %s37, %s28
      %p39 = scmp.ge.s32.totalorder %s38, 2
      %s40 = scalar_select %p39, 0, %s38
      %s42 = sadd.s32 %s41, 1
      %p45 = scmp.eq.s32.totalorder %s21, 1
      %p46 = scmp.ne.s32.totalorder %s41, %s43
      %p47 = scmp.eq.s32.totalorder %s21, 0
      %p48 = por %p46, %p47
      %p49 = scmp.ne.s32.totalorder %s41, %s43
      %p50 = scmp.eq.s32.totalorder %s26, 1
      %p51 = por %p49, %p50
      %p52 = scmp.ne.s32.totalorder %s43, %s44
      %p53 = scmp.eq.s32.totalorder %s26, 0
      %p54 = por %p52, %p53
      %p55 = scmp.ne.s32.totalorder %s43, %s44
      %p56 = scmp.eq.s32.totalorder %s27, 1
      %p57 = por %p55, %p56
      %p59 = scmp.ne.s32.totalorder %s44, %s58
      %p60 = scmp.eq.s32.totalorder %s27, 0
      %p61 = por %p59, %p60
      %s63 = sadd.s32 %s62, 1
      %p66 = scmp.eq.s32.totalorder %s21, 1
      %p67 = scmp.ne.s32.totalorder %s62, %s64
      %p68 = scmp.eq.s32.totalorder %s21, 0
      %p69 = por %p67, %p68
      %p70 = scmp.ne.s32.totalorder %s62, %s64
      %p71 = scmp.eq.s32.totalorder %s26, 1
      %p72 = por %p70, %p71
      %p73 = scmp.ne.s32.totalorder %s64, %s65
      %p74 = scmp.eq.s32.totalorder %s26, 0
      %p75 = por %p73, %p74
      %p76 = scmp.ne.s32.totalorder %s64, %s65
      %p77 = scmp.eq.s32.totalorder %s27, 1
      %p78 = por %p76, %p77
      %p80 = scmp.ne.s32.totalorder %s65, %s79
      %p81 = scmp.eq.s32.totalorder %s27, 0
      %p82 = por %p80, %p81
      %s84 = sadd.s32 %s83, 1
      %p87 = scmp.eq.s32.totalorder %s21, 1
      %p88 = scmp.ne.s32.totalorder %s83, %s85
      %p89 = scmp.eq.s32.totalorder %s21, 0
      %p90 = por %p88, %p89
      %p91 = scmp.ne.s32.totalorder %s83, %s85
      %p92 = scmp.eq.s32.totalorder %s26, 1
      %p93 = por %p91, %p92
      %p94 = scmp.ne.s32.totalorder %s85, %s86
      %p95 = scmp.eq.s32.totalorder %s26, 0
      %p96 = por %p94, %p95
      %p97 = scmp.ne.s32.totalorder %s85, %s86
      %p98 = scmp.eq.s32.totalorder %s27, 1
      %p99 = por %p97, %p98
      %p101 = scmp.ne.s32.totalorder %s86, %s100
      %p102 = scmp.eq.s32.totalorder %s27, 0
      %p103 = por %p101, %p102
      %s105 = sadd.s32 %s104, 1
      %p108 = scmp.eq.s32.totalorder %s21, 1
      %p109 = scmp.ne.s32.totalorder %s104, %s106
      %p110 = scmp.eq.s32.totalorder %s21, 0
      %p111 = por %p109, %p110
      %p112 = scmp.ne.s32.totalorder %s104, %s106
      %p113 = scmp.eq.s32.totalorder %s26, 1
      %p114 = por %p112, %p113
      %p115 = scmp.ne.s32.totalorder %s106, %s107
      %p116 = scmp.eq.s32.totalorder %s26, 0
      %p117 = por %p115, %p116
      %p118 = scmp.ne.s32.totalorder %s106, %s107
      %p119 = scmp.eq.s32.totalorder %s27, 1
      %p120 = por %p118, %p119
      %p122 = scmp.ne.s32.totalorder %s107, %s121
      %p123 = scmp.eq.s32.totalorder %s27, 0
      %p124 = por %p122, %p123
      %s126 = sadd.s32 %s125, 1
      %p129 = scmp.eq.s32.totalorder %s21, 1
      %p130 = scmp.ne.s32.totalorder %s125, %s127
      %p131 = scmp.eq.s32.totalorder %s21, 0
      %p132 = por %p130, %p131
      %p133 = scmp.ne.s32.totalorder %s125, %s127
      %p134 = scmp.eq.s32.totalorder %s26, 1
      %p135 = por %p133, %p134
      %p136 = scmp.ne.s32.totalorder %s127, %s128
      %p137 = scmp.eq.s32.totalorder %s26, 0
      %p138 = por %p136, %p137
      %p139 = scmp.ne.s32.totalorder %s127, %s128
      %p140 = scmp.eq.s32.totalorder %s27, 1
      %p141 = por %p139, %p140
      %p143 = scmp.ne.s32.totalorder %s128, %s142
      %p144 = scmp.eq.s32.totalorder %s27, 0
      %p145 = por %p143, %p144
      %s147 = sadd.s32 %s146, 1
      %p150 = scmp.eq.s32.totalorder %s21, 1
      %p151 = scmp.ne.s32.totalorder %s146, %s148
      %p152 = scmp.eq.s32.totalorder %s21, 0
      %p153 = por %p151, %p152
      %p154 = scmp.ne.s32.totalorder %s146, %s148
      %p155 = scmp.eq.s32.totalorder %s26, 1
      %p156 = por %p154, %p155
      %p157 = scmp.ne.s32.totalorder %s148, %s149
      %p158 = scmp.eq.s32.totalorder %s26, 0
      %p159 = por %p157, %p158
      %p160 = scmp.ne.s32.totalorder %s148, %s149
      %p161 = scmp.eq.s32.totalorder %s27, 1
      %p162 = por %p160, %p161
      %p164 = scmp.ne.s32.totalorder %s149, %s163
      %p165 = scmp.eq.s32.totalorder %s27, 0
      %p166 = por %p164, %p165
      %s168 = sadd.s32 %s167, 1
      %p171 = scmp.eq.s32.totalorder %s21, 1
      %p172 = scmp.ne.s32.totalorder %s167, %s169
      %p173 = scmp.eq.s32.totalorder %s21, 0
      %p174 = por %p172, %p173
      %p175 = scmp.ne.s32.totalorder %s167, %s169
      %p176 = scmp.eq.s32.totalorder %s26, 1
      %p177 = por %p175, %p176
      %p178 = scmp.ne.s32.totalorder %s169, %s170
      %p179 = scmp.eq.s32.totalorder %s26, 0
      %p180 = por %p178, %p179
      %p181 = scmp.ne.s32.totalorder %s169, %s170
      %p182 = scmp.eq.s32.totalorder %s27, 1
      %p183 = por %p181, %p182
      %p185 = scmp.ne.s32.totalorder %s170, %s184
      %p186 = scmp.eq.s32.totalorder %s27, 0
      %p187 = por %p185, %p186
      %s189 = sadd.s32 %s188, 1
      %p192 = scmp.eq.s32.totalorder %s21, 1
      %p193 = scmp.ne.s32.totalorder %s188, %s190
      %p194 = scmp.eq.s32.totalorder %s21, 0
      %p195 = por %p193, %p194
      %p196 = scmp.ne.s32.totalorder %s188, %s190
      %p197 = scmp.eq.s32.totalorder %s26, 1
      %p198 = por %p196, %p197
      %p199 = scmp.ne.s32.totalorder %s190, %s191
      %p200 = scmp.eq.s32.totalorder %s26, 0
      %p201 = por %p199, %p200
      %p202 = scmp.ne.s32.totalorder %s190, %s191
      %p203 = scmp.eq.s32.totalorder %s27, 1
      %p204 = por %p202, %p203
      %p206 = scmp.ne.s32.totalorder %s191, %s205
      %p207 = scmp.eq.s32.totalorder %s27, 0
      %p208 = por %p206, %p207
      %s209 = ssub.s32 %s28, %s40
      %s210 = ssub.s32 %s29, %s36
      %s211 = sor.u32 %s209, %s210
      %p212 = scmp.eq.s32.totalorder %s211, 0
      %s214 = sadd.s32 %s213, 1
      %s215 = scalar_select %p212, %s213, %s214
      %p218 = pneg %p212
      %p219 = scmp.eq.s32.totalorder %s21, 1
      %p220 = por %p218, %p219
      %p221 = scmp.ne.s32.totalorder %s213, %s216
      %p222 = scmp.eq.s32.totalorder %s21, 0
      %p223 = por %p221, %p222
      %p224 = scmp.ne.s32.totalorder %s213, %s216
      %p225 = scmp.eq.s32.totalorder %s26, 1
      %p226 = por %p224, %p225
      %p227 = scmp.ne.s32.totalorder %s216, %s217
      %p228 = scmp.eq.s32.totalorder %s26, 0
      %p229 = por %p227, %p228
      %p230 = scmp.ne.s32.totalorder %s216, %s217
      %p231 = scmp.eq.s32.totalorder %s27, 1
      %p232 = por %p230, %p231
      %p234 = scmp.ne.s32.totalorder %s217, %s233
      %p235 = scmp.eq.s32.totalorder %s27, 0
      %p236 = por %p234, %p235
      %p237 = scmp.le.s32.totalorder 1, %s21
      %p238 = scmp.lt.s32.totalorder %s21, 3
      %p239 = pnand %p237, %p238
      %p240 = pneg %p239
      // Predicated region
      $region9: #{tpu_custom_call.1} parent=5 // pred_check
        _
      $region10: #{tpu_custom_call.1} parent=5 // pred_check_branch
        %242 = sbr.rel (%p239) target = $region12
      $region11: #{tpu_custom_call.1} parent=5 // pred_region
        %s243 = ssub.s32 %s21, 1
        // Predicated region
        $region13: #{tpu_custom_call.1} parent=11 // pred_check
          %p244 = pneg %p54
        $region14: #{tpu_custom_call.1} parent=11 // pred_check_branch
          %246 = sbr.rel (%p244) target = $region16
        $region15: #{tpu_custom_call.1} parent=11 // pred_region
          %s248 = ssub.s32 1024, 1024
          %249 = vsyncadd [#allocation6], %s248
          %s250 = sshll.u32 [#allocation5], 4
          %s251 = int_to_ptr.vmem [resolvable:$true] %s250
          %256 = dma.hbm_to_vmem [thread:$0]  %s1, 1024, %s251, [#allocation6], 64, 64, 4
        $region16: #{tpu_custom_call.1} parent=11 // pred_fallthru
          _
        // Predicated region
        $region17: #{tpu_custom_call.1} parent=11 // pred_check
          %p257 = pneg %p75
        $region18: #{tpu_custom_call.1} parent=11 // pred_check_branch
          %259 = sbr.rel (%p257) target = $region20
        $region19: #{tpu_custom_call.1} parent=11 // pred_region
          _
        $region20: #{tpu_custom_call.1} parent=11 // pred_fallthru
          _
        // Predicated region
        $region21: #{tpu_custom_call.1} parent=11 // pred_check
          %p260 = pneg %p96
        $region22: #{tpu_custom_call.1} parent=11 // pred_check_branch
          %262 = sbr.rel (%p260) target = $region24
        $region23: #{tpu_custom_call.1} parent=11 // pred_region
          %s264 = ssub.s32 256, 256
          %265 = vsyncadd [#allocation9], %s264
          %s266 = sshll.u32 [#allocation8], 4
          %s267 = int_to_ptr.vmem [resolvable:$true] %s266
          %272 = dma.hbm_to_vmem [thread:$0]  %s3, 256, %s267, [#allocation9], 128, 128, 8
        $region24: #{tpu_custom_call.1} parent=11 // pred_fallthru
          _
        // Predicated region
        $region25: #{tpu_custom_call.1} parent=11 // pred_check
          %p273 = pneg %p117
        $region26: #{tpu_custom_call.1} parent=11 // pred_check_branch
          %275 = sbr.rel (%p273) target = $region28
        $region27: #{tpu_custom_call.1} parent=11 // pred_region
          _
        $region28: #{tpu_custom_call.1} parent=11 // pred_fallthru
          _
        // Predicated region
        $region29: #{tpu_custom_call.1} parent=11 // pred_check
          %p276 = pneg %p138
        $region30: #{tpu_custom_call.1} parent=11 // pred_check_branch
          %278 = sbr.rel (%p276) target = $region32
        $region31: #{tpu_custom_call.1} parent=11 // pred_region
          %s280 = ssub.s32 1024, 1024
          %281 = vsyncadd [#allocation9], %s280
          %s282 = sshll.u32 [#allocation10], 4
          %s283 = int_to_ptr.vmem [resolvable:$true] %s282
          %288 = dma.hbm_to_vmem [thread:$0]  %s5, 1024, %s283, [#allocation9], 64, 64, 4
        $region32: #{tpu_custom_call.1} parent=11 // pred_fallthru
          _
        // Predicated region
        $region33: #{tpu_custom_call.1} parent=11 // pred_check
          %p289 = pneg %p159
        $region34: #{tpu_custom_call.1} parent=11 // pred_check_branch
          %291 = sbr.rel (%p289) target = $region36
        $region35: #{tpu_custom_call.1} parent=11 // pred_region
          _
        $region36: #{tpu_custom_call.1} parent=11 // pred_fallthru
          _
        // Predicated region
        $region37: #{tpu_custom_call.1} parent=11 // pred_check
          %p292 = pneg %p180
        $region38: #{tpu_custom_call.1} parent=11 // pred_check_branch
          %294 = sbr.rel (%p292) target = $region40
        $region39: #{tpu_custom_call.1} parent=11 // pred_region
          %s296 = ssub.s32 1024, 1024
          %297 = vsyncadd [#allocation12], %s296
          %s298 = sshll.u32 [#allocation11], 4
          %s299 = int_to_ptr.vmem [resolvable:$true] %s298
          %304 = dma.hbm_to_vmem [thread:$0]  %s7, 1024, %s299, [#allocation12], 64, 64, 4
        $region40: #{tpu_custom_call.1} parent=11 // pred_fallthru
          _
        // Predicated region
        $region41: #{tpu_custom_call.1} parent=11 // pred_check
          %p305 = pneg %p201
        $region42: #{tpu_custom_call.1} parent=11 // pred_check_branch
          %307 = sbr.rel (%p305) target = $region44
        $region43: #{tpu_custom_call.1} parent=11 // pred_region
          _
        $region44: #{tpu_custom_call.1} parent=11 // pred_fallthru
          _
      $region12: #{tpu_custom_call.1} parent=5 // pred_fallthru
        _
      %p308 = scmp.lt.s32.totalorder %s21, 2
      // Predicated region
      $region45: #{tpu_custom_call.1} parent=5 // pred_check
        %p309 = pneg %p308
      $region46: #{tpu_custom_call.1} parent=5 // pred_check_branch
        %311 = sbr.rel (%p309) target = $region48
      $region47: #{tpu_custom_call.1} parent=5 // pred_region
        _
      $region48: #{tpu_custom_call.1} parent=5 // pred_fallthru
        _
      %p312 = scmp.le.s32.totalorder 1, %s21
      %p313 = scmp.lt.s32.totalorder %s21, 3
      %p314 = pnand %p312, %p313
      %p315 = pneg %p314
      // Predicated region
      $region49: #{tpu_custom_call.1} parent=5 // pred_check
        _
      $region50: #{tpu_custom_call.1} parent=5 // pred_check_branch
        %317 = sbr.rel (%p314) target = $region52
      $region51: #{tpu_custom_call.1} parent=5 // pred_region
        %s318 = ssub.s32 %s21, 1
        // Predicated region
        $region53: #{tpu_custom_call.1} parent=51 // pred_check
          %p319 = pneg %p54
        $region54: #{tpu_custom_call.1} parent=51 // pred_check_branch
          %321 = sbr.rel (%p319) target = $region56
        $region55: #{tpu_custom_call.1} parent=51 // pred_region
          %322 = dma.done [#allocation6], 1024
        $region56: #{tpu_custom_call.1} parent=51 // pred_fallthru
          _
        // Predicated region
        $region57: #{tpu_custom_call.1} parent=51 // pred_check
          %p323 = pneg %p96
        $region58: #{tpu_custom_call.1} parent=51 // pred_check_branch
          %325 = sbr.rel (%p323) target = $region60
        $region59: #{tpu_custom_call.1} parent=51 // pred_region
          %326 = dma.done [#allocation9], 256
        $region60: #{tpu_custom_call.1} parent=51 // pred_fallthru
          _
        // Predicated region
        $region61: #{tpu_custom_call.1} parent=51 // pred_check
          %p327 = pneg %p138
        $region62: #{tpu_custom_call.1} parent=51 // pred_check_branch
          %329 = sbr.rel (%p327) target = $region64
        $region63: #{tpu_custom_call.1} parent=51 // pred_region
          %330 = dma.done [#allocation9], 1024
        $region64: #{tpu_custom_call.1} parent=51 // pred_fallthru
          _
        // Predicated region
        $region65: #{tpu_custom_call.1} parent=51 // pred_check
          %p331 = pneg %p180
        $region66: #{tpu_custom_call.1} parent=51 // pred_check_branch
          %333 = sbr.rel (%p331) target = $region68
        $region67: #{tpu_custom_call.1} parent=51 // pred_region
          %334 = dma.done [#allocation12], 1024
        $region68: #{tpu_custom_call.1} parent=51 // pred_fallthru
          _
        %p335 = pneg %p54
        %p336 = pneg %p51
        %p337 = pneg %p75
        %p338 = pneg %p72
        %p339 = pneg %p96
        %p340 = pneg %p93
        %p341 = pneg %p117
        %p342 = pneg %p114
        %p343 = pneg %p138
        %p344 = pneg %p135
        %p345 = pneg %p159
        %p346 = pneg %p156
        %p347 = pneg %p180
        %p348 = pneg %p177
        %p349 = pneg %p201
        %p350 = pneg %p198
        %p351 = pneg %p229
        %p352 = pneg %p226
        %s353 = sand.u32 %s216, 1
        %s354 = scalar_lea.sflag [#allocation7], %s353
        %s355 = sand.u32 %s216, 1
        %s356 = smul.addr %s355, 256
        %s357 = scalar_lea.vmem [#allocation13], %s356
        %s358 = smul.u32 16, %s31
        %p360 = scmp.lt.s32.totalorder %s31, 0
        %s361 = ssub.s32 0, %s31
        %s362 = scalar_select %p360, %s361, %s31
        %s363 = sand.u32 %s362, 1
        %s364 = ssub.s32 0, %s363
        %s365 = scalar_select %p360, %s364, %s363
        %p366 = scmp.ne.s32.totalorder %s365, 0
        %p367 = scmp.lt.s32.totalorder %s365, 0
        %p368 = pnand %p367, %p366
        %p369 = pneg %p368
        %s370 = sadd.s32 %s365, 2
        %s371 = scalar_select %p369, %s370, %s365
        %p372 = scmp.eq.s32.totalorder %s31, 0
        // Predicated region
        $region69: #{tpu_custom_call.1} parent=51 // pred_check
          %p373 = pneg %p372
        $region70: #{tpu_custom_call.1} parent=51 // pred_check_branch
          %375 = sbr.rel (%p373) target = $region72
        $region71: #{tpu_custom_call.1} parent=51 // pred_region
          %s376 = smul.u32 %s30, 18
          %s377 = smul.u32 %s31, 16
          %s378 = sadd.s32 %s376, %s377
          %s379 = smul.u32 %s378, 16
          %s380 = smul.addr %s379, 16
          %s381 = scalar_lea.hbm %s0, %s380
          %s382 = smul.u32 %s371, 288
          %s383 = scalar_lea.vmem [#allocation2], %s382
          %s384 = scalar_lea.sflag [#allocation4], %s371
          // Predicated region
          $region73: #{tpu_custom_call.1} parent=71 // pred_check
            _
          $region74: #{tpu_custom_call.1} parent=71 // pred_check_branch
            %386 = sbr.rel target = $region76
          $region75: #{tpu_custom_call.1} parent=71 // pred_region
            %387 = sst [smem:[#allocation16]] [#allocation15]
            %388 = sst [smem:[#allocation17]] [#allocation14]
          $region76: #{tpu_custom_call.1} parent=71 // pred_fallthru
            _
          %390 = shalt.err (0)
          %s392 = sshll.u32 %s383, 4
          %s393 = int_to_ptr.vmem [resolvable:$true] %s392
          %395 = dma.hbm_to_vmem [thread:$0]  %s381, 4608, %s393, %s384
          %vm396 = vcmask 1043459
          %vm397 = vsmask.f32 7950
          %vm398 = vmand %vm396, %vm397
          %v399 = vld [vmem:[#allocation3] sm:$0x8]
          %v400 = vsel %vm398, 0, %v399
          %401 = vst [vmem:[#allocation3] sm:$0x8] %v400
          %v402 = vld [vmem:[#allocation3 + $0x10] sm:$0x8]
          %v403 = vsel %vm398, 0, %v402
          %404 = vst [vmem:[#allocation3 + $0x10] sm:$0x8] %v403
          %v405 = vld [vmem:[#allocation3 + $0x20] sm:$0x8]
          %v406 = vsel %vm398, 0, %v405
          %407 = vst [vmem:[#allocation3 + $0x20] sm:$0x8] %v406
          %v408 = vld [vmem:[#allocation3 + $0x30] sm:$0x8]
          %v409 = vsel %vm398, 0, %v408
          %410 = vst [vmem:[#allocation3 + $0x30] sm:$0x8] %v409
          %v411 = vld [vmem:[#allocation3 + $0x40] sm:$0x8]
          %v412 = vsel %vm398, 0, %v411
          %413 = vst [vmem:[#allocation3 + $0x40] sm:$0x8] %v412
          %v414 = vld [vmem:[#allocation3 + $0x50] sm:$0x8]
          %v415 = vsel %vm398, 0, %v414
          %416 = vst [vmem:[#allocation3 + $0x50] sm:$0x8] %v415
          %v417 = vld [vmem:[#allocation3 + $0x60] sm:$0x8]
          %v418 = vsel %vm398, 0, %v417
          %419 = vst [vmem:[#allocation3 + $0x60] sm:$0x8] %v418
          %v420 = vld [vmem:[#allocation3 + $0x70] sm:$0x8]
          %v421 = vsel %vm398, 0, %v420
          %422 = vst [vmem:[#allocation3 + $0x70] sm:$0x8] %v421
          %v423 = vld [vmem:[#allocation3 + $0x80] sm:$0x8]
          %v424 = vsel %vm398, 0, %v423
          %425 = vst [vmem:[#allocation3 + $0x80] sm:$0x8] %v424
          %v426 = vld [vmem:[#allocation3 + $0x90] sm:$0x8]
          %v427 = vsel %vm398, 0, %v426
          %428 = vst [vmem:[#allocation3 + $0x90] sm:$0x8] %v427
          %v429 = vld [vmem:[#allocation3 + $0xa0] sm:$0x8]
          %v430 = vsel %vm398, 0, %v429
          %431 = vst [vmem:[#allocation3 + $0xa0] sm:$0x8] %v430
          %v432 = vld [vmem:[#allocation3 + $0xb0] sm:$0x8]
          %v433 = vsel %vm398, 0, %v432
          %434 = vst [vmem:[#allocation3 + $0xb0] sm:$0x8] %v433
          %v435 = vld [vmem:[#allocation3 + $0xc0] sm:$0x8]
          %v436 = vsel %vm398, 0, %v435
          %437 = vst [vmem:[#allocation3 + $0xc0] sm:$0x8] %v436
          %v438 = vld [vmem:[#allocation3 + $0xd0] sm:$0x8]
          %v439 = vsel %vm398, 0, %v438
          %440 = vst [vmem:[#allocation3 + $0xd0] sm:$0x8] %v439
          %v441 = vld [vmem:[#allocation3 + $0xe0] sm:$0x8]
          %v442 = vsel %vm398, 0, %v441
          %443 = vst [vmem:[#allocation3 + $0xe0] sm:$0x8] %v442
          %v444 = vld [vmem:[#allocation3 + $0xf0] sm:$0x8]
          %v445 = vsel %vm398, 0, %v444
          %446 = vst [vmem:[#allocation3 + $0xf0] sm:$0x8] %v445
          %v447 = vld [vmem:[#allocation3 + $0x100] sm:$0x8]
          %v448 = vsel %vm398, 0, %v447
          %449 = vst [vmem:[#allocation3 + $0x100] sm:$0x8] %v448
          %v450 = vld [vmem:[#allocation3 + $0x110] sm:$0x8]
          %v451 = vsel %vm398, 0, %v450
          %452 = vst [vmem:[#allocation3 + $0x110] sm:$0x8] %v451
          %vm453 = vcmask 1040384
          %vm454 = vsmask.f32 256
          %vm455 = vmand %vm453, %vm454
          %v456 = vld [vmem:[#allocation3 + $0xc] sm:$0x1]
          %v457 = vsel %vm455, 0, %v456
          %458 = vst [vmem:[#allocation3 + $0xc] sm:$0x1] %v457
          %v459 = vld [vmem:[#allocation3 + $0x1c] sm:$0x1]
          %v460 = vsel %vm455, 0, %v459
          %461 = vst [vmem:[#allocation3 + $0x1c] sm:$0x1] %v460
          %v462 = vld [vmem:[#allocation3 + $0x2c] sm:$0x1]
          %v463 = vsel %vm455, 0, %v462
          %464 = vst [vmem:[#allocation3 + $0x2c] sm:$0x1] %v463
          %v465 = vld [vmem:[#allocation3 + $0x3c] sm:$0x1]
          %v466 = vsel %vm455, 0, %v465
          %467 = vst [vmem:[#allocation3 + $0x3c] sm:$0x1] %v466
          %v468 = vld [vmem:[#allocation3 + $0x4c] sm:$0x1]
          %v469 = vsel %vm455, 0, %v468
          %470 = vst [vmem:[#allocation3 + $0x4c] sm:$0x1] %v469
          %v471 = vld [vmem:[#allocation3 + $0x5c] sm:$0x1]
          %v472 = vsel %vm455, 0, %v471
          %473 = vst [vmem:[#allocation3 + $0x5c] sm:$0x1] %v472
          %v474 = vld [vmem:[#allocation3 + $0x6c] sm:$0x1]
          %v475 = vsel %vm455, 0, %v474
          %476 = vst [vmem:[#allocation3 + $0x6c] sm:$0x1] %v475
          %v477 = vld [vmem:[#allocation3 + $0x7c] sm:$0x1]
          %v478 = vsel %vm455, 0, %v477
          %479 = vst [vmem:[#allocation3 + $0x7c] sm:$0x1] %v478
          %v480 = vld [vmem:[#allocation3 + $0x8c] sm:$0x1]
          %v481 = vsel %vm455, 0, %v480
          %482 = vst [vmem:[#allocation3 + $0x8c] sm:$0x1] %v481
          %v483 = vld [vmem:[#allocation3 + $0x9c] sm:$0x1]
          %v484 = vsel %vm455, 0, %v483
          %485 = vst [vmem:[#allocation3 + $0x9c] sm:$0x1] %v484
          %v486 = vld [vmem:[#allocation3 + $0xac] sm:$0x1]
          %v487 = vsel %vm455, 0, %v486
          %488 = vst [vmem:[#allocation3 + $0xac] sm:$0x1] %v487
          %v489 = vld [vmem:[#allocation3 + $0xbc] sm:$0x1]
          %v490 = vsel %vm455, 0, %v489
          %491 = vst [vmem:[#allocation3 + $0xbc] sm:$0x1] %v490
          %v492 = vld [vmem:[#allocation3 + $0xcc] sm:$0x1]
          %v493 = vsel %vm455, 0, %v492
          %494 = vst [vmem:[#allocation3 + $0xcc] sm:$0x1] %v493
          %v495 = vld [vmem:[#allocation3 + $0xdc] sm:$0x1]
          %v496 = vsel %vm455, 0, %v495
          %497 = vst [vmem:[#allocation3 + $0xdc] sm:$0x1] %v496
          %v498 = vld [vmem:[#allocation3 + $0xec] sm:$0x1]
          %v499 = vsel %vm455, 0, %v498
          %500 = vst [vmem:[#allocation3 + $0xec] sm:$0x1] %v499
          %v501 = vld [vmem:[#allocation3 + $0xfc] sm:$0x1]
          %v502 = vsel %vm455, 0, %v501
          %503 = vst [vmem:[#allocation3 + $0xfc] sm:$0x1] %v502
          %v504 = vld [vmem:[#allocation3 + $0x10c] sm:$0x1]
          %v505 = vsel %vm455, 0, %v504
          %506 = vst [vmem:[#allocation3 + $0x10c] sm:$0x1] %v505
          %v507 = vld [vmem:[#allocation3 + $0x11c] sm:$0x1]
          %v508 = vsel %vm455, 0, %v507
          %509 = vst [vmem:[#allocation3 + $0x11c] sm:$0x1] %v508
        $region72: #{tpu_custom_call.1} parent=51 // pred_fallthru
          _
        %s510 = smul.u32 %s30, 18
        %s511 = smul.u32 %s31, 16
        %s512 = smul.u32 %s371, 288
        %s513 = scalar_lea.vmem [#allocation2], %s512
        %s514 = scalar_lea.sflag [#allocation4], %s371
        %s515 = smul.u32 18, 16
        %s516 = smul.u32 %s515, 1
        %s517 = sshll.u32 %s516, 4
        %518 = dma.done %s514, %s517
        %s519 = sadd.s32 %s31, 1
        %p520 = scmp.lt.s32.totalorder %s519, 1
        // Predicated region
        $region77: #{tpu_custom_call.1} parent=51 // pred_check
          %p521 = pneg %p520
        $region78: #{tpu_custom_call.1} parent=51 // pred_check_branch
          %523 = sbr.rel (%p521) target = $region80
        $region79: #{tpu_custom_call.1} parent=51 // pred_region
          %p524 = scmp.lt.s32.totalorder %s519, 0
          %s525 = ssub.s32 0, %s519
          %s526 = scalar_select %p524, %s525, %s519
          %s527 = sand.u32 %s526, 1
          %s528 = ssub.s32 0, %s527
          %s529 = scalar_select %p524, %s528, %s527
          %p530 = scmp.ne.s32.totalorder %s529, 0
          %p531 = scmp.lt.s32.totalorder %s529, 0
          %p532 = pnand %p531, %p530
          %p533 = pneg %p532
          %s534 = sadd.s32 %s529, 2
          %s535 = scalar_select %p533, %s534, %s529
          %s536 = smul.u32 %s519, 16
          %s537 = sadd.s32 %s510, %s536
          %s538 = smul.u32 %s537, 16
          %s539 = smul.addr %s538, 16
          %s540 = scalar_lea.hbm %s0, %s539
          %s541 = smul.u32 %s535, 288
          %s542 = scalar_lea.vmem [#allocation2], %s541
          %s543 = scalar_lea.sflag [#allocation4], %s535
          // Predicated region
          $region81: #{tpu_custom_call.1} parent=79 // pred_check
            _
          $region82: #{tpu_custom_call.1} parent=79 // pred_check_branch
            %545 = sbr.rel target = $region84
          $region83: #{tpu_custom_call.1} parent=79 // pred_region
            %546 = sst [smem:[#allocation16]] [#allocation19]
            %547 = sst [smem:[#allocation17]] [#allocation18]
          $region84: #{tpu_custom_call.1} parent=79 // pred_fallthru
            _
          %549 = shalt.err (0)
          %s551 = sshll.u32 %s542, 4
          %s552 = int_to_ptr.vmem [resolvable:$true] %s551
          %554 = dma.hbm_to_vmem [thread:$0]  %s540, 4608, %s552, %s543
        $region80: #{tpu_custom_call.1} parent=51 // pred_fallthru
          _
        %v555 = vld [vmem:[%s513] sm:$0xff]
        %v556 = vld [vmem:[%s513 + $0x8] sm:$0xff]
        %v557 = vld [vmem:[%s513 + $0x10] sm:$0xff]
        %v558 = vld [vmem:[%s513 + $0x18] sm:$0xff]
        %v559 = vld [vmem:[%s513 + $0x20] sm:$0xff]
        %v560 = vld [vmem:[%s513 + $0x28] sm:$0xff]
        %v561 = vld [vmem:[%s513 + $0x30] sm:$0xff]
        %v562 = vld [vmem:[%s513 + $0x38] sm:$0xff]
        %v563 = vld [vmem:[%s513 + $0x40] sm:$0xff]
        %v564 = vld [vmem:[%s513 + $0x48] sm:$0xff]
        %v565 = vld [vmem:[%s513 + $0x50] sm:$0xff]
        %v566 = vld [vmem:[%s513 + $0x58] sm:$0xff]
        %v567 = vld [vmem:[%s513 + $0x60] sm:$0xff]
        %v568 = vld [vmem:[%s513 + $0x68] sm:$0xff]
        %v569 = vld [vmem:[%s513 + $0x70] sm:$0xff]
        %v570 = vld [vmem:[%s513 + $0x78] sm:$0xff]
        %v571 = vld [vmem:[%s513 + $0x80] sm:$0xff]
        %v572 = vld [vmem:[%s513 + $0x88] sm:$0xff]
        %v573 = vld [vmem:[%s513 + $0x90] sm:$0xff]
        %v574 = vld [vmem:[%s513 + $0x98] sm:$0xff]
        %v575 = vld [vmem:[%s513 + $0xa0] sm:$0xff]
        %v576 = vld [vmem:[%s513 + $0xa8] sm:$0xff]
        %v577 = vld [vmem:[%s513 + $0xb0] sm:$0xff]
        %v578 = vld [vmem:[%s513 + $0xb8] sm:$0xff]
        %v579 = vld [vmem:[%s513 + $0xc0] sm:$0xff]
        %v580 = vld [vmem:[%s513 + $0xc8] sm:$0xff]
        %v581 = vld [vmem:[%s513 + $0xd0] sm:$0xff]
        %v582 = vld [vmem:[%s513 + $0xd8] sm:$0xff]
        %v583 = vld [vmem:[%s513 + $0xe0] sm:$0xff]
        %v584 = vld [vmem:[%s513 + $0xe8] sm:$0xff]
        %v585 = vld [vmem:[%s513 + $0xf0] sm:$0xff]
        %v586 = vld [vmem:[%s513 + $0xf8] sm:$0xff]
        %v587 = vld [vmem:[%s513 + $0x100] sm:$0xff]
        %v588 = vld [vmem:[%s513 + $0x108] sm:$0xff]
        %v589 = vld [vmem:[%s513 + $0x110] sm:$0xff]
        %v590 = vld [vmem:[%s513 + $0x118] sm:$0xff]
        %v591 = vpack.c.bf16 %v556, %v555
        %v592 = vpack.c.bf16 %v558, %v557
        %v593 = vpack.c.bf16 %v560, %v559
        %v594 = vpack.c.bf16 %v562, %v561
        %v595 = vpack.c.bf16 %v564, %v563
        %v596 = vpack.c.bf16 %v566, %v565
        %v597 = vpack.c.bf16 %v568, %v567
        %v598 = vpack.c.bf16 %v570, %v569
        %v599 = vpack.c.bf16 %v572, %v571
        %v600 = vpack.c.bf16 %v574, %v573
        %v601 = vpack.c.bf16 %v576, %v575
        %v602 = vpack.c.bf16 %v578, %v577
        %v603 = vpack.c.bf16 %v580, %v579
        %v604 = vpack.c.bf16 %v582, %v581
        %v605 = vpack.c.bf16 %v584, %v583
        %v606 = vpack.c.bf16 %v586, %v585
        %v607 = vpack.c.bf16 %v588, %v587
        %v608 = vpack.c.bf16 %v590, %v589
        %v609 = vld [vmem:[#allocation5] sm:$0xf]
        %v610 = vld [vmem:[#allocation5 + $0x4] sm:$0xf]
        %v611 = vld [vmem:[#allocation5 + $0x8] sm:$0xf]
        %v612 = vld [vmem:[#allocation5 + $0xc] sm:$0xf]
        %v613 = vld [vmem:[#allocation5 + $0x10] sm:$0xf]
        %v614 = vld [vmem:[#allocation5 + $0x14] sm:$0xf]
        %v615 = vld [vmem:[#allocation5 + $0x18] sm:$0xf]
        %v616 = vld [vmem:[#allocation5 + $0x1c] sm:$0xf]
        %v617 = vld [vmem:[#allocation5 + $0x20] sm:$0xf]
        %v618 = vld [vmem:[#allocation5 + $0x24] sm:$0xf]
        %v619 = vld [vmem:[#allocation5 + $0x28] sm:$0xf]
        %v620 = vld [vmem:[#allocation5 + $0x2c] sm:$0xf]
        %v621 = vld [vmem:[#allocation5 + $0x30] sm:$0xf]
        %v622 = vld [vmem:[#allocation5 + $0x34] sm:$0xf]
        %v623 = vld [vmem:[#allocation5 + $0x38] sm:$0xf]
        %v624 = vld [vmem:[#allocation5 + $0x3c] sm:$0xf]
        %v625 = vld [vmem:[%s2] sm:$0x1]
        %v627 = vlaneseq
        %v628 = vshrl.u32 %v627, 7
        %v629 = vsub.s32 0, %v628
        %v630 = vrot.slane %v625, %v629
        %v648 = vunpack.c.l.b16 %v609
        %v649 = vunpack.c.l.b16 %v610
        %v650 = vunpack.c.l.b16 %v611
        %v651 = vunpack.c.l.b16 %v612
        %v652 = vunpack.c.l.b16 %v613
        %v653 = vunpack.c.l.b16 %v614
        %v654 = vunpack.c.l.b16 %v615
        %v655 = vunpack.c.l.b16 %v616
        %v656 = vunpack.c.l.b16 %v617
        %v657 = vunpack.c.l.b16 %v618
        %v658 = vunpack.c.l.b16 %v619
        %v659 = vunpack.c.l.b16 %v620
        %v660 = vunpack.c.l.b16 %v621
        %v661 = vunpack.c.l.b16 %v622
        %v662 = vunpack.c.l.b16 %v623
        %v663 = vunpack.c.l.b16 %v624
        %v664 = vpack.c.b16 %v649, %v648
        %v665 = vpack.c.b16 %v651, %v650
        %v666 = vpack.c.b16 %v653, %v652
        %v667 = vpack.c.b16 %v655, %v654
        %v668 = vpack.c.b16 %v657, %v656
        %v669 = vpack.c.b16 %v659, %v658
        %v670 = vpack.c.b16 %v661, %v660
        %v671 = vpack.c.b16 %v663, %v662
        %680 = vmatprep.subr.bf16.mxu0 0
        %681 = vmatpush1.bf16.msra.mxu0 %v671
        %682 = vmatprep.subr.bf16.mxu0 0
        %683 = vmatpush1.bf16.msra.mxu0 %v670
        %684 = vmatprep.subr.bf16.mxu0 0
        %685 = vmatpush1.bf16.msra.mxu0 %v669
        %686 = vmatprep.subr.bf16.mxu0 0
        %687 = vmatpush1.bf16.msra.mxu0 %v668
        %688 = vmatprep.subr.bf16.mxu0 0
        %689 = vmatpush1.bf16.msra.mxu0 %v667
        %690 = vmatprep.subr.bf16.mxu0 0
        %691 = vmatpush1.bf16.msra.mxu0 %v666
        %692 = vmatprep.subr.bf16.mxu0 0
        %693 = vmatpush1.bf16.msra.mxu0 %v665
        %694 = vmatprep.subr.bf16.mxu0 0
        %695 = vmatpush1.bf16.msra.mxu0 %v664
        %696 = vmatprep.subr.bf16.mxu0 0
        %697 = vmatpush2.bf16.msra.mxu0 0
        %698 = vmatprep.subr.bf16.mxu0 0
        %699 = vmatpush2.bf16.msra.mxu0 0
        %700 = vmatprep.subr.bf16.mxu0 0
        %701 = vmatpush2.bf16.msra.mxu0 0
        %702 = vmatprep.subr.bf16.mxu0 0
        %703 = vmatpush2.bf16.msra.mxu0 0
        %704 = vmatprep.subr.bf16.mxu0 0
        %705 = vmatpush2.bf16.msra.mxu0 0
        %706 = vmatprep.subr.bf16.mxu0 0
        %707 = vmatpush2.bf16.msra.mxu0 0
        %708 = vmatprep.subr.bf16.mxu0 0
        %709 = vmatpush2.bf16.msra.mxu0 0
        %710 = vmatprep.subr.bf16.mxu0 0
        %711 = vmatpush2.bf16.msra.mxu0 0
        %712 = vmatprep.mubr.bf16.mxu0 0
        %713 = vmatmul.mubr.bf16.gmra.mxu0 %v591
        %v714 = vpop.f32.mrf.mxu0
        %v715 = vadd.f32 %v630, %v714
        %v716 = vpop.f32.mrf.mxu0
        %v717 = vpop.f32.mrf.mxu0
        %v718 = vadd.f32 %v630, %v717
        %v719 = vpop.f32.mrf.mxu0
        %720 = vmatprep.mubr.bf16.mxu0 0
        %721 = vmatmul.mubr.bf16.gmra.mxu0 %v592
        %v722 = vpop.f32.mrf.mxu0
        %v723 = vadd.f32 %v630, %v722
        %v724 = vpop.f32.mrf.mxu0
        %v725 = vpop.f32.mrf.mxu0
        %v726 = vadd.f32 %v630, %v725
        %v727 = vpop.f32.mrf.mxu0
        %728 = vmatprep.mubr.bf16.mxu0 0
        %729 = vmatmul.mubr.bf16.gmra.mxu0 %v593
        %v730 = vpop.f32.mrf.mxu0
        %v731 = vadd.f32 %v630, %v730
        %v732 = vpop.f32.mrf.mxu0
        %v733 = vpop.f32.mrf.mxu0
        %v734 = vadd.f32 %v630, %v733
        %v735 = vpop.f32.mrf.mxu0
        %736 = vmatprep.mubr.bf16.mxu0 0
        %737 = vmatmul.mubr.bf16.gmra.mxu0 %v594
        %v738 = vpop.f32.mrf.mxu0
        %v739 = vadd.f32 %v630, %v738
        %v740 = vpop.f32.mrf.mxu0
        %v741 = vpop.f32.mrf.mxu0
        %v742 = vadd.f32 %v630, %v741
        %v743 = vpop.f32.mrf.mxu0
        %744 = vmatprep.mubr.bf16.mxu0 0
        %745 = vmatmul.mubr.bf16.gmra.mxu0 %v595
        %v746 = vpop.f32.mrf.mxu0
        %v747 = vadd.f32 %v630, %v746
        %v748 = vpop.f32.mrf.mxu0
        %v749 = vpop.f32.mrf.mxu0
        %v750 = vadd.f32 %v630, %v749
        %v751 = vpop.f32.mrf.mxu0
        %752 = vmatprep.mubr.bf16.mxu0 0
        %753 = vmatmul.mubr.bf16.gmra.mxu0 %v596
        %v754 = vpop.f32.mrf.mxu0
        %v755 = vadd.f32 %v630, %v754
        %v756 = vpop.f32.mrf.mxu0
        %v757 = vpop.f32.mrf.mxu0
        %v758 = vadd.f32 %v630, %v757
        %v759 = vpop.f32.mrf.mxu0
        %760 = vmatprep.mubr.bf16.mxu0 0
        %761 = vmatmul.mubr.bf16.gmra.mxu0 %v597
        %v762 = vpop.f32.mrf.mxu0
        %v763 = vadd.f32 %v630, %v762
        %v764 = vpop.f32.mrf.mxu0
        %v765 = vpop.f32.mrf.mxu0
        %v766 = vadd.f32 %v630, %v765
        %v767 = vpop.f32.mrf.mxu0
        %768 = vmatprep.mubr.bf16.mxu0 0
        %769 = vmatmul.mubr.bf16.gmra.mxu0 %v598
        %v770 = vpop.f32.mrf.mxu0
        %v771 = vadd.f32 %v630, %v770
        %v772 = vpop.f32.mrf.mxu0
        %v773 = vpop.f32.mrf.mxu0
        %v774 = vadd.f32 %v630, %v773
        %v775 = vpop.f32.mrf.mxu0
        %776 = vmatprep.mubr.bf16.mxu0 0
        %777 = vmatmul.mubr.bf16.gmra.mxu0 %v599
        %v778 = vpop.f32.mrf.mxu0
        %v779 = vadd.f32 %v630, %v778
        %v780 = vpop.f32.mrf.mxu0
        %v781 = vpop.f32.mrf.mxu0
        %v782 = vadd.f32 %v630, %v781
        %v783 = vpop.f32.mrf.mxu0
        %784 = vmatprep.mubr.bf16.mxu0 0
        %785 = vmatmul.mubr.bf16.gmra.mxu0 %v600
        %v786 = vpop.f32.mrf.mxu0
        %v787 = vadd.f32 %v630, %v786
        %v788 = vpop.f32.mrf.mxu0
        %v789 = vpop.f32.mrf.mxu0
        %v790 = vadd.f32 %v630, %v789
        %v791 = vpop.f32.mrf.mxu0
        %792 = vmatprep.mubr.bf16.mxu0 0
        %793 = vmatmul.mubr.bf16.gmra.mxu0 %v601
        %v794 = vpop.f32.mrf.mxu0
        %v795 = vadd.f32 %v630, %v794
        %v796 = vpop.f32.mrf.mxu0
        %v797 = vpop.f32.mrf.mxu0
        %v798 = vadd.f32 %v630, %v797
        %v799 = vpop.f32.mrf.mxu0
        %800 = vmatprep.mubr.bf16.mxu0 0
        %801 = vmatmul.mubr.bf16.gmra.mxu0 %v602
        %v802 = vpop.f32.mrf.mxu0
        %v803 = vadd.f32 %v630, %v802
        %v804 = vpop.f32.mrf.mxu0
        %v805 = vpop.f32.mrf.mxu0
        %v806 = vadd.f32 %v630, %v805
        %v807 = vpop.f32.mrf.mxu0
        %808 = vmatprep.mubr.bf16.mxu0 0
        %809 = vmatmul.mubr.bf16.gmra.mxu0 %v603
        %v810 = vpop.f32.mrf.mxu0
        %v811 = vadd.f32 %v630, %v810
        %v812 = vpop.f32.mrf.mxu0
        %v813 = vpop.f32.mrf.mxu0
        %v814 = vadd.f32 %v630, %v813
        %v815 = vpop.f32.mrf.mxu0
        %816 = vmatprep.mubr.bf16.mxu0 0
        %817 = vmatmul.mubr.bf16.gmra.mxu0 %v604
        %v818 = vpop.f32.mrf.mxu0
        %v819 = vadd.f32 %v630, %v818
        %v820 = vpop.f32.mrf.mxu0
        %v821 = vpop.f32.mrf.mxu0
        %v822 = vadd.f32 %v630, %v821
        %v823 = vpop.f32.mrf.mxu0
        %824 = vmatprep.mubr.bf16.mxu0 0
        %825 = vmatmul.mubr.bf16.gmra.mxu0 %v605
        %v826 = vpop.f32.mrf.mxu0
        %v827 = vadd.f32 %v630, %v826
        %v828 = vpop.f32.mrf.mxu0
        %v829 = vpop.f32.mrf.mxu0
        %v830 = vadd.f32 %v630, %v829
        %v831 = vpop.f32.mrf.mxu0
        %832 = vmatprep.mubr.bf16.mxu0 0
        %833 = vmatmul.mubr.bf16.gmra.mxu0 %v606
        %v834 = vpop.f32.mrf.mxu0
        %v835 = vadd.f32 %v630, %v834
        %v836 = vpop.f32.mrf.mxu0
        %v837 = vpop.f32.mrf.mxu0
        %v838 = vadd.f32 %v630, %v837
        %v839 = vpop.f32.mrf.mxu0
        %840 = vmatprep.mubr.bf16.mxu0 0
        %841 = vmatmul.mubr.bf16.gmra.mxu0 %v607
        %v842 = vpop.f32.mrf.mxu0
        %v843 = vadd.f32 %v630, %v842
        %v844 = vpop.f32.mrf.mxu0
        %v845 = vpop.f32.mrf.mxu0
        %v846 = vadd.f32 %v630, %v845
        %v847 = vpop.f32.mrf.mxu0
        %848 = vmatprep.mubr.bf16.mxu0 0
        %849 = vmatmul.mubr.bf16.gmra.mxu0 %v608
        %v850 = vpop.f32.mrf.mxu0
        %v851 = vadd.f32 %v630, %v850
        %v852 = vpop.f32.mrf.mxu0
        %v853 = vpop.f32.mrf.mxu0
        %v854 = vadd.f32 %v630, %v853
        %v855 = vpop.f32.mrf.mxu0
        %856 = vdwg.mxu0
        %v857 = vmax.f32 %v715, 0.0
        %v858 = vmax.f32 %v718, 0.0
        %v859 = vmax.f32 %v723, 0.0
        %v860 = vmax.f32 %v726, 0.0
        %v861 = vmax.f32 %v731, 0.0
        %v862 = vmax.f32 %v734, 0.0
        %v863 = vmax.f32 %v739, 0.0
        %v864 = vmax.f32 %v742, 0.0
        %v865 = vmax.f32 %v747, 0.0
        %v866 = vmax.f32 %v750, 0.0
        %v867 = vmax.f32 %v755, 0.0
        %v868 = vmax.f32 %v758, 0.0
        %v869 = vmax.f32 %v763, 0.0
        %v870 = vmax.f32 %v766, 0.0
        %v871 = vmax.f32 %v771, 0.0
        %v872 = vmax.f32 %v774, 0.0
        %v873 = vmax.f32 %v779, 0.0
        %v874 = vmax.f32 %v782, 0.0
        %v875 = vmax.f32 %v787, 0.0
        %v876 = vmax.f32 %v790, 0.0
        %v877 = vmax.f32 %v795, 0.0
        %v878 = vmax.f32 %v798, 0.0
        %v879 = vmax.f32 %v803, 0.0
        %v880 = vmax.f32 %v806, 0.0
        %v881 = vmax.f32 %v811, 0.0
        %v882 = vmax.f32 %v814, 0.0
        %v883 = vmax.f32 %v819, 0.0
        %v884 = vmax.f32 %v822, 0.0
        %v885 = vmax.f32 %v827, 0.0
        %v886 = vmax.f32 %v830, 0.0
        %v887 = vmax.f32 %v835, 0.0
        %v888 = vmax.f32 %v838, 0.0
        %v889 = vmax.f32 %v843, 0.0
        %v890 = vmax.f32 %v846, 0.0
        %v891 = vmax.f32 %v851, 0.0
        %v892 = vmax.f32 %v854, 0.0
        %v893 = vmin.f32 %v857, 6.0
        %v894 = vmin.f32 %v858, 6.0
        %v895 = vmin.f32 %v859, 6.0
        %v896 = vmin.f32 %v860, 6.0
        %v897 = vmin.f32 %v861, 6.0
        %v898 = vmin.f32 %v862, 6.0
        %v899 = vmin.f32 %v863, 6.0
        %v900 = vmin.f32 %v864, 6.0
        %v901 = vmin.f32 %v865, 6.0
        %v902 = vmin.f32 %v866, 6.0
        %v903 = vmin.f32 %v867, 6.0
        %v904 = vmin.f32 %v868, 6.0
        %v905 = vmin.f32 %v869, 6.0
        %v906 = vmin.f32 %v870, 6.0
        %v907 = vmin.f32 %v871, 6.0
        %v908 = vmin.f32 %v872, 6.0
        %v909 = vmin.f32 %v873, 6.0
        %v910 = vmin.f32 %v874, 6.0
        %v911 = vmin.f32 %v875, 6.0
        %v912 = vmin.f32 %v876, 6.0
        %v913 = vmin.f32 %v877, 6.0
        %v914 = vmin.f32 %v878, 6.0
        %v915 = vmin.f32 %v879, 6.0
        %v916 = vmin.f32 %v880, 6.0
        %v917 = vmin.f32 %v881, 6.0
        %v918 = vmin.f32 %v882, 6.0
        %v919 = vmin.f32 %v883, 6.0
        %v920 = vmin.f32 %v884, 6.0
        %v921 = vmin.f32 %v885, 6.0
        %v922 = vmin.f32 %v886, 6.0
        %v923 = vmin.f32 %v887, 6.0
        %v924 = vmin.f32 %v888, 6.0
        %v925 = vmin.f32 %v889, 6.0
        %v926 = vmin.f32 %v890, 6.0
        %v927 = vmin.f32 %v891, 6.0
        %v928 = vmin.f32 %v892, 6.0
        %v929 = vpack.c.bf16 %v894, %v893
        %v930 = vpack.c.bf16 %v896, %v895
        %v931 = vpack.c.bf16 %v898, %v897
        %v932 = vpack.c.bf16 %v900, %v899
        %v933 = vpack.c.bf16 %v902, %v901
        %v934 = vpack.c.bf16 %v904, %v903
        %v935 = vpack.c.bf16 %v906, %v905
        %v936 = vpack.c.bf16 %v908, %v907
        %v937 = vpack.c.bf16 %v910, %v909
        %v938 = vpack.c.bf16 %v912, %v911
        %v939 = vpack.c.bf16 %v914, %v913
        %v940 = vpack.c.bf16 %v916, %v915
        %v941 = vpack.c.bf16 %v918, %v917
        %v942 = vpack.c.bf16 %v920, %v919
        %v943 = vpack.c.bf16 %v922, %v921
        %v944 = vpack.c.bf16 %v924, %v923
        %v945 = vpack.c.bf16 %v926, %v925
        %v946 = vpack.c.bf16 %v928, %v927
        %v965 = vunpack.c.l.b16 %v929
        %v966 = vunpack.c.h.b16 %v929
        %v967 = vunpack.c.l.b16 %v930
        %v968 = vunpack.c.h.b16 %v930
        %v969 = vunpack.c.l.b16 %v931
        %v970 = vunpack.c.h.b16 %v931
        %v971 = vunpack.c.l.b16 %v932
        %v972 = vunpack.c.h.b16 %v932
        %v973 = vunpack.c.l.b16 %v933
        %v974 = vunpack.c.h.b16 %v933
        %v975 = vunpack.c.l.b16 %v934
        %v976 = vunpack.c.h.b16 %v934
        %v977 = vunpack.c.l.b16 %v935
        %v978 = vunpack.c.h.b16 %v935
        %v979 = vunpack.c.l.b16 %v936
        %v980 = vunpack.c.h.b16 %v936
        %v981 = vunpack.c.l.b16 %v937
        %v982 = vunpack.c.h.b16 %v937
        %v983 = vunpack.c.l.b16 %v938
        %v984 = vunpack.c.h.b16 %v938
        %v985 = vunpack.c.l.b16 %v939
        %v986 = vunpack.c.h.b16 %v939
        %v987 = vunpack.c.l.b16 %v940
        %v988 = vunpack.c.h.b16 %v940
        %v989 = vunpack.c.l.b16 %v941
        %v990 = vunpack.c.h.b16 %v941
        %v991 = vunpack.c.l.b16 %v942
        %v992 = vunpack.c.h.b16 %v942
        %v993 = vunpack.c.l.b16 %v943
        %v994 = vunpack.c.h.b16 %v943
        %v995 = vunpack.c.l.b16 %v944
        %v996 = vunpack.c.h.b16 %v944
        %v997 = vunpack.c.l.b16 %v945
        %v998 = vunpack.c.h.b16 %v945
        %v999 = vunpack.c.l.b16 %v946
        %v1000 = vunpack.c.h.b16 %v946
        %v1001 = vpack.c.b16 %v965, %v965
        %v1002 = vpack.c.b16 %v966, %v966
        %v1003 = vpack.c.b16 %v967, %v967
        %v1004 = vpack.c.b16 %v968, %v968
        %v1005 = vpack.c.b16 %v969, %v969
        %v1006 = vpack.c.b16 %v970, %v970
        %v1007 = vpack.c.b16 %v971, %v971
        %v1008 = vpack.c.b16 %v972, %v972
        %v1009 = vpack.c.b16 %v973, %v973
        %v1010 = vpack.c.b16 %v974, %v974
        %v1011 = vpack.c.b16 %v975, %v975
        %v1012 = vpack.c.b16 %v976, %v976
        %v1013 = vpack.c.b16 %v977, %v977
        %v1014 = vpack.c.b16 %v978, %v978
        %v1015 = vpack.c.b16 %v979, %v979
        %v1016 = vpack.c.b16 %v980, %v980
        %v1017 = vpack.c.b16 %v981, %v981
        %v1018 = vpack.c.b16 %v982, %v982
        %v1019 = vpack.c.b16 %v983, %v983
        %v1020 = vpack.c.b16 %v984, %v984
        %v1021 = vpack.c.b16 %v985, %v985
        %v1022 = vpack.c.b16 %v986, %v986
        %v1023 = vpack.c.b16 %v987, %v987
        %v1024 = vpack.c.b16 %v988, %v988
        %v1025 = vpack.c.b16 %v989, %v989
        %v1026 = vpack.c.b16 %v990, %v990
        %v1027 = vpack.c.b16 %v991, %v991
        %v1028 = vpack.c.b16 %v992, %v992
        %v1029 = vpack.c.b16 %v993, %v993
        %v1030 = vpack.c.b16 %v994, %v994
        %v1031 = vpack.c.b16 %v995, %v995
        %v1032 = vpack.c.b16 %v996, %v996
        %v1033 = vpack.c.b16 %v997, %v997
        %v1034 = vpack.c.b16 %v998, %v998
        %v1035 = vpack.c.b16 %v999, %v999
        %v1036 = vpack.c.b16 %v1000, %v1000
        %1073 = vst [vmem:[#allocation3 + $0x4] sm:$0xf] %v1001
        %1074 = vst [vmem:[#allocation3 + $0x8] sm:$0xf] %v1002
        %1075 = vst [vmem:[#allocation3 + $0x14] sm:$0xf] %v1003
        %1076 = vst [vmem:[#allocation3 + $0x18] sm:$0xf] %v1004
        %1077 = vst [vmem:[#allocation3 + $0x24] sm:$0xf] %v1005
        %1078 = vst [vmem:[#allocation3 + $0x28] sm:$0xf] %v1006
        %1079 = vst [vmem:[#allocation3 + $0x34] sm:$0xf] %v1007
        %1080 = vst [vmem:[#allocation3 + $0x38] sm:$0xf] %v1008
        %1081 = vst [vmem:[#allocation3 + $0x44] sm:$0xf] %v1009
        %1082 = vst [vmem:[#allocation3 + $0x48] sm:$0xf] %v1010
        %1083 = vst [vmem:[#allocation3 + $0x54] sm:$0xf] %v1011
        %1084 = vst [vmem:[#allocation3 + $0x58] sm:$0xf] %v1012
        %1085 = vst [vmem:[#allocation3 + $0x64] sm:$0xf] %v1013
        %1086 = vst [vmem:[#allocation3 + $0x68] sm:$0xf] %v1014
        %1087 = vst [vmem:[#allocation3 + $0x74] sm:$0xf] %v1015
        %1088 = vst [vmem:[#allocation3 + $0x78] sm:$0xf] %v1016
        %1089 = vst [vmem:[#allocation3 + $0x84] sm:$0xf] %v1017
        %1090 = vst [vmem:[#allocation3 + $0x88] sm:$0xf] %v1018
        %1091 = vst [vmem:[#allocation3 + $0x94] sm:$0xf] %v1019
        %1092 = vst [vmem:[#allocation3 + $0x98] sm:$0xf] %v1020
        %1093 = vst [vmem:[#allocation3 + $0xa4] sm:$0xf] %v1021
        %1094 = vst [vmem:[#allocation3 + $0xa8] sm:$0xf] %v1022
        %1095 = vst [vmem:[#allocation3 + $0xb4] sm:$0xf] %v1023
        %1096 = vst [vmem:[#allocation3 + $0xb8] sm:$0xf] %v1024
        %1097 = vst [vmem:[#allocation3 + $0xc4] sm:$0xf] %v1025
        %1098 = vst [vmem:[#allocation3 + $0xc8] sm:$0xf] %v1026
        %1099 = vst [vmem:[#allocation3 + $0xd4] sm:$0xf] %v1027
        %1100 = vst [vmem:[#allocation3 + $0xd8] sm:$0xf] %v1028
        %1101 = vst [vmem:[#allocation3 + $0xe4] sm:$0xf] %v1029
        %1102 = vst [vmem:[#allocation3 + $0xe8] sm:$0xf] %v1030
        %1103 = vst [vmem:[#allocation3 + $0xf4] sm:$0xf] %v1031
        %1104 = vst [vmem:[#allocation3 + $0xf8] sm:$0xf] %v1032
        %1105 = vst [vmem:[#allocation3 + $0x104] sm:$0xf] %v1033
        %1106 = vst [vmem:[#allocation3 + $0x108] sm:$0xf] %v1034
        %1107 = vst [vmem:[#allocation3 + $0x114] sm:$0xf] %v1035
        %1108 = vst [vmem:[#allocation3 + $0x118] sm:$0xf] %v1036
        %p1109 = scmp.eq.s32.totalorder %s511, 0
        // Predicated region
        $region85: #{tpu_custom_call.1} parent=51 // pred_check
          %p1110 = pneg %p1109
        $region86: #{tpu_custom_call.1} parent=51 // pred_check_branch
          %1112 = sbr.rel (%p1110) target = $region88
        $region87: #{tpu_custom_call.1} parent=51 // pred_region
          %1113 = vst [vmem:[#allocation3 + $0x4] sm:$0xf] 0
          %1114 = vst [vmem:[#allocation3 + $0x8] sm:$0xf] 0
        $region88: #{tpu_custom_call.1} parent=51 // pred_fallthru
          _
        %s1115 = sadd.s32 %s511, 17
        %p1116 = scmp.eq.s32.totalorder %s1115, 17
        // Predicated region
        $region89: #{tpu_custom_call.1} parent=51 // pred_check
          %p1117 = pneg %p1116
        $region90: #{tpu_custom_call.1} parent=51 // pred_check_branch
          %1119 = sbr.rel (%p1117) target = $region92
        $region91: #{tpu_custom_call.1} parent=51 // pred_region
          %s1120 = scalar_lea.vmem [#allocation3], 272
          %1121 = vst [vmem:[%s1120 + $0x4] sm:$0xf] 0
          %1122 = vst [vmem:[%s1120 + $0x8] sm:$0xf] 0
        $region92: #{tpu_custom_call.1} parent=51 // pred_fallthru
          _
        %v1123 = vld [vmem:[#allocation8] sm:$0xff]
        %v1124 = vld [vmem:[#allocation8 + $0x8] sm:$0x1]
        %v1125 = vld [vmem:[#allocation3] sm:$0x8]
        %v1126 = vld [vmem:[#allocation3 + $0x4] sm:$0xf]
        %v1127 = vld [vmem:[#allocation3 + $0x8] sm:$0xf]
        %v1128 = vld [vmem:[#allocation3 + $0x10] sm:$0x8]
        %v1129 = vld [vmem:[#allocation3 + $0x14] sm:$0xf]
        %v1130 = vld [vmem:[#allocation3 + $0x18] sm:$0xf]
        %v1131 = vld [vmem:[#allocation3 + $0x20] sm:$0x8]
        %v1132 = vld [vmem:[#allocation3 + $0x24] sm:$0xf]
        %v1133 = vld [vmem:[#allocation3 + $0x28] sm:$0xf]
        %v1134 = vld [vmem:[#allocation3 + $0x30] sm:$0x8]
        %v1135 = vld [vmem:[#allocation3 + $0x34] sm:$0xf]
        %v1136 = vld [vmem:[#allocation3 + $0x38] sm:$0xf]
        %v1137 = vld [vmem:[#allocation3 + $0x40] sm:$0x8]
        %v1138 = vld [vmem:[#allocation3 + $0x44] sm:$0xf]
        %v1139 = vld [vmem:[#allocation3 + $0x48] sm:$0xf]
        %v1140 = vld [vmem:[#allocation3 + $0x50] sm:$0x8]
        %v1141 = vld [vmem:[#allocation3 + $0x54] sm:$0xf]
        %v1142 = vld [vmem:[#allocation3 + $0x58] sm:$0xf]
        %v1143 = vld [vmem:[#allocation3 + $0x60] sm:$0x8]
        %v1144 = vld [vmem:[#allocation3 + $0x64] sm:$0xf]
        %v1145 = vld [vmem:[#allocation3 + $0x68] sm:$0xf]
        %v1146 = vld [vmem:[#allocation3 + $0x70] sm:$0x8]
        %v1147 = vld [vmem:[#allocation3 + $0x74] sm:$0xf]
        %v1148 = vld [vmem:[#allocation3 + $0x78] sm:$0xf]
        %v1149 = vld [vmem:[#allocation3 + $0x80] sm:$0x8]
        %v1150 = vld [vmem:[#allocation3 + $0x84] sm:$0xf]
        %v1151 = vld [vmem:[#allocation3 + $0x88] sm:$0xf]
        %v1152 = vld [vmem:[#allocation3 + $0x90] sm:$0x8]
        %v1153 = vld [vmem:[#allocation3 + $0x94] sm:$0xf]
        %v1154 = vld [vmem:[#allocation3 + $0x98] sm:$0xf]
        %v1155 = vld [vmem:[#allocation3 + $0xa0] sm:$0x8]
        %v1156 = vld [vmem:[#allocation3 + $0xa4] sm:$0xf]
        %v1157 = vld [vmem:[#allocation3 + $0xa8] sm:$0xf]
        %v1158 = vld [vmem:[#allocation3 + $0xb0] sm:$0x8]
        %v1159 = vld [vmem:[#allocation3 + $0xb4] sm:$0xf]
        %v1160 = vld [vmem:[#allocation3 + $0xb8] sm:$0xf]
        %v1161 = vld [vmem:[#allocation3 + $0xc0] sm:$0x8]
        %v1162 = vld [vmem:[#allocation3 + $0xc4] sm:$0xf]
        %v1163 = vld [vmem:[#allocation3 + $0xc8] sm:$0xf]
        %v1164 = vld [vmem:[#allocation3 + $0xd0] sm:$0x8]
        %v1165 = vld [vmem:[#allocation3 + $0xd4] sm:$0xf]
        %v1166 = vld [vmem:[#allocation3 + $0xd8] sm:$0xf]
        %v1167 = vld [vmem:[#allocation3 + $0xe0] sm:$0x8]
        %v1168 = vld [vmem:[#allocation3 + $0xe4] sm:$0xf]
        %v1169 = vld [vmem:[#allocation3 + $0xe8] sm:$0xf]
        %v1170 = vld [vmem:[#allocation3 + $0xf0] sm:$0x8]
        %v1171 = vld [vmem:[#allocation3 + $0xf4] sm:$0xf]
        %v1172 = vld [vmem:[#allocation3 + $0xf8] sm:$0xf]
        %v1173 = vunpack.c.l.bf16 %v1125
        %v1174 = vunpack.c.l.bf16 %v1126
        %v1175 = vunpack.c.l.bf16 %v1127
        %v1176 = vunpack.c.l.bf16 %v1128
        %v1177 = vunpack.c.l.bf16 %v1129
        %v1178 = vunpack.c.l.bf16 %v1130
        %v1179 = vunpack.c.l.bf16 %v1131
        %v1180 = vunpack.c.l.bf16 %v1132
        %v1181 = vunpack.c.l.bf16 %v1133
        %v1182 = vunpack.c.l.bf16 %v1134
        %v1183 = vunpack.c.l.bf16 %v1135
        %v1184 = vunpack.c.l.bf16 %v1136
        %v1185 = vunpack.c.l.bf16 %v1137
        %v1186 = vunpack.c.l.bf16 %v1138
        %v1187 = vunpack.c.l.bf16 %v1139
        %v1188 = vunpack.c.l.bf16 %v1140
        %v1189 = vunpack.c.l.bf16 %v1141
        %v1190 = vunpack.c.l.bf16 %v1142
        %v1191 = vunpack.c.l.bf16 %v1143
        %v1192 = vunpack.c.l.bf16 %v1144
        %v1193 = vunpack.c.l.bf16 %v1145
        %v1194 = vunpack.c.l.bf16 %v1146
        %v1195 = vunpack.c.l.bf16 %v1147
        %v1196 = vunpack.c.l.bf16 %v1148
        %v1197 = vunpack.c.l.bf16 %v1149
        %v1198 = vunpack.c.l.bf16 %v1150
        %v1199 = vunpack.c.l.bf16 %v1151
        %v1200 = vunpack.c.l.bf16 %v1152
        %v1201 = vunpack.c.l.bf16 %v1153
        %v1202 = vunpack.c.l.bf16 %v1154
        %v1203 = vunpack.c.l.bf16 %v1155
        %v1204 = vunpack.c.l.bf16 %v1156
        %v1205 = vunpack.c.l.bf16 %v1157
        %v1206 = vunpack.c.l.bf16 %v1158
        %v1207 = vunpack.c.l.bf16 %v1159
        %v1208 = vunpack.c.l.bf16 %v1160
        %v1209 = vunpack.c.l.bf16 %v1161
        %v1210 = vunpack.c.l.bf16 %v1162
        %v1211 = vunpack.c.l.bf16 %v1163
        %v1212 = vunpack.c.l.bf16 %v1164
        %v1213 = vunpack.c.l.bf16 %v1165
        %v1214 = vunpack.c.l.bf16 %v1166
        %v1215 = vunpack.c.l.bf16 %v1167
        %v1216 = vunpack.c.l.bf16 %v1168
        %v1217 = vunpack.c.l.bf16 %v1169
        %v1218 = vunpack.c.l.bf16 %v1170
        %v1219 = vunpack.c.l.bf16 %v1171
        %v1220 = vunpack.c.l.bf16 %v1172
        %v1221 = vlaneseq
        %v1222 = vshrl.u32 %v1221, 7
        %v1223 = vsub.s32 0, %v1222
        %v1224 = vrot.slane %v1123, %v1223
        %v1225 = vmul.f32 %v1173, %v1224
        %v1226 = vmul.f32 %v1174, %v1224
        %v1227 = vmul.f32 %v1175, %v1224
        %v1228 = vmul.f32 %v1176, %v1224
        %v1229 = vmul.f32 %v1177, %v1224
        %v1230 = vmul.f32 %v1178, %v1224
        %v1231 = vmul.f32 %v1179, %v1224
        %v1232 = vmul.f32 %v1180, %v1224
        %v1233 = vmul.f32 %v1181, %v1224
        %v1234 = vmul.f32 %v1182, %v1224
        %v1235 = vmul.f32 %v1183, %v1224
        %v1236 = vmul.f32 %v1184, %v1224
        %v1237 = vmul.f32 %v1185, %v1224
        %v1238 = vmul.f32 %v1186, %v1224
        %v1239 = vmul.f32 %v1187, %v1224
        %v1240 = vmul.f32 %v1188, %v1224
        %v1241 = vmul.f32 %v1189, %v1224
        %v1242 = vmul.f32 %v1190, %v1224
        %v1243 = vmul.f32 %v1191, %v1224
        %v1244 = vmul.f32 %v1192, %v1224
        %v1245 = vmul.f32 %v1193, %v1224
        %v1246 = vmul.f32 %v1194, %v1224
        %v1247 = vmul.f32 %v1195, %v1224
        %v1248 = vmul.f32 %v1196, %v1224
        %v1249 = vmul.f32 %v1197, %v1224
        %v1250 = vmul.f32 %v1198, %v1224
        %v1251 = vmul.f32 %v1199, %v1224
        %v1252 = vmul.f32 %v1200, %v1224
        %v1253 = vmul.f32 %v1201, %v1224
        %v1254 = vmul.f32 %v1202, %v1224
        %v1255 = vmul.f32 %v1203, %v1224
        %v1256 = vmul.f32 %v1204, %v1224
        %v1257 = vmul.f32 %v1205, %v1224
        %v1258 = vmul.f32 %v1206, %v1224
        %v1259 = vmul.f32 %v1207, %v1224
        %v1260 = vmul.f32 %v1208, %v1224
        %v1261 = vmul.f32 %v1209, %v1224
        %v1262 = vmul.f32 %v1210, %v1224
        %v1263 = vmul.f32 %v1211, %v1224
        %v1264 = vmul.f32 %v1212, %v1224
        %v1265 = vmul.f32 %v1213, %v1224
        %v1266 = vmul.f32 %v1214, %v1224
        %v1267 = vmul.f32 %v1215, %v1224
        %v1268 = vmul.f32 %v1216, %v1224
        %v1269 = vmul.f32 %v1217, %v1224
        %v1270 = vmul.f32 %v1218, %v1224
        %v1271 = vmul.f32 %v1219, %v1224
        %v1272 = vmul.f32 %v1220, %v1224
        %v1273 = vadd.f32 %v1225, 0.0
        %v1274 = vadd.f32 %v1226, 0.0
        %v1275 = vadd.f32 %v1227, 0.0
        %v1276 = vadd.f32 %v1228, 0.0
        %v1277 = vadd.f32 %v1229, 0.0
        %v1278 = vadd.f32 %v1230, 0.0
        %v1279 = vadd.f32 %v1231, 0.0
        %v1280 = vadd.f32 %v1232, 0.0
        %v1281 = vadd.f32 %v1233, 0.0
        %v1282 = vadd.f32 %v1234, 0.0
        %v1283 = vadd.f32 %v1235, 0.0
        %v1284 = vadd.f32 %v1236, 0.0
        %v1285 = vadd.f32 %v1237, 0.0
        %v1286 = vadd.f32 %v1238, 0.0
        %v1287 = vadd.f32 %v1239, 0.0
        %v1288 = vadd.f32 %v1240, 0.0
        %v1289 = vadd.f32 %v1241, 0.0
        %v1290 = vadd.f32 %v1242, 0.0
        %v1291 = vadd.f32 %v1243, 0.0
        %v1292 = vadd.f32 %v1244, 0.0
        %v1293 = vadd.f32 %v1245, 0.0
        %v1294 = vadd.f32 %v1246, 0.0
        %v1295 = vadd.f32 %v1247, 0.0
        %v1296 = vadd.f32 %v1248, 0.0
        %v1297 = vadd.f32 %v1249, 0.0
        %v1298 = vadd.f32 %v1250, 0.0
        %v1299 = vadd.f32 %v1251, 0.0
        %v1300 = vadd.f32 %v1252, 0.0
        %v1301 = vadd.f32 %v1253, 0.0
        %v1302 = vadd.f32 %v1254, 0.0
        %v1303 = vadd.f32 %v1255, 0.0
        %v1304 = vadd.f32 %v1256, 0.0
        %v1305 = vadd.f32 %v1257, 0.0
        %v1306 = vadd.f32 %v1258, 0.0
        %v1307 = vadd.f32 %v1259, 0.0
        %v1308 = vadd.f32 %v1260, 0.0
        %v1309 = vadd.f32 %v1261, 0.0
        %v1310 = vadd.f32 %v1262, 0.0
        %v1311 = vadd.f32 %v1263, 0.0
        %v1312 = vadd.f32 %v1264, 0.0
        %v1313 = vadd.f32 %v1265, 0.0
        %v1314 = vadd.f32 %v1266, 0.0
        %v1315 = vadd.f32 %v1267, 0.0
        %v1316 = vadd.f32 %v1268, 0.0
        %v1317 = vadd.f32 %v1269, 0.0
        %v1318 = vadd.f32 %v1270, 0.0
        %v1319 = vadd.f32 %v1271, 0.0
        %v1320 = vadd.f32 %v1272, 0.0
        %v1321 = vlaneseq
        %v1322 = vshrl.u32 %v1321, 7
        %v1323 = vsub.s32 1, %v1322
        %v1324 = vrot.slane %v1123, %v1323
        %v1325 = vmul.f32 %v1174, %v1324
        %v1326 = vmul.f32 %v1175, %v1324
        %v1327 = vmul.f32 %v1177, %v1324
        %v1328 = vmul.f32 %v1178, %v1324
        %v1329 = vmul.f32 %v1180, %v1324
        %v1330 = vmul.f32 %v1181, %v1324
        %v1331 = vmul.f32 %v1183, %v1324
        %v1332 = vmul.f32 %v1184, %v1324
        %v1333 = vmul.f32 %v1186, %v1324
        %v1334 = vmul.f32 %v1187, %v1324
        %v1335 = vmul.f32 %v1189, %v1324
        %v1336 = vmul.f32 %v1190, %v1324
        %v1337 = vmul.f32 %v1192, %v1324
        %v1338 = vmul.f32 %v1193, %v1324
        %v1339 = vmul.f32 %v1195, %v1324
        %v1340 = vmul.f32 %v1196, %v1324
        %v1341 = vmul.f32 %v1198, %v1324
        %v1342 = vmul.f32 %v1199, %v1324
        %v1343 = vmul.f32 %v1201, %v1324
        %v1344 = vmul.f32 %v1202, %v1324
        %v1345 = vmul.f32 %v1204, %v1324
        %v1346 = vmul.f32 %v1205, %v1324
        %v1347 = vmul.f32 %v1207, %v1324
        %v1348 = vmul.f32 %v1208, %v1324
        %v1349 = vmul.f32 %v1210, %v1324
        %v1350 = vmul.f32 %v1211, %v1324
        %v1351 = vmul.f32 %v1213, %v1324
        %v1352 = vmul.f32 %v1214, %v1324
        %v1353 = vmul.f32 %v1216, %v1324
        %v1354 = vmul.f32 %v1217, %v1324
        %v1355 = vmul.f32 %v1219, %v1324
        %v1356 = vmul.f32 %v1220, %v1324
        %vm1389 = vcmask 1046528
        %v1390 = vrot.slane %v1325, 1
        %v1391 = vrot.slane %v1326, 1
        %v1392 = vsel %vm1389, %v1390, %v1391
        %v1393 = vrot.slane %v1327, 1
        %v1394 = vrot.slane %v1328, 1
        %v1395 = vsel %vm1389, %v1393, %v1394
        %v1396 = vrot.slane %v1329, 1
        %v1397 = vrot.slane %v1330, 1
        %v1398 = vsel %vm1389, %v1396, %v1397
        %v1399 = vrot.slane %v1331, 1
        %v1400 = vrot.slane %v1332, 1
        %v1401 = vsel %vm1389, %v1399, %v1400
        %v1402 = vrot.slane %v1333, 1
        %v1403 = vrot.slane %v1334, 1
        %v1404 = vsel %vm1389, %v1402, %v1403
        %v1405 = vrot.slane %v1335, 1
        %v1406 = vrot.slane %v1336, 1
        %v1407 = vsel %vm1389, %v1405, %v1406
        %v1408 = vrot.slane %v1337, 1
        %v1409 = vrot.slane %v1338, 1
        %v1410 = vsel %vm1389, %v1408, %v1409
        %v1411 = vrot.slane %v1339, 1
        %v1412 = vrot.slane %v1340, 1
        %v1413 = vsel %vm1389, %v1411, %v1412
        %v1414 = vrot.slane %v1341, 1
        %v1415 = vrot.slane %v1342, 1
        %v1416 = vsel %vm1389, %v1414, %v1415
        %v1417 = vrot.slane %v1343, 1
        %v1418 = vrot.slane %v1344, 1
        %v1419 = vsel %vm1389, %v1417, %v1418
        %v1420 = vrot.slane %v1345, 1
        %v1421 = vrot.slane %v1346, 1
        %v1422 = vsel %vm1389, %v1420, %v1421
        %v1423 = vrot.slane %v1347, 1
        %v1424 = vrot.slane %v1348, 1
        %v1425 = vsel %vm1389, %v1423, %v1424
        %v1426 = vrot.slane %v1349, 1
        %v1427 = vrot.slane %v1350, 1
        %v1428 = vsel %vm1389, %v1426, %v1427
        %v1429 = vrot.slane %v1351, 1
        %v1430 = vrot.slane %v1352, 1
        %v1431 = vsel %vm1389, %v1429, %v1430
        %v1432 = vrot.slane %v1353, 1
        %v1433 = vrot.slane %v1354, 1
        %v1434 = vsel %vm1389, %v1432, %v1433
        %v1435 = vrot.slane %v1355, 1
        %v1436 = vrot.slane %v1356, 1
        %v1437 = vsel %vm1389, %v1435, %v1436
        %v1486 = vadd.f32 %v1273, %v1390
        %v1487 = vadd.f32 %v1274, %v1392
        %v1488 = vadd.f32 %v1275, %v1391
        %v1489 = vadd.f32 %v1276, %v1393
        %v1490 = vadd.f32 %v1277, %v1395
        %v1491 = vadd.f32 %v1278, %v1394
        %v1492 = vadd.f32 %v1279, %v1396
        %v1493 = vadd.f32 %v1280, %v1398
        %v1494 = vadd.f32 %v1281, %v1397
        %v1495 = vadd.f32 %v1282, %v1399
        %v1496 = vadd.f32 %v1283, %v1401
        %v1497 = vadd.f32 %v1284, %v1400
        %v1498 = vadd.f32 %v1285, %v1402
        %v1499 = vadd.f32 %v1286, %v1404
        %v1500 = vadd.f32 %v1287, %v1403
        %v1501 = vadd.f32 %v1288, %v1405
        %v1502 = vadd.f32 %v1289, %v1407
        %v1503 = vadd.f32 %v1290, %v1406
        %v1504 = vadd.f32 %v1291, %v1408
        %v1505 = vadd.f32 %v1292, %v1410
        %v1506 = vadd.f32 %v1293, %v1409
        %v1507 = vadd.f32 %v1294, %v1411
        %v1508 = vadd.f32 %v1295, %v1413
        %v1509 = vadd.f32 %v1296, %v1412
        %v1510 = vadd.f32 %v1297, %v1414
        %v1511 = vadd.f32 %v1298, %v1416
        %v1512 = vadd.f32 %v1299, %v1415
        %v1513 = vadd.f32 %v1300, %v1417
        %v1514 = vadd.f32 %v1301, %v1419
        %v1515 = vadd.f32 %v1302, %v1418
        %v1516 = vadd.f32 %v1303, %v1420
        %v1517 = vadd.f32 %v1304, %v1422
        %v1518 = vadd.f32 %v1305, %v1421
        %v1519 = vadd.f32 %v1306, %v1423
        %v1520 = vadd.f32 %v1307, %v1425
        %v1521 = vadd.f32 %v1308, %v1424
        %v1522 = vadd.f32 %v1309, %v1426
        %v1523 = vadd.f32 %v1310, %v1428
        %v1524 = vadd.f32 %v1311, %v1427
        %v1525 = vadd.f32 %v1312, %v1429
        %v1526 = vadd.f32 %v1313, %v1431
        %v1527 = vadd.f32 %v1314, %v1430
        %v1528 = vadd.f32 %v1315, %v1432
        %v1529 = vadd.f32 %v1316, %v1434
        %v1530 = vadd.f32 %v1317, %v1433
        %v1531 = vadd.f32 %v1318, %v1435
        %v1532 = vadd.f32 %v1319, %v1437
        %v1533 = vadd.f32 %v1320, %v1436
        %v1534 = vld [vmem:[#allocation3 + $0xc] sm:$0x1]
        %v1535 = vld [vmem:[#allocation3 + $0x1c] sm:$0x1]
        %v1536 = vld [vmem:[#allocation3 + $0x2c] sm:$0x1]
        %v1537 = vld [vmem:[#allocation3 + $0x3c] sm:$0x1]
        %v1538 = vld [vmem:[#allocation3 + $0x4c] sm:$0x1]
        %v1539 = vld [vmem:[#allocation3 + $0x5c] sm:$0x1]
        %v1540 = vld [vmem:[#allocation3 + $0x6c] sm:$0x1]
        %v1541 = vld [vmem:[#allocation3 + $0x7c] sm:$0x1]
        %v1542 = vld [vmem:[#allocation3 + $0x8c] sm:$0x1]
        %v1543 = vld [vmem:[#allocation3 + $0x9c] sm:$0x1]
        %v1544 = vld [vmem:[#allocation3 + $0xac] sm:$0x1]
        %v1545 = vld [vmem:[#allocation3 + $0xbc] sm:$0x1]
        %v1546 = vld [vmem:[#allocation3 + $0xcc] sm:$0x1]
        %v1547 = vld [vmem:[#allocation3 + $0xdc] sm:$0x1]
        %v1548 = vld [vmem:[#allocation3 + $0xec] sm:$0x1]
        %v1549 = vld [vmem:[#allocation3 + $0xfc] sm:$0x1]
        %v1550 = vunpack.c.l.bf16 %v1534
        %v1551 = vunpack.c.l.bf16 %v1535
        %v1552 = vunpack.c.l.bf16 %v1536
        %v1553 = vunpack.c.l.bf16 %v1537
        %v1554 = vunpack.c.l.bf16 %v1538
        %v1555 = vunpack.c.l.bf16 %v1539
        %v1556 = vunpack.c.l.bf16 %v1540
        %v1557 = vunpack.c.l.bf16 %v1541
        %v1558 = vunpack.c.l.bf16 %v1542
        %v1559 = vunpack.c.l.bf16 %v1543
        %v1560 = vunpack.c.l.bf16 %v1544
        %v1561 = vunpack.c.l.bf16 %v1545
        %v1562 = vunpack.c.l.bf16 %v1546
        %v1563 = vunpack.c.l.bf16 %v1547
        %v1564 = vunpack.c.l.bf16 %v1548
        %v1565 = vunpack.c.l.bf16 %v1549
        %v1566 = vlaneseq
        %v1567 = vshrl.u32 %v1566, 7
        %v1568 = vsub.s32 2, %v1567
        %v1569 = vrot.slane %v1123, %v1568
        %v1570 = vmul.f32 %v1174, %v1569
        %v1571 = vmul.f32 %v1175, %v1569
        %v1572 = vmul.f32 %v1550, %v1569
        %v1573 = vmul.f32 %v1177, %v1569
        %v1574 = vmul.f32 %v1178, %v1569
        %v1575 = vmul.f32 %v1551, %v1569
        %v1576 = vmul.f32 %v1180, %v1569
        %v1577 = vmul.f32 %v1181, %v1569
        %v1578 = vmul.f32 %v1552, %v1569
        %v1579 = vmul.f32 %v1183, %v1569
        %v1580 = vmul.f32 %v1184, %v1569
        %v1581 = vmul.f32 %v1553, %v1569
        %v1582 = vmul.f32 %v1186, %v1569
        %v1583 = vmul.f32 %v1187, %v1569
        %v1584 = vmul.f32 %v1554, %v1569
        %v1585 = vmul.f32 %v1189, %v1569
        %v1586 = vmul.f32 %v1190, %v1569
        %v1587 = vmul.f32 %v1555, %v1569
        %v1588 = vmul.f32 %v1192, %v1569
        %v1589 = vmul.f32 %v1193, %v1569
        %v1590 = vmul.f32 %v1556, %v1569
        %v1591 = vmul.f32 %v1195, %v1569
        %v1592 = vmul.f32 %v1196, %v1569
        %v1593 = vmul.f32 %v1557, %v1569
        %v1594 = vmul.f32 %v1198, %v1569
        %v1595 = vmul.f32 %v1199, %v1569
        %v1596 = vmul.f32 %v1558, %v1569
        %v1597 = vmul.f32 %v1201, %v1569
        %v1598 = vmul.f32 %v1202, %v1569
        %v1599 = vmul.f32 %v1559, %v1569
        %v1600 = vmul.f32 %v1204, %v1569
        %v1601 = vmul.f32 %v1205, %v1569
        %v1602 = vmul.f32 %v1560, %v1569
        %v1603 = vmul.f32 %v1207, %v1569
        %v1604 = vmul.f32 %v1208, %v1569
        %v1605 = vmul.f32 %v1561, %v1569
        %v1606 = vmul.f32 %v1210, %v1569
        %v1607 = vmul.f32 %v1211, %v1569
        %v1608 = vmul.f32 %v1562, %v1569
        %v1609 = vmul.f32 %v1213, %v1569
        %v1610 = vmul.f32 %v1214, %v1569
        %v1611 = vmul.f32 %v1563, %v1569
        %v1612 = vmul.f32 %v1216, %v1569
        %v1613 = vmul.f32 %v1217, %v1569
        %v1614 = vmul.f32 %v1564, %v1569
        %v1615 = vmul.f32 %v1219, %v1569
        %v1616 = vmul.f32 %v1220, %v1569
        %v1617 = vmul.f32 %v1565, %v1569
        %vm1666 = vcmask 1045504
        %v1667 = vrot.slane %v1570, 2
        %v1668 = vrot.slane %v1571, 2
        %v1669 = vsel %vm1666, %v1667, %v1668
        %v1670 = vrot.slane %v1572, 2
        %v1671 = vsel %vm1666, %v1668, %v1670
        %v1672 = vrot.slane %v1573, 2
        %v1673 = vrot.slane %v1574, 2
        %v1674 = vsel %vm1666, %v1672, %v1673
        %v1675 = vrot.slane %v1575, 2
        %v1676 = vsel %vm1666, %v1673, %v1675
        %v1677 = vrot.slane %v1576, 2
        %v1678 = vrot.slane %v1577, 2
        %v1679 = vsel %vm1666, %v1677, %v1678
        %v1680 = vrot.slane %v1578, 2
        %v1681 = vsel %vm1666, %v1678, %v1680
        %v1682 = vrot.slane %v1579, 2
        %v1683 = vrot.slane %v1580, 2
        %v1684 = vsel %vm1666, %v1682, %v1683
        %v1685 = vrot.slane %v1581, 2
        %v1686 = vsel %vm1666, %v1683, %v1685
        %v1687 = vrot.slane %v1582, 2
        %v1688 = vrot.slane %v1583, 2
        %v1689 = vsel %vm1666, %v1687, %v1688
        %v1690 = vrot.slane %v1584, 2
        %v1691 = vsel %vm1666, %v1688, %v1690
        %v1692 = vrot.slane %v1585, 2
        %v1693 = vrot.slane %v1586, 2
        %v1694 = vsel %vm1666, %v1692, %v1693
        %v1695 = vrot.slane %v1587, 2
        %v1696 = vsel %vm1666, %v1693, %v1695
        %v1697 = vrot.slane %v1588, 2
        %v1698 = vrot.slane %v1589, 2
        %v1699 = vsel %vm1666, %v1697, %v1698
        %v1700 = vrot.slane %v1590, 2
        %v1701 = vsel %vm1666, %v1698, %v1700
        %v1702 = vrot.slane %v1591, 2
        %v1703 = vrot.slane %v1592, 2
        %v1704 = vsel %vm1666, %v1702, %v1703
        %v1705 = vrot.slane %v1593, 2
        %v1706 = vsel %vm1666, %v1703, %v1705
        %v1707 = vrot.slane %v1594, 2
        %v1708 = vrot.slane %v1595, 2
        %v1709 = vsel %vm1666, %v1707, %v1708
        %v1710 = vrot.slane %v1596, 2
        %v1711 = vsel %vm1666, %v1708, %v1710
        %v1712 = vrot.slane %v1597, 2
        %v1713 = vrot.slane %v1598, 2
        %v1714 = vsel %vm1666, %v1712, %v1713
        %v1715 = vrot.slane %v1599, 2
        %v1716 = vsel %vm1666, %v1713, %v1715
        %v1717 = vrot.slane %v1600, 2
        %v1718 = vrot.slane %v1601, 2
        %v1719 = vsel %vm1666, %v1717, %v1718
        %v1720 = vrot.slane %v1602, 2
        %v1721 = vsel %vm1666, %v1718, %v1720
        %v1722 = vrot.slane %v1603, 2
        %v1723 = vrot.slane %v1604, 2
        %v1724 = vsel %vm1666, %v1722, %v1723
        %v1725 = vrot.slane %v1605, 2
        %v1726 = vsel %vm1666, %v1723, %v1725
        %v1727 = vrot.slane %v1606, 2
        %v1728 = vrot.slane %v1607, 2
        %v1729 = vsel %vm1666, %v1727, %v1728
        %v1730 = vrot.slane %v1608, 2
        %v1731 = vsel %vm1666, %v1728, %v1730
        %v1732 = vrot.slane %v1609, 2
        %v1733 = vrot.slane %v1610, 2
        %v1734 = vsel %vm1666, %v1732, %v1733
        %v1735 = vrot.slane %v1611, 2
        %v1736 = vsel %vm1666, %v1733, %v1735
        %v1737 = vrot.slane %v1612, 2
        %v1738 = vrot.slane %v1613, 2
        %v1739 = vsel %vm1666, %v1737, %v1738
        %v1740 = vrot.slane %v1614, 2
        %v1741 = vsel %vm1666, %v1738, %v1740
        %v1742 = vrot.slane %v1615, 2
        %v1743 = vrot.slane %v1616, 2
        %v1744 = vsel %vm1666, %v1742, %v1743
        %v1745 = vrot.slane %v1617, 2
        %v1746 = vsel %vm1666, %v1743, %v1745
        %v1795 = vadd.f32 %v1486, %v1667
        %v1796 = vadd.f32 %v1487, %v1669
        %v1797 = vadd.f32 %v1488, %v1671
        %v1798 = vadd.f32 %v1489, %v1672
        %v1799 = vadd.f32 %v1490, %v1674
        %v1800 = vadd.f32 %v1491, %v1676
        %v1801 = vadd.f32 %v1492, %v1677
        %v1802 = vadd.f32 %v1493, %v1679
        %v1803 = vadd.f32 %v1494, %v1681
        %v1804 = vadd.f32 %v1495, %v1682
        %v1805 = vadd.f32 %v1496, %v1684
        %v1806 = vadd.f32 %v1497, %v1686
        %v1807 = vadd.f32 %v1498, %v1687
        %v1808 = vadd.f32 %v1499, %v1689
        %v1809 = vadd.f32 %v1500, %v1691
        %v1810 = vadd.f32 %v1501, %v1692
        %v1811 = vadd.f32 %v1502, %v1694
        %v1812 = vadd.f32 %v1503, %v1696
        %v1813 = vadd.f32 %v1504, %v1697
        %v1814 = vadd.f32 %v1505, %v1699
        %v1815 = vadd.f32 %v1506, %v1701
        %v1816 = vadd.f32 %v1507, %v1702
        %v1817 = vadd.f32 %v1508, %v1704
        %v1818 = vadd.f32 %v1509, %v1706
        %v1819 = vadd.f32 %v1510, %v1707
        %v1820 = vadd.f32 %v1511, %v1709
        %v1821 = vadd.f32 %v1512, %v1711
        %v1822 = vadd.f32 %v1513, %v1712
        %v1823 = vadd.f32 %v1514, %v1714
        %v1824 = vadd.f32 %v1515, %v1716
        %v1825 = vadd.f32 %v1516, %v1717
        %v1826 = vadd.f32 %v1517, %v1719
        %v1827 = vadd.f32 %v1518, %v1721
        %v1828 = vadd.f32 %v1519, %v1722
        %v1829 = vadd.f32 %v1520, %v1724
        %v1830 = vadd.f32 %v1521, %v1726
        %v1831 = vadd.f32 %v1522, %v1727
        %v1832 = vadd.f32 %v1523, %v1729
        %v1833 = vadd.f32 %v1524, %v1731
        %v1834 = vadd.f32 %v1525, %v1732
        %v1835 = vadd.f32 %v1526, %v1734
        %v1836 = vadd.f32 %v1527, %v1736
        %v1837 = vadd.f32 %v1528, %v1737
        %v1838 = vadd.f32 %v1529, %v1739
        %v1839 = vadd.f32 %v1530, %v1741
        %v1840 = vadd.f32 %v1531, %v1742
        %v1841 = vadd.f32 %v1532, %v1744
        %v1842 = vadd.f32 %v1533, %v1746
        %s1843 = scalar_lea.vmem [#allocation3], 16
        %v1844 = vld [vmem:[%s1843] sm:$0x8]
        %v1845 = vld [vmem:[%s1843 + $0x4] sm:$0xf]
        %v1846 = vld [vmem:[%s1843 + $0x8] sm:$0xf]
        %v1847 = vld [vmem:[%s1843 + $0x10] sm:$0x8]
        %v1848 = vld [vmem:[%s1843 + $0x14] sm:$0xf]
        %v1849 = vld [vmem:[%s1843 + $0x18] sm:$0xf]
        %v1850 = vld [vmem:[%s1843 + $0x20] sm:$0x8]
        %v1851 = vld [vmem:[%s1843 + $0x24] sm:$0xf]
        %v1852 = vld [vmem:[%s1843 + $0x28] sm:$0xf]
        %v1853 = vld [vmem:[%s1843 + $0x30] sm:$0x8]
        %v1854 = vld [vmem:[%s1843 + $0x34] sm:$0xf]
        %v1855 = vld [vmem:[%s1843 + $0x38] sm:$0xf]
        %v1856 = vld [vmem:[%s1843 + $0x40] sm:$0x8]
        %v1857 = vld [vmem:[%s1843 + $0x44] sm:$0xf]
        %v1858 = vld [vmem:[%s1843 + $0x48] sm:$0xf]
        %v1859 = vld [vmem:[%s1843 + $0x50] sm:$0x8]
        %v1860 = vld [vmem:[%s1843 + $0x54] sm:$0xf]
        %v1861 = vld [vmem:[%s1843 + $0x58] sm:$0xf]
        %v1862 = vld [vmem:[%s1843 + $0x60] sm:$0x8]
        %v1863 = vld [vmem:[%s1843 + $0x64] sm:$0xf]
        %v1864 = vld [vmem:[%s1843 + $0x68] sm:$0xf]
        %v1865 = vld [vmem:[%s1843 + $0x70] sm:$0x8]
        %v1866 = vld [vmem:[%s1843 + $0x74] sm:$0xf]
        %v1867 = vld [vmem:[%s1843 + $0x78] sm:$0xf]
        %v1868 = vld [vmem:[%s1843 + $0x80] sm:$0x8]
        %v1869 = vld [vmem:[%s1843 + $0x84] sm:$0xf]
        %v1870 = vld [vmem:[%s1843 + $0x88] sm:$0xf]
        %v1871 = vld [vmem:[%s1843 + $0x90] sm:$0x8]
        %v1872 = vld [vmem:[%s1843 + $0x94] sm:$0xf]
        %v1873 = vld [vmem:[%s1843 + $0x98] sm:$0xf]
        %v1874 = vld [vmem:[%s1843 + $0xa0] sm:$0x8]
        %v1875 = vld [vmem:[%s1843 + $0xa4] sm:$0xf]
        %v1876 = vld [vmem:[%s1843 + $0xa8] sm:$0xf]
        %v1877 = vld [vmem:[%s1843 + $0xb0] sm:$0x8]
        %v1878 = vld [vmem:[%s1843 + $0xb4] sm:$0xf]
        %v1879 = vld [vmem:[%s1843 + $0xb8] sm:$0xf]
        %v1880 = vld [vmem:[%s1843 + $0xc0] sm:$0x8]
        %v1881 = vld [vmem:[%s1843 + $0xc4] sm:$0xf]
        %v1882 = vld [vmem:[%s1843 + $0xc8] sm:$0xf]
        %v1883 = vld [vmem:[%s1843 + $0xd0] sm:$0x8]
        %v1884 = vld [vmem:[%s1843 + $0xd4] sm:$0xf]
        %v1885 = vld [vmem:[%s1843 + $0xd8] sm:$0xf]
        %v1886 = vld [vmem:[%s1843 + $0xe0] sm:$0x8]
        %v1887 = vld [vmem:[%s1843 + $0xe4] sm:$0xf]
        %v1888 = vld [vmem:[%s1843 + $0xe8] sm:$0xf]
        %v1889 = vld [vmem:[%s1843 + $0xf0] sm:$0x8]
        %v1890 = vld [vmem:[%s1843 + $0xf4] sm:$0xf]
        %v1891 = vld [vmem:[%s1843 + $0xf8] sm:$0xf]
        %v1892 = vunpack.c.l.bf16 %v1844
        %v1893 = vunpack.c.l.bf16 %v1845
        %v1894 = vunpack.c.l.bf16 %v1846
        %v1895 = vunpack.c.l.bf16 %v1847
        %v1896 = vunpack.c.l.bf16 %v1848
        %v1897 = vunpack.c.l.bf16 %v1849
        %v1898 = vunpack.c.l.bf16 %v1850
        %v1899 = vunpack.c.l.bf16 %v1851
        %v1900 = vunpack.c.l.bf16 %v1852
        %v1901 = vunpack.c.l.bf16 %v1853
        %v1902 = vunpack.c.l.bf16 %v1854
        %v1903 = vunpack.c.l.bf16 %v1855
        %v1904 = vunpack.c.l.bf16 %v1856
        %v1905 = vunpack.c.l.bf16 %v1857
        %v1906 = vunpack.c.l.bf16 %v1858
        %v1907 = vunpack.c.l.bf16 %v1859
        %v1908 = vunpack.c.l.bf16 %v1860
        %v1909 = vunpack.c.l.bf16 %v1861
        %v1910 = vunpack.c.l.bf16 %v1862
        %v1911 = vunpack.c.l.bf16 %v1863
        %v1912 = vunpack.c.l.bf16 %v1864
        %v1913 = vunpack.c.l.bf16 %v1865
        %v1914 = vunpack.c.l.bf16 %v1866
        %v1915 = vunpack.c.l.bf16 %v1867
        %v1916 = vunpack.c.l.bf16 %v1868
        %v1917 = vunpack.c.l.bf16 %v1869
        %v1918 = vunpack.c.l.bf16 %v1870
        %v1919 = vunpack.c.l.bf16 %v1871
        %v1920 = vunpack.c.l.bf16 %v1872
        %v1921 = vunpack.c.l.bf16 %v1873
        %v1922 = vunpack.c.l.bf16 %v1874
        %v1923 = vunpack.c.l.bf16 %v1875
        %v1924 = vunpack.c.l.bf16 %v1876
        %v1925 = vunpack.c.l.bf16 %v1877
        %v1926 = vunpack.c.l.bf16 %v1878
        %v1927 = vunpack.c.l.bf16 %v1879
        %v1928 = vunpack.c.l.bf16 %v1880
        %v1929 = vunpack.c.l.bf16 %v1881
        %v1930 = vunpack.c.l.bf16 %v1882
        %v1931 = vunpack.c.l.bf16 %v1883
        %v1932 = vunpack.c.l.bf16 %v1884
        %v1933 = vunpack.c.l.bf16 %v1885
        %v1934 = vunpack.c.l.bf16 %v1886
        %v1935 = vunpack.c.l.bf16 %v1887
        %v1936 = vunpack.c.l.bf16 %v1888
        %v1937 = vunpack.c.l.bf16 %v1889
        %v1938 = vunpack.c.l.bf16 %v1890
        %v1939 = vunpack.c.l.bf16 %v1891
        %v1940 = vlaneseq
        %v1941 = vshrl.u32 %v1940, 7
        %v1942 = vsub.s32 3, %v1941
        %v1943 = vrot.slane %v1123, %v1942
        %v1944 = vmul.f32 %v1892, %v1943
        %v1945 = vmul.f32 %v1893, %v1943
        %v1946 = vmul.f32 %v1894, %v1943
        %v1947 = vmul.f32 %v1895, %v1943
        %v1948 = vmul.f32 %v1896, %v1943
        %v1949 = vmul.f32 %v1897, %v1943
        %v1950 = vmul.f32 %v1898, %v1943
        %v1951 = vmul.f32 %v1899, %v1943
        %v1952 = vmul.f32 %v1900, %v1943
        %v1953 = vmul.f32 %v1901, %v1943
        %v1954 = vmul.f32 %v1902, %v1943
        %v1955 = vmul.f32 %v1903, %v1943
        %v1956 = vmul.f32 %v1904, %v1943
        %v1957 = vmul.f32 %v1905, %v1943
        %v1958 = vmul.f32 %v1906, %v1943
        %v1959 = vmul.f32 %v1907, %v1943
        %v1960 = vmul.f32 %v1908, %v1943
        %v1961 = vmul.f32 %v1909, %v1943
        %v1962 = vmul.f32 %v1910, %v1943
        %v1963 = vmul.f32 %v1911, %v1943
        %v1964 = vmul.f32 %v1912, %v1943
        %v1965 = vmul.f32 %v1913, %v1943
        %v1966 = vmul.f32 %v1914, %v1943
        %v1967 = vmul.f32 %v1915, %v1943
        %v1968 = vmul.f32 %v1916, %v1943
        %v1969 = vmul.f32 %v1917, %v1943
        %v1970 = vmul.f32 %v1918, %v1943
        %v1971 = vmul.f32 %v1919, %v1943
        %v1972 = vmul.f32 %v1920, %v1943
        %v1973 = vmul.f32 %v1921, %v1943
        %v1974 = vmul.f32 %v1922, %v1943
        %v1975 = vmul.f32 %v1923, %v1943
        %v1976 = vmul.f32 %v1924, %v1943
        %v1977 = vmul.f32 %v1925, %v1943
        %v1978 = vmul.f32 %v1926, %v1943
        %v1979 = vmul.f32 %v1927, %v1943
        %v1980 = vmul.f32 %v1928, %v1943
        %v1981 = vmul.f32 %v1929, %v1943
        %v1982 = vmul.f32 %v1930, %v1943
        %v1983 = vmul.f32 %v1931, %v1943
        %v1984 = vmul.f32 %v1932, %v1943
        %v1985 = vmul.f32 %v1933, %v1943
        %v1986 = vmul.f32 %v1934, %v1943
        %v1987 = vmul.f32 %v1935, %v1943
        %v1988 = vmul.f32 %v1936, %v1943
        %v1989 = vmul.f32 %v1937, %v1943
        %v1990 = vmul.f32 %v1938, %v1943
        %v1991 = vmul.f32 %v1939, %v1943
        %v1992 = vadd.f32 %v1795, %v1944
        %v1993 = vadd.f32 %v1796, %v1945
        %v1994 = vadd.f32 %v1797, %v1946
        %v1995 = vadd.f32 %v1798, %v1947
        %v1996 = vadd.f32 %v1799, %v1948
        %v1997 = vadd.f32 %v1800, %v1949
        %v1998 = vadd.f32 %v1801, %v1950
        %v1999 = vadd.f32 %v1802, %v1951
        %v2000 = vadd.f32 %v1803, %v1952
        %v2001 = vadd.f32 %v1804, %v1953
        %v2002 = vadd.f32 %v1805, %v1954
        %v2003 = vadd.f32 %v1806, %v1955
        %v2004 = vadd.f32 %v1807, %v1956
        %v2005 = vadd.f32 %v1808, %v1957
        %v2006 = vadd.f32 %v1809, %v1958
        %v2007 = vadd.f32 %v1810, %v1959
        %v2008 = vadd.f32 %v1811, %v1960
        %v2009 = vadd.f32 %v1812, %v1961
        %v2010 = vadd.f32 %v1813, %v1962
        %v2011 = vadd.f32 %v1814, %v1963
        %v2012 = vadd.f32 %v1815, %v1964
        %v2013 = vadd.f32 %v1816, %v1965
        %v2014 = vadd.f32 %v1817, %v1966
        %v2015 = vadd.f32 %v1818, %v1967
        %v2016 = vadd.f32 %v1819, %v1968
        %v2017 = vadd.f32 %v1820, %v1969
        %v2018 = vadd.f32 %v1821, %v1970
        %v2019 = vadd.f32 %v1822, %v1971
        %v2020 = vadd.f32 %v1823, %v1972
        %v2021 = vadd.f32 %v1824, %v1973
        %v2022 = vadd.f32 %v1825, %v1974
        %v2023 = vadd.f32 %v1826, %v1975
        %v2024 = vadd.f32 %v1827, %v1976
        %v2025 = vadd.f32 %v1828, %v1977
        %v2026 = vadd.f32 %v1829, %v1978
        %v2027 = vadd.f32 %v1830, %v1979
        %v2028 = vadd.f32 %v1831, %v1980
        %v2029 = vadd.f32 %v1832, %v1981
        %v2030 = vadd.f32 %v1833, %v1982
        %v2031 = vadd.f32 %v1834, %v1983
        %v2032 = vadd.f32 %v1835, %v1984
        %v2033 = vadd.f32 %v1836, %v1985
        %v2034 = vadd.f32 %v1837, %v1986
        %v2035 = vadd.f32 %v1838, %v1987
        %v2036 = vadd.f32 %v1839, %v1988
        %v2037 = vadd.f32 %v1840, %v1989
        %v2038 = vadd.f32 %v1841, %v1990
        %v2039 = vadd.f32 %v1842, %v1991
        %v2040 = vlaneseq
        %v2041 = vshrl.u32 %v2040, 7
        %v2042 = vsub.s32 4, %v2041
        %v2043 = vrot.slane %v1123, %v2042
        %v2044 = vmul.f32 %v1893, %v2043
        %v2045 = vmul.f32 %v1894, %v2043
        %v2046 = vmul.f32 %v1896, %v2043
        %v2047 = vmul.f32 %v1897, %v2043
        %v2048 = vmul.f32 %v1899, %v2043
        %v2049 = vmul.f32 %v1900, %v2043
        %v2050 = vmul.f32 %v1902, %v2043
        %v2051 = vmul.f32 %v1903, %v2043
        %v2052 = vmul.f32 %v1905, %v2043
        %v2053 = vmul.f32 %v1906, %v2043
        %v2054 = vmul.f32 %v1908, %v2043
        %v2055 = vmul.f32 %v1909, %v2043
        %v2056 = vmul.f32 %v1911, %v2043
        %v2057 = vmul.f32 %v1912, %v2043
        %v2058 = vmul.f32 %v1914, %v2043
        %v2059 = vmul.f32 %v1915, %v2043
        %v2060 = vmul.f32 %v1917, %v2043
        %v2061 = vmul.f32 %v1918, %v2043
        %v2062 = vmul.f32 %v1920, %v2043
        %v2063 = vmul.f32 %v1921, %v2043
        %v2064 = vmul.f32 %v1923, %v2043
        %v2065 = vmul.f32 %v1924, %v2043
        %v2066 = vmul.f32 %v1926, %v2043
        %v2067 = vmul.f32 %v1927, %v2043
        %v2068 = vmul.f32 %v1929, %v2043
        %v2069 = vmul.f32 %v1930, %v2043
        %v2070 = vmul.f32 %v1932, %v2043
        %v2071 = vmul.f32 %v1933, %v2043
        %v2072 = vmul.f32 %v1935, %v2043
        %v2073 = vmul.f32 %v1936, %v2043
        %v2074 = vmul.f32 %v1938, %v2043
        %v2075 = vmul.f32 %v1939, %v2043
        %v2108 = vrot.slane %v2044, 1
        %v2109 = vrot.slane %v2045, 1
        %v2110 = vsel %vm1389, %v2108, %v2109
        %v2111 = vrot.slane %v2046, 1
        %v2112 = vrot.slane %v2047, 1
        %v2113 = vsel %vm1389, %v2111, %v2112
        %v2114 = vrot.slane %v2048, 1
        %v2115 = vrot.slane %v2049, 1
        %v2116 = vsel %vm1389, %v2114, %v2115
        %v2117 = vrot.slane %v2050, 1
        %v2118 = vrot.slane %v2051, 1
        %v2119 = vsel %vm1389, %v2117, %v2118
        %v2120 = vrot.slane %v2052, 1
        %v2121 = vrot.slane %v2053, 1
        %v2122 = vsel %vm1389, %v2120, %v2121
        %v2123 = vrot.slane %v2054, 1
        %v2124 = vrot.slane %v2055, 1
        %v2125 = vsel %vm1389, %v2123, %v2124
        %v2126 = vrot.slane %v2056, 1
        %v2127 = vrot.slane %v2057, 1
        %v2128 = vsel %vm1389, %v2126, %v2127
        %v2129 = vrot.slane %v2058, 1
        %v2130 = vrot.slane %v2059, 1
        %v2131 = vsel %vm1389, %v2129, %v2130
        %v2132 = vrot.slane %v2060, 1
        %v2133 = vrot.slane %v2061, 1
        %v2134 = vsel %vm1389, %v2132, %v2133
        %v2135 = vrot.slane %v2062, 1
        %v2136 = vrot.slane %v2063, 1
        %v2137 = vsel %vm1389, %v2135, %v2136
        %v2138 = vrot.slane %v2064, 1
        %v2139 = vrot.slane %v2065, 1
        %v2140 = vsel %vm1389, %v2138, %v2139
        %v2141 = vrot.slane %v2066, 1
        %v2142 = vrot.slane %v2067, 1
        %v2143 = vsel %vm1389, %v2141, %v2142
        %v2144 = vrot.slane %v2068, 1
        %v2145 = vrot.slane %v2069, 1
        %v2146 = vsel %vm1389, %v2144, %v2145
        %v2147 = vrot.slane %v2070, 1
        %v2148 = vrot.slane %v2071, 1
        %v2149 = vsel %vm1389, %v2147, %v2148
        %v2150 = vrot.slane %v2072, 1
        %v2151 = vrot.slane %v2073, 1
        %v2152 = vsel %vm1389, %v2150, %v2151
        %v2153 = vrot.slane %v2074, 1
        %v2154 = vrot.slane %v2075, 1
        %v2155 = vsel %vm1389, %v2153, %v2154
        %v2204 = vadd.f32 %v1992, %v2108
        %v2205 = vadd.f32 %v1993, %v2110
        %v2206 = vadd.f32 %v1994, %v2109
        %v2207 = vadd.f32 %v1995, %v2111
        %v2208 = vadd.f32 %v1996, %v2113
        %v2209 = vadd.f32 %v1997, %v2112
        %v2210 = vadd.f32 %v1998, %v2114
        %v2211 = vadd.f32 %v1999, %v2116
        %v2212 = vadd.f32 %v2000, %v2115
        %v2213 = vadd.f32 %v2001, %v2117
        %v2214 = vadd.f32 %v2002, %v2119
        %v2215 = vadd.f32 %v2003, %v2118
        %v2216 = vadd.f32 %v2004, %v2120
        %v2217 = vadd.f32 %v2005, %v2122
        %v2218 = vadd.f32 %v2006, %v2121
        %v2219 = vadd.f32 %v2007, %v2123
        %v2220 = vadd.f32 %v2008, %v2125
        %v2221 = vadd.f32 %v2009, %v2124
        %v2222 = vadd.f32 %v2010, %v2126
        %v2223 = vadd.f32 %v2011, %v2128
        %v2224 = vadd.f32 %v2012, %v2127
        %v2225 = vadd.f32 %v2013, %v2129
        %v2226 = vadd.f32 %v2014, %v2131
        %v2227 = vadd.f32 %v2015, %v2130
        %v2228 = vadd.f32 %v2016, %v2132
        %v2229 = vadd.f32 %v2017, %v2134
        %v2230 = vadd.f32 %v2018, %v2133
        %v2231 = vadd.f32 %v2019, %v2135
        %v2232 = vadd.f32 %v2020, %v2137
        %v2233 = vadd.f32 %v2021, %v2136
        %v2234 = vadd.f32 %v2022, %v2138
        %v2235 = vadd.f32 %v2023, %v2140
        %v2236 = vadd.f32 %v2024, %v2139
        %v2237 = vadd.f32 %v2025, %v2141
        %v2238 = vadd.f32 %v2026, %v2143
        %v2239 = vadd.f32 %v2027, %v2142
        %v2240 = vadd.f32 %v2028, %v2144
        %v2241 = vadd.f32 %v2029, %v2146
        %v2242 = vadd.f32 %v2030, %v2145
        %v2243 = vadd.f32 %v2031, %v2147
        %v2244 = vadd.f32 %v2032, %v2149
        %v2245 = vadd.f32 %v2033, %v2148
        %v2246 = vadd.f32 %v2034, %v2150
        %v2247 = vadd.f32 %v2035, %v2152
        %v2248 = vadd.f32 %v2036, %v2151
        %v2249 = vadd.f32 %v2037, %v2153
        %v2250 = vadd.f32 %v2038, %v2155
        %v2251 = vadd.f32 %v2039, %v2154
        %v2252 = vld [vmem:[%s1843 + $0xc] sm:$0x1]
        %v2253 = vld [vmem:[%s1843 + $0x1c] sm:$0x1]
        %v2254 = vld [vmem:[%s1843 + $0x2c] sm:$0x1]
        %v2255 = vld [vmem:[%s1843 + $0x3c] sm:$0x1]
        %v2256 = vld [vmem:[%s1843 + $0x4c] sm:$0x1]
        %v2257 = vld [vmem:[%s1843 + $0x5c] sm:$0x1]
        %v2258 = vld [vmem:[%s1843 + $0x6c] sm:$0x1]
        %v2259 = vld [vmem:[%s1843 + $0x7c] sm:$0x1]
        %v2260 = vld [vmem:[%s1843 + $0x8c] sm:$0x1]
        %v2261 = vld [vmem:[%s1843 + $0x9c] sm:$0x1]
        %v2262 = vld [vmem:[%s1843 + $0xac] sm:$0x1]
        %v2263 = vld [vmem:[%s1843 + $0xbc] sm:$0x1]
        %v2264 = vld [vmem:[%s1843 + $0xcc] sm:$0x1]
        %v2265 = vld [vmem:[%s1843 + $0xdc] sm:$0x1]
        %v2266 = vld [vmem:[%s1843 + $0xec] sm:$0x1]
        %v2267 = vld [vmem:[%s1843 + $0xfc] sm:$0x1]
        %v2268 = vunpack.c.l.bf16 %v2252
        %v2269 = vunpack.c.l.bf16 %v2253
        %v2270 = vunpack.c.l.bf16 %v2254
        %v2271 = vunpack.c.l.bf16 %v2255
        %v2272 = vunpack.c.l.bf16 %v2256
        %v2273 = vunpack.c.l.bf16 %v2257
        %v2274 = vunpack.c.l.bf16 %v2258
        %v2275 = vunpack.c.l.bf16 %v2259
        %v2276 = vunpack.c.l.bf16 %v2260
        %v2277 = vunpack.c.l.bf16 %v2261
        %v2278 = vunpack.c.l.bf16 %v2262
        %v2279 = vunpack.c.l.bf16 %v2263
        %v2280 = vunpack.c.l.bf16 %v2264
        %v2281 = vunpack.c.l.bf16 %v2265
        %v2282 = vunpack.c.l.bf16 %v2266
        %v2283 = vunpack.c.l.bf16 %v2267
        %v2284 = vlaneseq
        %v2285 = vshrl.u32 %v2284, 7
        %v2286 = vsub.s32 5, %v2285
        %v2287 = vrot.slane %v1123, %v2286
        %v2288 = vmul.f32 %v1893, %v2287
        %v2289 = vmul.f32 %v1894, %v2287
        %v2290 = vmul.f32 %v2268, %v2287
        %v2291 = vmul.f32 %v1896, %v2287
        %v2292 = vmul.f32 %v1897, %v2287
        %v2293 = vmul.f32 %v2269, %v2287
        %v2294 = vmul.f32 %v1899, %v2287
        %v2295 = vmul.f32 %v1900, %v2287
        %v2296 = vmul.f32 %v2270, %v2287
        %v2297 = vmul.f32 %v1902, %v2287
        %v2298 = vmul.f32 %v1903, %v2287
        %v2299 = vmul.f32 %v2271, %v2287
        %v2300 = vmul.f32 %v1905, %v2287
        %v2301 = vmul.f32 %v1906, %v2287
        %v2302 = vmul.f32 %v2272, %v2287
        %v2303 = vmul.f32 %v1908, %v2287
        %v2304 = vmul.f32 %v1909, %v2287
        %v2305 = vmul.f32 %v2273, %v2287
        %v2306 = vmul.f32 %v1911, %v2287
        %v2307 = vmul.f32 %v1912, %v2287
        %v2308 = vmul.f32 %v2274, %v2287
        %v2309 = vmul.f32 %v1914, %v2287
        %v2310 = vmul.f32 %v1915, %v2287
        %v2311 = vmul.f32 %v2275, %v2287
        %v2312 = vmul.f32 %v1917, %v2287
        %v2313 = vmul.f32 %v1918, %v2287
        %v2314 = vmul.f32 %v2276, %v2287
        %v2315 = vmul.f32 %v1920, %v2287
        %v2316 = vmul.f32 %v1921, %v2287
        %v2317 = vmul.f32 %v2277, %v2287
        %v2318 = vmul.f32 %v1923, %v2287
        %v2319 = vmul.f32 %v1924, %v2287
        %v2320 = vmul.f32 %v2278, %v2287
        %v2321 = vmul.f32 %v1926, %v2287
        %v2322 = vmul.f32 %v1927, %v2287
        %v2323 = vmul.f32 %v2279, %v2287
        %v2324 = vmul.f32 %v1929, %v2287
        %v2325 = vmul.f32 %v1930, %v2287
        %v2326 = vmul.f32 %v2280, %v2287
        %v2327 = vmul.f32 %v1932, %v2287
        %v2328 = vmul.f32 %v1933, %v2287
        %v2329 = vmul.f32 %v2281, %v2287
        %v2330 = vmul.f32 %v1935, %v2287
        %v2331 = vmul.f32 %v1936, %v2287
        %v2332 = vmul.f32 %v2282, %v2287
        %v2333 = vmul.f32 %v1938, %v2287
        %v2334 = vmul.f32 %v1939, %v2287
        %v2335 = vmul.f32 %v2283, %v2287
        %v2384 = vrot.slane %v2288, 2
        %v2385 = vrot.slane %v2289, 2
        %v2386 = vsel %vm1666, %v2384, %v2385
        %v2387 = vrot.slane %v2290, 2
        %v2388 = vsel %vm1666, %v2385, %v2387
        %v2389 = vrot.slane %v2291, 2
        %v2390 = vrot.slane %v2292, 2
        %v2391 = vsel %vm1666, %v2389, %v2390
        %v2392 = vrot.slane %v2293, 2
        %v2393 = vsel %vm1666, %v2390, %v2392
        %v2394 = vrot.slane %v2294, 2
        %v2395 = vrot.slane %v2295, 2
        %v2396 = vsel %vm1666, %v2394, %v2395
        %v2397 = vrot.slane %v2296, 2
        %v2398 = vsel %vm1666, %v2395, %v2397
        %v2399 = vrot.slane %v2297, 2
        %v2400 = vrot.slane %v2298, 2
        %v2401 = vsel %vm1666, %v2399, %v2400
        %v2402 = vrot.slane %v2299, 2
        %v2403 = vsel %vm1666, %v2400, %v2402
        %v2404 = vrot.slane %v2300, 2
        %v2405 = vrot.slane %v2301, 2
        %v2406 = vsel %vm1666, %v2404, %v2405
        %v2407 = vrot.slane %v2302, 2
        %v2408 = vsel %vm1666, %v2405, %v2407
        %v2409 = vrot.slane %v2303, 2
        %v2410 = vrot.slane %v2304, 2
        %v2411 = vsel %vm1666, %v2409, %v2410
        %v2412 = vrot.slane %v2305, 2
        %v2413 = vsel %vm1666, %v2410, %v2412
        %v2414 = vrot.slane %v2306, 2
        %v2415 = vrot.slane %v2307, 2
        %v2416 = vsel %vm1666, %v2414, %v2415
        %v2417 = vrot.slane %v2308, 2
        %v2418 = vsel %vm1666, %v2415, %v2417
        %v2419 = vrot.slane %v2309, 2
        %v2420 = vrot.slane %v2310, 2
        %v2421 = vsel %vm1666, %v2419, %v2420
        %v2422 = vrot.slane %v2311, 2
        %v2423 = vsel %vm1666, %v2420, %v2422
        %v2424 = vrot.slane %v2312, 2
        %v2425 = vrot.slane %v2313, 2
        %v2426 = vsel %vm1666, %v2424, %v2425
        %v2427 = vrot.slane %v2314, 2
        %v2428 = vsel %vm1666, %v2425, %v2427
        %v2429 = vrot.slane %v2315, 2
        %v2430 = vrot.slane %v2316, 2
        %v2431 = vsel %vm1666, %v2429, %v2430
        %v2432 = vrot.slane %v2317, 2
        %v2433 = vsel %vm1666, %v2430, %v2432
        %v2434 = vrot.slane %v2318, 2
        %v2435 = vrot.slane %v2319, 2
        %v2436 = vsel %vm1666, %v2434, %v2435
        %v2437 = vrot.slane %v2320, 2
        %v2438 = vsel %vm1666, %v2435, %v2437
        %v2439 = vrot.slane %v2321, 2
        %v2440 = vrot.slane %v2322, 2
        %v2441 = vsel %vm1666, %v2439, %v2440
        %v2442 = vrot.slane %v2323, 2
        %v2443 = vsel %vm1666, %v2440, %v2442
        %v2444 = vrot.slane %v2324, 2
        %v2445 = vrot.slane %v2325, 2
        %v2446 = vsel %vm1666, %v2444, %v2445
        %v2447 = vrot.slane %v2326, 2
        %v2448 = vsel %vm1666, %v2445, %v2447
        %v2449 = vrot.slane %v2327, 2
        %v2450 = vrot.slane %v2328, 2
        %v2451 = vsel %vm1666, %v2449, %v2450
        %v2452 = vrot.slane %v2329, 2
        %v2453 = vsel %vm1666, %v2450, %v2452
        %v2454 = vrot.slane %v2330, 2
        %v2455 = vrot.slane %v2331, 2
        %v2456 = vsel %vm1666, %v2454, %v2455
        %v2457 = vrot.slane %v2332, 2
        %v2458 = vsel %vm1666, %v2455, %v2457
        %v2459 = vrot.slane %v2333, 2
        %v2460 = vrot.slane %v2334, 2
        %v2461 = vsel %vm1666, %v2459, %v2460
        %v2462 = vrot.slane %v2335, 2
        %v2463 = vsel %vm1666, %v2460, %v2462
        %v2512 = vadd.f32 %v2204, %v2384
        %v2513 = vadd.f32 %v2205, %v2386
        %v2514 = vadd.f32 %v2206, %v2388
        %v2515 = vadd.f32 %v2207, %v2389
        %v2516 = vadd.f32 %v2208, %v2391
        %v2517 = vadd.f32 %v2209, %v2393
        %v2518 = vadd.f32 %v2210, %v2394
        %v2519 = vadd.f32 %v2211, %v2396
        %v2520 = vadd.f32 %v2212, %v2398
        %v2521 = vadd.f32 %v2213, %v2399
        %v2522 = vadd.f32 %v2214, %v2401
        %v2523 = vadd.f32 %v2215, %v2403
        %v2524 = vadd.f32 %v2216, %v2404
        %v2525 = vadd.f32 %v2217, %v2406
        %v2526 = vadd.f32 %v2218, %v2408
        %v2527 = vadd.f32 %v2219, %v2409
        %v2528 = vadd.f32 %v2220, %v2411
        %v2529 = vadd.f32 %v2221, %v2413
        %v2530 = vadd.f32 %v2222, %v2414
        %v2531 = vadd.f32 %v2223, %v2416
        %v2532 = vadd.f32 %v2224, %v2418
        %v2533 = vadd.f32 %v2225, %v2419
        %v2534 = vadd.f32 %v2226, %v2421
        %v2535 = vadd.f32 %v2227, %v2423
        %v2536 = vadd.f32 %v2228, %v2424
        %v2537 = vadd.f32 %v2229, %v2426
        %v2538 = vadd.f32 %v2230, %v2428
        %v2539 = vadd.f32 %v2231, %v2429
        %v2540 = vadd.f32 %v2232, %v2431
        %v2541 = vadd.f32 %v2233, %v2433
        %v2542 = vadd.f32 %v2234, %v2434
        %v2543 = vadd.f32 %v2235, %v2436
        %v2544 = vadd.f32 %v2236, %v2438
        %v2545 = vadd.f32 %v2237, %v2439
        %v2546 = vadd.f32 %v2238, %v2441
        %v2547 = vadd.f32 %v2239, %v2443
        %v2548 = vadd.f32 %v2240, %v2444
        %v2549 = vadd.f32 %v2241, %v2446
        %v2550 = vadd.f32 %v2242, %v2448
        %v2551 = vadd.f32 %v2243, %v2449
        %v2552 = vadd.f32 %v2244, %v2451
        %v2553 = vadd.f32 %v2245, %v2453
        %v2554 = vadd.f32 %v2246, %v2454
        %v2555 = vadd.f32 %v2247, %v2456
        %v2556 = vadd.f32 %v2248, %v2458
        %v2557 = vadd.f32 %v2249, %v2459
        %v2558 = vadd.f32 %v2250, %v2461
        %v2559 = vadd.f32 %v2251, %v2463
        %s2560 = scalar_lea.vmem [#allocation3], 32
        %v2561 = vld [vmem:[%s2560] sm:$0x8]
        %v2562 = vld [vmem:[%s2560 + $0x4] sm:$0xf]
        %v2563 = vld [vmem:[%s2560 + $0x8] sm:$0xf]
        %v2564 = vld [vmem:[%s2560 + $0x10] sm:$0x8]
        %v2565 = vld [vmem:[%s2560 + $0x14] sm:$0xf]
        %v2566 = vld [vmem:[%s2560 + $0x18] sm:$0xf]
        %v2567 = vld [vmem:[%s2560 + $0x20] sm:$0x8]
        %v2568 = vld [vmem:[%s2560 + $0x24] sm:$0xf]
        %v2569 = vld [vmem:[%s2560 + $0x28] sm:$0xf]
        %v2570 = vld [vmem:[%s2560 + $0x30] sm:$0x8]
        %v2571 = vld [vmem:[%s2560 + $0x34] sm:$0xf]
        %v2572 = vld [vmem:[%s2560 + $0x38] sm:$0xf]
        %v2573 = vld [vmem:[%s2560 + $0x40] sm:$0x8]
        %v2574 = vld [vmem:[%s2560 + $0x44] sm:$0xf]
        %v2575 = vld [vmem:[%s2560 + $0x48] sm:$0xf]
        %v2576 = vld [vmem:[%s2560 + $0x50] sm:$0x8]
        %v2577 = vld [vmem:[%s2560 + $0x54] sm:$0xf]
        %v2578 = vld [vmem:[%s2560 + $0x58] sm:$0xf]
        %v2579 = vld [vmem:[%s2560 + $0x60] sm:$0x8]
        %v2580 = vld [vmem:[%s2560 + $0x64] sm:$0xf]
        %v2581 = vld [vmem:[%s2560 + $0x68] sm:$0xf]
        %v2582 = vld [vmem:[%s2560 + $0x70] sm:$0x8]
        %v2583 = vld [vmem:[%s2560 + $0x74] sm:$0xf]
        %v2584 = vld [vmem:[%s2560 + $0x78] sm:$0xf]
        %v2585 = vld [vmem:[%s2560 + $0x80] sm:$0x8]
        %v2586 = vld [vmem:[%s2560 + $0x84] sm:$0xf]
        %v2587 = vld [vmem:[%s2560 + $0x88] sm:$0xf]
        %v2588 = vld [vmem:[%s2560 + $0x90] sm:$0x8]
        %v2589 = vld [vmem:[%s2560 + $0x94] sm:$0xf]
        %v2590 = vld [vmem:[%s2560 + $0x98] sm:$0xf]
        %v2591 = vld [vmem:[%s2560 + $0xa0] sm:$0x8]
        %v2592 = vld [vmem:[%s2560 + $0xa4] sm:$0xf]
        %v2593 = vld [vmem:[%s2560 + $0xa8] sm:$0xf]
        %v2594 = vld [vmem:[%s2560 + $0xb0] sm:$0x8]
        %v2595 = vld [vmem:[%s2560 + $0xb4] sm:$0xf]
        %v2596 = vld [vmem:[%s2560 + $0xb8] sm:$0xf]
        %v2597 = vld [vmem:[%s2560 + $0xc0] sm:$0x8]
        %v2598 = vld [vmem:[%s2560 + $0xc4] sm:$0xf]
        %v2599 = vld [vmem:[%s2560 + $0xc8] sm:$0xf]
        %v2600 = vld [vmem:[%s2560 + $0xd0] sm:$0x8]
        %v2601 = vld [vmem:[%s2560 + $0xd4] sm:$0xf]
        %v2602 = vld [vmem:[%s2560 + $0xd8] sm:$0xf]
        %v2603 = vld [vmem:[%s2560 + $0xe0] sm:$0x8]
        %v2604 = vld [vmem:[%s2560 + $0xe4] sm:$0xf]
        %v2605 = vld [vmem:[%s2560 + $0xe8] sm:$0xf]
        %v2606 = vld [vmem:[%s2560 + $0xf0] sm:$0x8]
        %v2607 = vld [vmem:[%s2560 + $0xf4] sm:$0xf]
        %v2608 = vld [vmem:[%s2560 + $0xf8] sm:$0xf]
        %v2609 = vunpack.c.l.bf16 %v2561
        %v2610 = vunpack.c.l.bf16 %v2562
        %v2611 = vunpack.c.l.bf16 %v2563
        %v2612 = vunpack.c.l.bf16 %v2564
        %v2613 = vunpack.c.l.bf16 %v2565
        %v2614 = vunpack.c.l.bf16 %v2566
        %v2615 = vunpack.c.l.bf16 %v2567
        %v2616 = vunpack.c.l.bf16 %v2568
        %v2617 = vunpack.c.l.bf16 %v2569
        %v2618 = vunpack.c.l.bf16 %v2570
        %v2619 = vunpack.c.l.bf16 %v2571
        %v2620 = vunpack.c.l.bf16 %v2572
        %v2621 = vunpack.c.l.bf16 %v2573
        %v2622 = vunpack.c.l.bf16 %v2574
        %v2623 = vunpack.c.l.bf16 %v2575
        %v2624 = vunpack.c.l.bf16 %v2576
        %v2625 = vunpack.c.l.bf16 %v2577
        %v2626 = vunpack.c.l.bf16 %v2578
        %v2627 = vunpack.c.l.bf16 %v2579
        %v2628 = vunpack.c.l.bf16 %v2580
        %v2629 = vunpack.c.l.bf16 %v2581
        %v2630 = vunpack.c.l.bf16 %v2582
        %v2631 = vunpack.c.l.bf16 %v2583
        %v2632 = vunpack.c.l.bf16 %v2584
        %v2633 = vunpack.c.l.bf16 %v2585
        %v2634 = vunpack.c.l.bf16 %v2586
        %v2635 = vunpack.c.l.bf16 %v2587
        %v2636 = vunpack.c.l.bf16 %v2588
        %v2637 = vunpack.c.l.bf16 %v2589
        %v2638 = vunpack.c.l.bf16 %v2590
        %v2639 = vunpack.c.l.bf16 %v2591
        %v2640 = vunpack.c.l.bf16 %v2592
        %v2641 = vunpack.c.l.bf16 %v2593
        %v2642 = vunpack.c.l.bf16 %v2594
        %v2643 = vunpack.c.l.bf16 %v2595
        %v2644 = vunpack.c.l.bf16 %v2596
        %v2645 = vunpack.c.l.bf16 %v2597
        %v2646 = vunpack.c.l.bf16 %v2598
        %v2647 = vunpack.c.l.bf16 %v2599
        %v2648 = vunpack.c.l.bf16 %v2600
        %v2649 = vunpack.c.l.bf16 %v2601
        %v2650 = vunpack.c.l.bf16 %v2602
        %v2651 = vunpack.c.l.bf16 %v2603
        %v2652 = vunpack.c.l.bf16 %v2604
        %v2653 = vunpack.c.l.bf16 %v2605
        %v2654 = vunpack.c.l.bf16 %v2606
        %v2655 = vunpack.c.l.bf16 %v2607
        %v2656 = vunpack.c.l.bf16 %v2608
        %v2657 = vlaneseq
        %v2658 = vshrl.u32 %v2657, 7
        %v2659 = vsub.s32 6, %v2658
        %v2660 = vrot.slane %v1123, %v2659
        %v2661 = vmul.f32 %v2609, %v2660
        %v2662 = vmul.f32 %v2610, %v2660
        %v2663 = vmul.f32 %v2611, %v2660
        %v2664 = vmul.f32 %v2612, %v2660
        %v2665 = vmul.f32 %v2613, %v2660
        %v2666 = vmul.f32 %v2614, %v2660
        %v2667 = vmul.f32 %v2615, %v2660
        %v2668 = vmul.f32 %v2616, %v2660
        %v2669 = vmul.f32 %v2617, %v2660
        %v2670 = vmul.f32 %v2618, %v2660
        %v2671 = vmul.f32 %v2619, %v2660
        %v2672 = vmul.f32 %v2620, %v2660
        %v2673 = vmul.f32 %v2621, %v2660
        %v2674 = vmul.f32 %v2622, %v2660
        %v2675 = vmul.f32 %v2623, %v2660
        %v2676 = vmul.f32 %v2624, %v2660
        %v2677 = vmul.f32 %v2625, %v2660
        %v2678 = vmul.f32 %v2626, %v2660
        %v2679 = vmul.f32 %v2627, %v2660
        %v2680 = vmul.f32 %v2628, %v2660
        %v2681 = vmul.f32 %v2629, %v2660
        %v2682 = vmul.f32 %v2630, %v2660
        %v2683 = vmul.f32 %v2631, %v2660
        %v2684 = vmul.f32 %v2632, %v2660
        %v2685 = vmul.f32 %v2633, %v2660
        %v2686 = vmul.f32 %v2634, %v2660
        %v2687 = vmul.f32 %v2635, %v2660
        %v2688 = vmul.f32 %v2636, %v2660
        %v2689 = vmul.f32 %v2637, %v2660
        %v2690 = vmul.f32 %v2638, %v2660
        %v2691 = vmul.f32 %v2639, %v2660
        %v2692 = vmul.f32 %v2640, %v2660
        %v2693 = vmul.f32 %v2641, %v2660
        %v2694 = vmul.f32 %v2642, %v2660
        %v2695 = vmul.f32 %v2643, %v2660
        %v2696 = vmul.f32 %v2644, %v2660
        %v2697 = vmul.f32 %v2645, %v2660
        %v2698 = vmul.f32 %v2646, %v2660
        %v2699 = vmul.f32 %v2647, %v2660
        %v2700 = vmul.f32 %v2648, %v2660
        %v2701 = vmul.f32 %v2649, %v2660
        %v2702 = vmul.f32 %v2650, %v2660
        %v2703 = vmul.f32 %v2651, %v2660
        %v2704 = vmul.f32 %v2652, %v2660
        %v2705 = vmul.f32 %v2653, %v2660
        %v2706 = vmul.f32 %v2654, %v2660
        %v2707 = vmul.f32 %v2655, %v2660
        %v2708 = vmul.f32 %v2656, %v2660
        %v2709 = vadd.f32 %v2512, %v2661
        %v2710 = vadd.f32 %v2513, %v2662
        %v2711 = vadd.f32 %v2514, %v2663
        %v2712 = vadd.f32 %v2515, %v2664
        %v2713 = vadd.f32 %v2516, %v2665
        %v2714 = vadd.f32 %v2517, %v2666
        %v2715 = vadd.f32 %v2518, %v2667
        %v2716 = vadd.f32 %v2519, %v2668
        %v2717 = vadd.f32 %v2520, %v2669
        %v2718 = vadd.f32 %v2521, %v2670
        %v2719 = vadd.f32 %v2522, %v2671
        %v2720 = vadd.f32 %v2523, %v2672
        %v2721 = vadd.f32 %v2524, %v2673
        %v2722 = vadd.f32 %v2525, %v2674
        %v2723 = vadd.f32 %v2526, %v2675
        %v2724 = vadd.f32 %v2527, %v2676
        %v2725 = vadd.f32 %v2528, %v2677
        %v2726 = vadd.f32 %v2529, %v2678
        %v2727 = vadd.f32 %v2530, %v2679
        %v2728 = vadd.f32 %v2531, %v2680
        %v2729 = vadd.f32 %v2532, %v2681
        %v2730 = vadd.f32 %v2533, %v2682
        %v2731 = vadd.f32 %v2534, %v2683
        %v2732 = vadd.f32 %v2535, %v2684
        %v2733 = vadd.f32 %v2536, %v2685
        %v2734 = vadd.f32 %v2537, %v2686
        %v2735 = vadd.f32 %v2538, %v2687
        %v2736 = vadd.f32 %v2539, %v2688
        %v2737 = vadd.f32 %v2540, %v2689
        %v2738 = vadd.f32 %v2541, %v2690
        %v2739 = vadd.f32 %v2542, %v2691
        %v2740 = vadd.f32 %v2543, %v2692
        %v2741 = vadd.f32 %v2544, %v2693
        %v2742 = vadd.f32 %v2545, %v2694
        %v2743 = vadd.f32 %v2546, %v2695
        %v2744 = vadd.f32 %v2547, %v2696
        %v2745 = vadd.f32 %v2548, %v2697
        %v2746 = vadd.f32 %v2549, %v2698
        %v2747 = vadd.f32 %v2550, %v2699
        %v2748 = vadd.f32 %v2551, %v2700
        %v2749 = vadd.f32 %v2552, %v2701
        %v2750 = vadd.f32 %v2553, %v2702
        %v2751 = vadd.f32 %v2554, %v2703
        %v2752 = vadd.f32 %v2555, %v2704
        %v2753 = vadd.f32 %v2556, %v2705
        %v2754 = vadd.f32 %v2557, %v2706
        %v2755 = vadd.f32 %v2558, %v2707
        %v2756 = vadd.f32 %v2559, %v2708
        %v2757 = vlaneseq
        %v2758 = vshrl.u32 %v2757, 7
        %v2759 = vsub.s32 7, %v2758
        %v2760 = vrot.slane %v1123, %v2759
        %v2761 = vmul.f32 %v2610, %v2760
        %v2762 = vmul.f32 %v2611, %v2760
        %v2763 = vmul.f32 %v2613, %v2760
        %v2764 = vmul.f32 %v2614, %v2760
        %v2765 = vmul.f32 %v2616, %v2760
        %v2766 = vmul.f32 %v2617, %v2760
        %v2767 = vmul.f32 %v2619, %v2760
        %v2768 = vmul.f32 %v2620, %v2760
        %v2769 = vmul.f32 %v2622, %v2760
        %v2770 = vmul.f32 %v2623, %v2760
        %v2771 = vmul.f32 %v2625, %v2760
        %v2772 = vmul.f32 %v2626, %v2760
        %v2773 = vmul.f32 %v2628, %v2760
        %v2774 = vmul.f32 %v2629, %v2760
        %v2775 = vmul.f32 %v2631, %v2760
        %v2776 = vmul.f32 %v2632, %v2760
        %v2777 = vmul.f32 %v2634, %v2760
        %v2778 = vmul.f32 %v2635, %v2760
        %v2779 = vmul.f32 %v2637, %v2760
        %v2780 = vmul.f32 %v2638, %v2760
        %v2781 = vmul.f32 %v2640, %v2760
        %v2782 = vmul.f32 %v2641, %v2760
        %v2783 = vmul.f32 %v2643, %v2760
        %v2784 = vmul.f32 %v2644, %v2760
        %v2785 = vmul.f32 %v2646, %v2760
        %v2786 = vmul.f32 %v2647, %v2760
        %v2787 = vmul.f32 %v2649, %v2760
        %v2788 = vmul.f32 %v2650, %v2760
        %v2789 = vmul.f32 %v2652, %v2760
        %v2790 = vmul.f32 %v2653, %v2760
        %v2791 = vmul.f32 %v2655, %v2760
        %v2792 = vmul.f32 %v2656, %v2760
        %v2825 = vrot.slane %v2761, 1
        %v2826 = vrot.slane %v2762, 1
        %v2827 = vsel %vm1389, %v2825, %v2826
        %v2828 = vrot.slane %v2763, 1
        %v2829 = vrot.slane %v2764, 1
        %v2830 = vsel %vm1389, %v2828, %v2829
        %v2831 = vrot.slane %v2765, 1
        %v2832 = vrot.slane %v2766, 1
        %v2833 = vsel %vm1389, %v2831, %v2832
        %v2834 = vrot.slane %v2767, 1
        %v2835 = vrot.slane %v2768, 1
        %v2836 = vsel %vm1389, %v2834, %v2835
        %v2837 = vrot.slane %v2769, 1
        %v2838 = vrot.slane %v2770, 1
        %v2839 = vsel %vm1389, %v2837, %v2838
        %v2840 = vrot.slane %v2771, 1
        %v2841 = vrot.slane %v2772, 1
        %v2842 = vsel %vm1389, %v2840, %v2841
        %v2843 = vrot.slane %v2773, 1
        %v2844 = vrot.slane %v2774, 1
        %v2845 = vsel %vm1389, %v2843, %v2844
        %v2846 = vrot.slane %v2775, 1
        %v2847 = vrot.slane %v2776, 1
        %v2848 = vsel %vm1389, %v2846, %v2847
        %v2849 = vrot.slane %v2777, 1
        %v2850 = vrot.slane %v2778, 1
        %v2851 = vsel %vm1389, %v2849, %v2850
        %v2852 = vrot.slane %v2779, 1
        %v2853 = vrot.slane %v2780, 1
        %v2854 = vsel %vm1389, %v2852, %v2853
        %v2855 = vrot.slane %v2781, 1
        %v2856 = vrot.slane %v2782, 1
        %v2857 = vsel %vm1389, %v2855, %v2856
        %v2858 = vrot.slane %v2783, 1
        %v2859 = vrot.slane %v2784, 1
        %v2860 = vsel %vm1389, %v2858, %v2859
        %v2861 = vrot.slane %v2785, 1
        %v2862 = vrot.slane %v2786, 1
        %v2863 = vsel %vm1389, %v2861, %v2862
        %v2864 = vrot.slane %v2787, 1
        %v2865 = vrot.slane %v2788, 1
        %v2866 = vsel %vm1389, %v2864, %v2865
        %v2867 = vrot.slane %v2789, 1
        %v2868 = vrot.slane %v2790, 1
        %v2869 = vsel %vm1389, %v2867, %v2868
        %v2870 = vrot.slane %v2791, 1
        %v2871 = vrot.slane %v2792, 1
        %v2872 = vsel %vm1389, %v2870, %v2871
        %v2921 = vadd.f32 %v2709, %v2825
        %v2922 = vadd.f32 %v2710, %v2827
        %v2923 = vadd.f32 %v2711, %v2826
        %v2924 = vadd.f32 %v2712, %v2828
        %v2925 = vadd.f32 %v2713, %v2830
        %v2926 = vadd.f32 %v2714, %v2829
        %v2927 = vadd.f32 %v2715, %v2831
        %v2928 = vadd.f32 %v2716, %v2833
        %v2929 = vadd.f32 %v2717, %v2832
        %v2930 = vadd.f32 %v2718, %v2834
        %v2931 = vadd.f32 %v2719, %v2836
        %v2932 = vadd.f32 %v2720, %v2835
        %v2933 = vadd.f32 %v2721, %v2837
        %v2934 = vadd.f32 %v2722, %v2839
        %v2935 = vadd.f32 %v2723, %v2838
        %v2936 = vadd.f32 %v2724, %v2840
        %v2937 = vadd.f32 %v2725, %v2842
        %v2938 = vadd.f32 %v2726, %v2841
        %v2939 = vadd.f32 %v2727, %v2843
        %v2940 = vadd.f32 %v2728, %v2845
        %v2941 = vadd.f32 %v2729, %v2844
        %v2942 = vadd.f32 %v2730, %v2846
        %v2943 = vadd.f32 %v2731, %v2848
        %v2944 = vadd.f32 %v2732, %v2847
        %v2945 = vadd.f32 %v2733, %v2849
        %v2946 = vadd.f32 %v2734, %v2851
        %v2947 = vadd.f32 %v2735, %v2850
        %v2948 = vadd.f32 %v2736, %v2852
        %v2949 = vadd.f32 %v2737, %v2854
        %v2950 = vadd.f32 %v2738, %v2853
        %v2951 = vadd.f32 %v2739, %v2855
        %v2952 = vadd.f32 %v2740, %v2857
        %v2953 = vadd.f32 %v2741, %v2856
        %v2954 = vadd.f32 %v2742, %v2858
        %v2955 = vadd.f32 %v2743, %v2860
        %v2956 = vadd.f32 %v2744, %v2859
        %v2957 = vadd.f32 %v2745, %v2861
        %v2958 = vadd.f32 %v2746, %v2863
        %v2959 = vadd.f32 %v2747, %v2862
        %v2960 = vadd.f32 %v2748, %v2864
        %v2961 = vadd.f32 %v2749, %v2866
        %v2962 = vadd.f32 %v2750, %v2865
        %v2963 = vadd.f32 %v2751, %v2867
        %v2964 = vadd.f32 %v2752, %v2869
        %v2965 = vadd.f32 %v2753, %v2868
        %v2966 = vadd.f32 %v2754, %v2870
        %v2967 = vadd.f32 %v2755, %v2872
        %v2968 = vadd.f32 %v2756, %v2871
        %v2969 = vld [vmem:[%s2560 + $0xc] sm:$0x1]
        %v2970 = vld [vmem:[%s2560 + $0x1c] sm:$0x1]
        %v2971 = vld [vmem:[%s2560 + $0x2c] sm:$0x1]
        %v2972 = vld [vmem:[%s2560 + $0x3c] sm:$0x1]
        %v2973 = vld [vmem:[%s2560 + $0x4c] sm:$0x1]
        %v2974 = vld [vmem:[%s2560 + $0x5c] sm:$0x1]
        %v2975 = vld [vmem:[%s2560 + $0x6c] sm:$0x1]
        %v2976 = vld [vmem:[%s2560 + $0x7c] sm:$0x1]
        %v2977 = vld [vmem:[%s2560 + $0x8c] sm:$0x1]
        %v2978 = vld [vmem:[%s2560 + $0x9c] sm:$0x1]
        %v2979 = vld [vmem:[%s2560 + $0xac] sm:$0x1]
        %v2980 = vld [vmem:[%s2560 + $0xbc] sm:$0x1]
        %v2981 = vld [vmem:[%s2560 + $0xcc] sm:$0x1]
        %v2982 = vld [vmem:[%s2560 + $0xdc] sm:$0x1]
        %v2983 = vld [vmem:[%s2560 + $0xec] sm:$0x1]
        %v2984 = vld [vmem:[%s2560 + $0xfc] sm:$0x1]
        %v2985 = vunpack.c.l.bf16 %v2969
        %v2986 = vunpack.c.l.bf16 %v2970
        %v2987 = vunpack.c.l.bf16 %v2971
        %v2988 = vunpack.c.l.bf16 %v2972
        %v2989 = vunpack.c.l.bf16 %v2973
        %v2990 = vunpack.c.l.bf16 %v2974
        %v2991 = vunpack.c.l.bf16 %v2975
        %v2992 = vunpack.c.l.bf16 %v2976
        %v2993 = vunpack.c.l.bf16 %v2977
        %v2994 = vunpack.c.l.bf16 %v2978
        %v2995 = vunpack.c.l.bf16 %v2979
        %v2996 = vunpack.c.l.bf16 %v2980
        %v2997 = vunpack.c.l.bf16 %v2981
        %v2998 = vunpack.c.l.bf16 %v2982
        %v2999 = vunpack.c.l.bf16 %v2983
        %v3000 = vunpack.c.l.bf16 %v2984
        %v3001 = vlaneseq
        %v3002 = vshrl.u32 %v3001, 7
        %v3003 = vsub.s32 0, %v3002
        %v3004 = vrot.slane %v1124, %v3003
        %v3005 = vmul.f32 %v2610, %v3004
        %v3006 = vmul.f32 %v2611, %v3004
        %v3007 = vmul.f32 %v2985, %v3004
        %v3008 = vmul.f32 %v2613, %v3004
        %v3009 = vmul.f32 %v2614, %v3004
        %v3010 = vmul.f32 %v2986, %v3004
        %v3011 = vmul.f32 %v2616, %v3004
        %v3012 = vmul.f32 %v2617, %v3004
        %v3013 = vmul.f32 %v2987, %v3004
        %v3014 = vmul.f32 %v2619, %v3004
        %v3015 = vmul.f32 %v2620, %v3004
        %v3016 = vmul.f32 %v2988, %v3004
        %v3017 = vmul.f32 %v2622, %v3004
        %v3018 = vmul.f32 %v2623, %v3004
        %v3019 = vmul.f32 %v2989, %v3004
        %v3020 = vmul.f32 %v2625, %v3004
        %v3021 = vmul.f32 %v2626, %v3004
        %v3022 = vmul.f32 %v2990, %v3004
        %v3023 = vmul.f32 %v2628, %v3004
        %v3024 = vmul.f32 %v2629, %v3004
        %v3025 = vmul.f32 %v2991, %v3004
        %v3026 = vmul.f32 %v2631, %v3004
        %v3027 = vmul.f32 %v2632, %v3004
        %v3028 = vmul.f32 %v2992, %v3004
        %v3029 = vmul.f32 %v2634, %v3004
        %v3030 = vmul.f32 %v2635, %v3004
        %v3031 = vmul.f32 %v2993, %v3004
        %v3032 = vmul.f32 %v2637, %v3004
        %v3033 = vmul.f32 %v2638, %v3004
        %v3034 = vmul.f32 %v2994, %v3004
        %v3035 = vmul.f32 %v2640, %v3004
        %v3036 = vmul.f32 %v2641, %v3004
        %v3037 = vmul.f32 %v2995, %v3004
        %v3038 = vmul.f32 %v2643, %v3004
        %v3039 = vmul.f32 %v2644, %v3004
        %v3040 = vmul.f32 %v2996, %v3004
        %v3041 = vmul.f32 %v2646, %v3004
        %v3042 = vmul.f32 %v2647, %v3004
        %v3043 = vmul.f32 %v2997, %v3004
        %v3044 = vmul.f32 %v2649, %v3004
        %v3045 = vmul.f32 %v2650, %v3004
        %v3046 = vmul.f32 %v2998, %v3004
        %v3047 = vmul.f32 %v2652, %v3004
        %v3048 = vmul.f32 %v2653, %v3004
        %v3049 = vmul.f32 %v2999, %v3004
        %v3050 = vmul.f32 %v2655, %v3004
        %v3051 = vmul.f32 %v2656, %v3004
        %v3052 = vmul.f32 %v3000, %v3004
        %v3101 = vrot.slane %v3005, 2
        %v3102 = vrot.slane %v3006, 2
        %v3103 = vsel %vm1666, %v3101, %v3102
        %v3104 = vrot.slane %v3007, 2
        %v3105 = vsel %vm1666, %v3102, %v3104
        %v3106 = vrot.slane %v3008, 2
        %v3107 = vrot.slane %v3009, 2
        %v3108 = vsel %vm1666, %v3106, %v3107
        %v3109 = vrot.slane %v3010, 2
        %v3110 = vsel %vm1666, %v3107, %v3109
        %v3111 = vrot.slane %v3011, 2
        %v3112 = vrot.slane %v3012, 2
        %v3113 = vsel %vm1666, %v3111, %v3112
        %v3114 = vrot.slane %v3013, 2
        %v3115 = vsel %vm1666, %v3112, %v3114
        %v3116 = vrot.slane %v3014, 2
        %v3117 = vrot.slane %v3015, 2
        %v3118 = vsel %vm1666, %v3116, %v3117
        %v3119 = vrot.slane %v3016, 2
        %v3120 = vsel %vm1666, %v3117, %v3119
        %v3121 = vrot.slane %v3017, 2
        %v3122 = vrot.slane %v3018, 2
        %v3123 = vsel %vm1666, %v3121, %v3122
        %v3124 = vrot.slane %v3019, 2
        %v3125 = vsel %vm1666, %v3122, %v3124
        %v3126 = vrot.slane %v3020, 2
        %v3127 = vrot.slane %v3021, 2
        %v3128 = vsel %vm1666, %v3126, %v3127
        %v3129 = vrot.slane %v3022, 2
        %v3130 = vsel %vm1666, %v3127, %v3129
        %v3131 = vrot.slane %v3023, 2
        %v3132 = vrot.slane %v3024, 2
        %v3133 = vsel %vm1666, %v3131, %v3132
        %v3134 = vrot.slane %v3025, 2
        %v3135 = vsel %vm1666, %v3132, %v3134
        %v3136 = vrot.slane %v3026, 2
        %v3137 = vrot.slane %v3027, 2
        %v3138 = vsel %vm1666, %v3136, %v3137
        %v3139 = vrot.slane %v3028, 2
        %v3140 = vsel %vm1666, %v3137, %v3139
        %v3141 = vrot.slane %v3029, 2
        %v3142 = vrot.slane %v3030, 2
        %v3143 = vsel %vm1666, %v3141, %v3142
        %v3144 = vrot.slane %v3031, 2
        %v3145 = vsel %vm1666, %v3142, %v3144
        %v3146 = vrot.slane %v3032, 2
        %v3147 = vrot.slane %v3033, 2
        %v3148 = vsel %vm1666, %v3146, %v3147
        %v3149 = vrot.slane %v3034, 2
        %v3150 = vsel %vm1666, %v3147, %v3149
        %v3151 = vrot.slane %v3035, 2
        %v3152 = vrot.slane %v3036, 2
        %v3153 = vsel %vm1666, %v3151, %v3152
        %v3154 = vrot.slane %v3037, 2
        %v3155 = vsel %vm1666, %v3152, %v3154
        %v3156 = vrot.slane %v3038, 2
        %v3157 = vrot.slane %v3039, 2
        %v3158 = vsel %vm1666, %v3156, %v3157
        %v3159 = vrot.slane %v3040, 2
        %v3160 = vsel %vm1666, %v3157, %v3159
        %v3161 = vrot.slane %v3041, 2
        %v3162 = vrot.slane %v3042, 2
        %v3163 = vsel %vm1666, %v3161, %v3162
        %v3164 = vrot.slane %v3043, 2
        %v3165 = vsel %vm1666, %v3162, %v3164
        %v3166 = vrot.slane %v3044, 2
        %v3167 = vrot.slane %v3045, 2
        %v3168 = vsel %vm1666, %v3166, %v3167
        %v3169 = vrot.slane %v3046, 2
        %v3170 = vsel %vm1666, %v3167, %v3169
        %v3171 = vrot.slane %v3047, 2
        %v3172 = vrot.slane %v3048, 2
        %v3173 = vsel %vm1666, %v3171, %v3172
        %v3174 = vrot.slane %v3049, 2
        %v3175 = vsel %vm1666, %v3172, %v3174
        %v3176 = vrot.slane %v3050, 2
        %v3177 = vrot.slane %v3051, 2
        %v3178 = vsel %vm1666, %v3176, %v3177
        %v3179 = vrot.slane %v3052, 2
        %v3180 = vsel %vm1666, %v3177, %v3179
        %v3229 = vadd.f32 %v2921, %v3101
        %v3230 = vadd.f32 %v2922, %v3103
        %v3231 = vadd.f32 %v2923, %v3105
        %v3232 = vadd.f32 %v2924, %v3106
        %v3233 = vadd.f32 %v2925, %v3108
        %v3234 = vadd.f32 %v2926, %v3110
        %v3235 = vadd.f32 %v2927, %v3111
        %v3236 = vadd.f32 %v2928, %v3113
        %v3237 = vadd.f32 %v2929, %v3115
        %v3238 = vadd.f32 %v2930, %v3116
        %v3239 = vadd.f32 %v2931, %v3118
        %v3240 = vadd.f32 %v2932, %v3120
        %v3241 = vadd.f32 %v2933, %v3121
        %v3242 = vadd.f32 %v2934, %v3123
        %v3243 = vadd.f32 %v2935, %v3125
        %v3244 = vadd.f32 %v2936, %v3126
        %v3245 = vadd.f32 %v2937, %v3128
        %v3246 = vadd.f32 %v2938, %v3130
        %v3247 = vadd.f32 %v2939, %v3131
        %v3248 = vadd.f32 %v2940, %v3133
        %v3249 = vadd.f32 %v2941, %v3135
        %v3250 = vadd.f32 %v2942, %v3136
        %v3251 = vadd.f32 %v2943, %v3138
        %v3252 = vadd.f32 %v2944, %v3140
        %v3253 = vadd.f32 %v2945, %v3141
        %v3254 = vadd.f32 %v2946, %v3143
        %v3255 = vadd.f32 %v2947, %v3145
        %v3256 = vadd.f32 %v2948, %v3146
        %v3257 = vadd.f32 %v2949, %v3148
        %v3258 = vadd.f32 %v2950, %v3150
        %v3259 = vadd.f32 %v2951, %v3151
        %v3260 = vadd.f32 %v2952, %v3153
        %v3261 = vadd.f32 %v2953, %v3155
        %v3262 = vadd.f32 %v2954, %v3156
        %v3263 = vadd.f32 %v2955, %v3158
        %v3264 = vadd.f32 %v2956, %v3160
        %v3265 = vadd.f32 %v2957, %v3161
        %v3266 = vadd.f32 %v2958, %v3163
        %v3267 = vadd.f32 %v2959, %v3165
        %v3268 = vadd.f32 %v2960, %v3166
        %v3269 = vadd.f32 %v2961, %v3168
        %v3270 = vadd.f32 %v2962, %v3170
        %v3271 = vadd.f32 %v2963, %v3171
        %v3272 = vadd.f32 %v2964, %v3173
        %v3273 = vadd.f32 %v2965, %v3175
        %v3274 = vadd.f32 %v2966, %v3176
        %v3275 = vadd.f32 %v2967, %v3178
        %v3276 = vadd.f32 %v2968, %v3180
        %v3277 = vld [vmem:[%s4] sm:$0x1]
        %v3279 = vlaneseq
        %v3280 = vshrl.u32 %v3279, 7
        %v3281 = vsub.s32 0, %v3280
        %v3282 = vrot.slane %v3277, %v3281
        %v3284 = vadd.f32 %v3229, %v3282
        %v3285 = vadd.f32 %v3230, %v3282
        %v3286 = vadd.f32 %v3231, %v3282
        %v3287 = vadd.f32 %v3232, %v3282
        %v3288 = vadd.f32 %v3233, %v3282
        %v3289 = vadd.f32 %v3234, %v3282
        %v3290 = vadd.f32 %v3235, %v3282
        %v3291 = vadd.f32 %v3236, %v3282
        %v3292 = vadd.f32 %v3237, %v3282
        %v3293 = vadd.f32 %v3238, %v3282
        %v3294 = vadd.f32 %v3239, %v3282
        %v3295 = vadd.f32 %v3240, %v3282
        %v3296 = vadd.f32 %v3241, %v3282
        %v3297 = vadd.f32 %v3242, %v3282
        %v3298 = vadd.f32 %v3243, %v3282
        %v3299 = vadd.f32 %v3244, %v3282
        %v3300 = vadd.f32 %v3245, %v3282
        %v3301 = vadd.f32 %v3246, %v3282
        %v3302 = vadd.f32 %v3247, %v3282
        %v3303 = vadd.f32 %v3248, %v3282
        %v3304 = vadd.f32 %v3249, %v3282
        %v3305 = vadd.f32 %v3250, %v3282
        %v3306 = vadd.f32 %v3251, %v3282
        %v3307 = vadd.f32 %v3252, %v3282
        %v3308 = vadd.f32 %v3253, %v3282
        %v3309 = vadd.f32 %v3254, %v3282
        %v3310 = vadd.f32 %v3255, %v3282
        %v3311 = vadd.f32 %v3256, %v3282
        %v3312 = vadd.f32 %v3257, %v3282
        %v3313 = vadd.f32 %v3258, %v3282
        %v3314 = vadd.f32 %v3259, %v3282
        %v3315 = vadd.f32 %v3260, %v3282
        %v3316 = vadd.f32 %v3261, %v3282
        %v3317 = vadd.f32 %v3262, %v3282
        %v3318 = vadd.f32 %v3263, %v3282
        %v3319 = vadd.f32 %v3264, %v3282
        %v3320 = vadd.f32 %v3265, %v3282
        %v3321 = vadd.f32 %v3266, %v3282
        %v3322 = vadd.f32 %v3267, %v3282
        %v3323 = vadd.f32 %v3268, %v3282
        %v3324 = vadd.f32 %v3269, %v3282
        %v3325 = vadd.f32 %v3270, %v3282
        %v3326 = vadd.f32 %v3271, %v3282
        %v3327 = vadd.f32 %v3272, %v3282
        %v3328 = vadd.f32 %v3273, %v3282
        %v3329 = vadd.f32 %v3274, %v3282
        %v3330 = vadd.f32 %v3275, %v3282
        %v3331 = vadd.f32 %v3276, %v3282
        %vm3380 = vcmask 1040384
        %v3381 = vrot.slane %v3284, 7
        %v3382 = vrot.slane %v3285, 7
        %v3383 = vsel %vm3380, %v3381, %v3382
        %v3384 = vrot.slane %v3286, 7
        %v3385 = vsel %vm3380, %v3382, %v3384
        %v3386 = vrot.slane %v3287, 7
        %v3387 = vrot.slane %v3288, 7
        %v3388 = vsel %vm3380, %v3386, %v3387
        %v3389 = vrot.slane %v3289, 7
        %v3390 = vsel %vm3380, %v3387, %v3389
        %v3391 = vrot.slane %v3290, 7
        %v3392 = vrot.slane %v3291, 7
        %v3393 = vsel %vm3380, %v3391, %v3392
        %v3394 = vrot.slane %v3292, 7
        %v3395 = vsel %vm3380, %v3392, %v3394
        %v3396 = vrot.slane %v3293, 7
        %v3397 = vrot.slane %v3294, 7
        %v3398 = vsel %vm3380, %v3396, %v3397
        %v3399 = vrot.slane %v3295, 7
        %v3400 = vsel %vm3380, %v3397, %v3399
        %v3401 = vrot.slane %v3296, 7
        %v3402 = vrot.slane %v3297, 7
        %v3403 = vsel %vm3380, %v3401, %v3402
        %v3404 = vrot.slane %v3298, 7
        %v3405 = vsel %vm3380, %v3402, %v3404
        %v3406 = vrot.slane %v3299, 7
        %v3407 = vrot.slane %v3300, 7
        %v3408 = vsel %vm3380, %v3406, %v3407
        %v3409 = vrot.slane %v3301, 7
        %v3410 = vsel %vm3380, %v3407, %v3409
        %v3411 = vrot.slane %v3302, 7
        %v3412 = vrot.slane %v3303, 7
        %v3413 = vsel %vm3380, %v3411, %v3412
        %v3414 = vrot.slane %v3304, 7
        %v3415 = vsel %vm3380, %v3412, %v3414
        %v3416 = vrot.slane %v3305, 7
        %v3417 = vrot.slane %v3306, 7
        %v3418 = vsel %vm3380, %v3416, %v3417
        %v3419 = vrot.slane %v3307, 7
        %v3420 = vsel %vm3380, %v3417, %v3419
        %v3421 = vrot.slane %v3308, 7
        %v3422 = vrot.slane %v3309, 7
        %v3423 = vsel %vm3380, %v3421, %v3422
        %v3424 = vrot.slane %v3310, 7
        %v3425 = vsel %vm3380, %v3422, %v3424
        %v3426 = vrot.slane %v3311, 7
        %v3427 = vrot.slane %v3312, 7
        %v3428 = vsel %vm3380, %v3426, %v3427
        %v3429 = vrot.slane %v3313, 7
        %v3430 = vsel %vm3380, %v3427, %v3429
        %v3431 = vrot.slane %v3314, 7
        %v3432 = vrot.slane %v3315, 7
        %v3433 = vsel %vm3380, %v3431, %v3432
        %v3434 = vrot.slane %v3316, 7
        %v3435 = vsel %vm3380, %v3432, %v3434
        %v3436 = vrot.slane %v3317, 7
        %v3437 = vrot.slane %v3318, 7
        %v3438 = vsel %vm3380, %v3436, %v3437
        %v3439 = vrot.slane %v3319, 7
        %v3440 = vsel %vm3380, %v3437, %v3439
        %v3441 = vrot.slane %v3320, 7
        %v3442 = vrot.slane %v3321, 7
        %v3443 = vsel %vm3380, %v3441, %v3442
        %v3444 = vrot.slane %v3322, 7
        %v3445 = vsel %vm3380, %v3442, %v3444
        %v3446 = vrot.slane %v3323, 7
        %v3447 = vrot.slane %v3324, 7
        %v3448 = vsel %vm3380, %v3446, %v3447
        %v3449 = vrot.slane %v3325, 7
        %v3450 = vsel %vm3380, %v3447, %v3449
        %v3451 = vrot.slane %v3326, 7
        %v3452 = vrot.slane %v3327, 7
        %v3453 = vsel %vm3380, %v3451, %v3452
        %v3454 = vrot.slane %v3328, 7
        %v3455 = vsel %vm3380, %v3452, %v3454
        %v3456 = vrot.slane %v3329, 7
        %v3457 = vrot.slane %v3330, 7
        %v3458 = vsel %vm3380, %v3456, %v3457
        %v3459 = vrot.slane %v3331, 7
        %v3460 = vsel %vm3380, %v3457, %v3459
        %v3493 = vpack.c.bf16 %v3385, %v3383
        %v3494 = vpack.c.bf16 %v3390, %v3388
        %v3495 = vpack.c.bf16 %v3395, %v3393
        %v3496 = vpack.c.bf16 %v3400, %v3398
        %v3497 = vpack.c.bf16 %v3405, %v3403
        %v3498 = vpack.c.bf16 %v3410, %v3408
        %v3499 = vpack.c.bf16 %v3415, %v3413
        %v3500 = vpack.c.bf16 %v3420, %v3418
        %v3501 = vpack.c.bf16 %v3425, %v3423
        %v3502 = vpack.c.bf16 %v3430, %v3428
        %v3503 = vpack.c.bf16 %v3435, %v3433
        %v3504 = vpack.c.bf16 %v3440, %v3438
        %v3505 = vpack.c.bf16 %v3445, %v3443
        %v3506 = vpack.c.bf16 %v3450, %v3448
        %v3507 = vpack.c.bf16 %v3455, %v3453
        %v3508 = vpack.c.bf16 %v3460, %v3458
        %v3509 = vld [vmem:[#allocation10] sm:$0xf]
        %v3510 = vld [vmem:[#allocation10 + $0x4] sm:$0xf]
        %v3511 = vld [vmem:[#allocation10 + $0x8] sm:$0xf]
        %v3512 = vld [vmem:[#allocation10 + $0xc] sm:$0xf]
        %v3513 = vld [vmem:[#allocation10 + $0x10] sm:$0xf]
        %v3514 = vld [vmem:[#allocation10 + $0x14] sm:$0xf]
        %v3515 = vld [vmem:[#allocation10 + $0x18] sm:$0xf]
        %v3516 = vld [vmem:[#allocation10 + $0x1c] sm:$0xf]
        %v3517 = vld [vmem:[#allocation10 + $0x20] sm:$0xf]
        %v3518 = vld [vmem:[#allocation10 + $0x24] sm:$0xf]
        %v3519 = vld [vmem:[#allocation10 + $0x28] sm:$0xf]
        %v3520 = vld [vmem:[#allocation10 + $0x2c] sm:$0xf]
        %v3521 = vld [vmem:[#allocation10 + $0x30] sm:$0xf]
        %v3522 = vld [vmem:[#allocation10 + $0x34] sm:$0xf]
        %v3523 = vld [vmem:[#allocation10 + $0x38] sm:$0xf]
        %v3524 = vld [vmem:[#allocation10 + $0x3c] sm:$0xf]
        %v3525 = vld [vmem:[%s6] sm:$0x1]
        %v3527 = vlaneseq
        %v3528 = vshrl.u32 %v3527, 7
        %v3529 = vsub.s32 0, %v3528
        %v3530 = vrot.slane %v3525, %v3529
        %v3548 = vunpack.c.l.b16 %v3509
        %v3549 = vunpack.c.l.b16 %v3510
        %v3550 = vunpack.c.l.b16 %v3511
        %v3551 = vunpack.c.l.b16 %v3512
        %v3552 = vunpack.c.l.b16 %v3513
        %v3553 = vunpack.c.l.b16 %v3514
        %v3554 = vunpack.c.l.b16 %v3515
        %v3555 = vunpack.c.l.b16 %v3516
        %v3556 = vunpack.c.l.b16 %v3517
        %v3557 = vunpack.c.l.b16 %v3518
        %v3558 = vunpack.c.l.b16 %v3519
        %v3559 = vunpack.c.l.b16 %v3520
        %v3560 = vunpack.c.l.b16 %v3521
        %v3561 = vunpack.c.l.b16 %v3522
        %v3562 = vunpack.c.l.b16 %v3523
        %v3563 = vunpack.c.l.b16 %v3524
        %v3564 = vpack.c.b16 %v3549, %v3548
        %v3565 = vpack.c.b16 %v3551, %v3550
        %v3566 = vpack.c.b16 %v3553, %v3552
        %v3567 = vpack.c.b16 %v3555, %v3554
        %v3568 = vpack.c.b16 %v3557, %v3556
        %v3569 = vpack.c.b16 %v3559, %v3558
        %v3570 = vpack.c.b16 %v3561, %v3560
        %v3571 = vpack.c.b16 %v3563, %v3562
        %3580 = vmatprep.subr.bf16.mxu0 0
        %3581 = vmatpush1.bf16.msra.mxu0 %v3571
        %3582 = vmatprep.subr.bf16.mxu0 0
        %3583 = vmatpush1.bf16.msra.mxu0 %v3570
        %3584 = vmatprep.subr.bf16.mxu0 0
        %3585 = vmatpush1.bf16.msra.mxu0 %v3569
        %3586 = vmatprep.subr.bf16.mxu0 0
        %3587 = vmatpush1.bf16.msra.mxu0 %v3568
        %3588 = vmatprep.subr.bf16.mxu0 0
        %3589 = vmatpush1.bf16.msra.mxu0 %v3567
        %3590 = vmatprep.subr.bf16.mxu0 0
        %3591 = vmatpush1.bf16.msra.mxu0 %v3566
        %3592 = vmatprep.subr.bf16.mxu0 0
        %3593 = vmatpush1.bf16.msra.mxu0 %v3565
        %3594 = vmatprep.subr.bf16.mxu0 0
        %3595 = vmatpush1.bf16.msra.mxu0 %v3564
        %3596 = vmatprep.subr.bf16.mxu0 0
        %3597 = vmatpush2.bf16.msra.mxu0 0
        %3598 = vmatprep.subr.bf16.mxu0 0
        %3599 = vmatpush2.bf16.msra.mxu0 0
        %3600 = vmatprep.subr.bf16.mxu0 0
        %3601 = vmatpush2.bf16.msra.mxu0 0
        %3602 = vmatprep.subr.bf16.mxu0 0
        %3603 = vmatpush2.bf16.msra.mxu0 0
        %3604 = vmatprep.subr.bf16.mxu0 0
        %3605 = vmatpush2.bf16.msra.mxu0 0
        %3606 = vmatprep.subr.bf16.mxu0 0
        %3607 = vmatpush2.bf16.msra.mxu0 0
        %3608 = vmatprep.subr.bf16.mxu0 0
        %3609 = vmatpush2.bf16.msra.mxu0 0
        %3610 = vmatprep.subr.bf16.mxu0 0
        %3611 = vmatpush2.bf16.msra.mxu0 0
        %3612 = vmatprep.mubr.bf16.mxu0 0
        %3613 = vmatmul.mubr.bf16.gmra.mxu0 %v3493
        %v3614 = vpop.f32.mrf.mxu0
        %v3615 = vadd.f32 %v3530, %v3614
        %v3616 = vpop.f32.mrf.mxu0
        %v3617 = vpop.f32.mrf.mxu0
        %v3618 = vadd.f32 %v3530, %v3617
        %v3619 = vpop.f32.mrf.mxu0
        %3620 = vmatprep.mubr.bf16.mxu0 0
        %3621 = vmatmul.mubr.bf16.gmra.mxu0 %v3494
        %v3622 = vpop.f32.mrf.mxu0
        %v3623 = vadd.f32 %v3530, %v3622
        %v3624 = vpop.f32.mrf.mxu0
        %v3625 = vpop.f32.mrf.mxu0
        %v3626 = vadd.f32 %v3530, %v3625
        %v3627 = vpop.f32.mrf.mxu0
        %3628 = vmatprep.mubr.bf16.mxu0 0
        %3629 = vmatmul.mubr.bf16.gmra.mxu0 %v3495
        %v3630 = vpop.f32.mrf.mxu0
        %v3631 = vadd.f32 %v3530, %v3630
        %v3632 = vpop.f32.mrf.mxu0
        %v3633 = vpop.f32.mrf.mxu0
        %v3634 = vadd.f32 %v3530, %v3633
        %v3635 = vpop.f32.mrf.mxu0
        %3636 = vmatprep.mubr.bf16.mxu0 0
        %3637 = vmatmul.mubr.bf16.gmra.mxu0 %v3496
        %v3638 = vpop.f32.mrf.mxu0
        %v3639 = vadd.f32 %v3530, %v3638
        %v3640 = vpop.f32.mrf.mxu0
        %v3641 = vpop.f32.mrf.mxu0
        %v3642 = vadd.f32 %v3530, %v3641
        %v3643 = vpop.f32.mrf.mxu0
        %3644 = vmatprep.mubr.bf16.mxu0 0
        %3645 = vmatmul.mubr.bf16.gmra.mxu0 %v3497
        %v3646 = vpop.f32.mrf.mxu0
        %v3647 = vadd.f32 %v3530, %v3646
        %v3648 = vpop.f32.mrf.mxu0
        %v3649 = vpop.f32.mrf.mxu0
        %v3650 = vadd.f32 %v3530, %v3649
        %v3651 = vpop.f32.mrf.mxu0
        %3652 = vmatprep.mubr.bf16.mxu0 0
        %3653 = vmatmul.mubr.bf16.gmra.mxu0 %v3498
        %v3654 = vpop.f32.mrf.mxu0
        %v3655 = vadd.f32 %v3530, %v3654
        %v3656 = vpop.f32.mrf.mxu0
        %v3657 = vpop.f32.mrf.mxu0
        %v3658 = vadd.f32 %v3530, %v3657
        %v3659 = vpop.f32.mrf.mxu0
        %3660 = vmatprep.mubr.bf16.mxu0 0
        %3661 = vmatmul.mubr.bf16.gmra.mxu0 %v3499
        %v3662 = vpop.f32.mrf.mxu0
        %v3663 = vadd.f32 %v3530, %v3662
        %v3664 = vpop.f32.mrf.mxu0
        %v3665 = vpop.f32.mrf.mxu0
        %v3666 = vadd.f32 %v3530, %v3665
        %v3667 = vpop.f32.mrf.mxu0
        %3668 = vmatprep.mubr.bf16.mxu0 0
        %3669 = vmatmul.mubr.bf16.gmra.mxu0 %v3500
        %v3670 = vpop.f32.mrf.mxu0
        %v3671 = vadd.f32 %v3530, %v3670
        %v3672 = vpop.f32.mrf.mxu0
        %v3673 = vpop.f32.mrf.mxu0
        %v3674 = vadd.f32 %v3530, %v3673
        %v3675 = vpop.f32.mrf.mxu0
        %3676 = vmatprep.mubr.bf16.mxu0 0
        %3677 = vmatmul.mubr.bf16.gmra.mxu0 %v3501
        %v3678 = vpop.f32.mrf.mxu0
        %v3679 = vadd.f32 %v3530, %v3678
        %v3680 = vpop.f32.mrf.mxu0
        %v3681 = vpop.f32.mrf.mxu0
        %v3682 = vadd.f32 %v3530, %v3681
        %v3683 = vpop.f32.mrf.mxu0
        %3684 = vmatprep.mubr.bf16.mxu0 0
        %3685 = vmatmul.mubr.bf16.gmra.mxu0 %v3502
        %v3686 = vpop.f32.mrf.mxu0
        %v3687 = vadd.f32 %v3530, %v3686
        %v3688 = vpop.f32.mrf.mxu0
        %v3689 = vpop.f32.mrf.mxu0
        %v3690 = vadd.f32 %v3530, %v3689
        %v3691 = vpop.f32.mrf.mxu0
        %3692 = vmatprep.mubr.bf16.mxu0 0
        %3693 = vmatmul.mubr.bf16.gmra.mxu0 %v3503
        %v3694 = vpop.f32.mrf.mxu0
        %v3695 = vadd.f32 %v3530, %v3694
        %v3696 = vpop.f32.mrf.mxu0
        %v3697 = vpop.f32.mrf.mxu0
        %v3698 = vadd.f32 %v3530, %v3697
        %v3699 = vpop.f32.mrf.mxu0
        %3700 = vmatprep.mubr.bf16.mxu0 0
        %3701 = vmatmul.mubr.bf16.gmra.mxu0 %v3504
        %v3702 = vpop.f32.mrf.mxu0
        %v3703 = vadd.f32 %v3530, %v3702
        %v3704 = vpop.f32.mrf.mxu0
        %v3705 = vpop.f32.mrf.mxu0
        %v3706 = vadd.f32 %v3530, %v3705
        %v3707 = vpop.f32.mrf.mxu0
        %3708 = vmatprep.mubr.bf16.mxu0 0
        %3709 = vmatmul.mubr.bf16.gmra.mxu0 %v3505
        %v3710 = vpop.f32.mrf.mxu0
        %v3711 = vadd.f32 %v3530, %v3710
        %v3712 = vpop.f32.mrf.mxu0
        %v3713 = vpop.f32.mrf.mxu0
        %v3714 = vadd.f32 %v3530, %v3713
        %v3715 = vpop.f32.mrf.mxu0
        %3716 = vmatprep.mubr.bf16.mxu0 0
        %3717 = vmatmul.mubr.bf16.gmra.mxu0 %v3506
        %v3718 = vpop.f32.mrf.mxu0
        %v3719 = vadd.f32 %v3530, %v3718
        %v3720 = vpop.f32.mrf.mxu0
        %v3721 = vpop.f32.mrf.mxu0
        %v3722 = vadd.f32 %v3530, %v3721
        %v3723 = vpop.f32.mrf.mxu0
        %3724 = vmatprep.mubr.bf16.mxu0 0
        %3725 = vmatmul.mubr.bf16.gmra.mxu0 %v3507
        %v3726 = vpop.f32.mrf.mxu0
        %v3727 = vadd.f32 %v3530, %v3726
        %v3728 = vpop.f32.mrf.mxu0
        %v3729 = vpop.f32.mrf.mxu0
        %v3730 = vadd.f32 %v3530, %v3729
        %v3731 = vpop.f32.mrf.mxu0
        %3732 = vmatprep.mubr.bf16.mxu0 0
        %3733 = vmatmul.mubr.bf16.gmra.mxu0 %v3508
        %v3734 = vpop.f32.mrf.mxu0
        %v3735 = vadd.f32 %v3530, %v3734
        %v3736 = vpop.f32.mrf.mxu0
        %v3737 = vpop.f32.mrf.mxu0
        %v3738 = vadd.f32 %v3530, %v3737
        %v3739 = vpop.f32.mrf.mxu0
        %3740 = vdwg.mxu0
        %v3741 = vmax.f32 %v3615, 0.0
        %v3742 = vmax.f32 %v3618, 0.0
        %v3743 = vmax.f32 %v3623, 0.0
        %v3744 = vmax.f32 %v3626, 0.0
        %v3745 = vmax.f32 %v3631, 0.0
        %v3746 = vmax.f32 %v3634, 0.0
        %v3747 = vmax.f32 %v3639, 0.0
        %v3748 = vmax.f32 %v3642, 0.0
        %v3749 = vmax.f32 %v3647, 0.0
        %v3750 = vmax.f32 %v3650, 0.0
        %v3751 = vmax.f32 %v3655, 0.0
        %v3752 = vmax.f32 %v3658, 0.0
        %v3753 = vmax.f32 %v3663, 0.0
        %v3754 = vmax.f32 %v3666, 0.0
        %v3755 = vmax.f32 %v3671, 0.0
        %v3756 = vmax.f32 %v3674, 0.0
        %v3757 = vmax.f32 %v3679, 0.0
        %v3758 = vmax.f32 %v3682, 0.0
        %v3759 = vmax.f32 %v3687, 0.0
        %v3760 = vmax.f32 %v3690, 0.0
        %v3761 = vmax.f32 %v3695, 0.0
        %v3762 = vmax.f32 %v3698, 0.0
        %v3763 = vmax.f32 %v3703, 0.0
        %v3764 = vmax.f32 %v3706, 0.0
        %v3765 = vmax.f32 %v3711, 0.0
        %v3766 = vmax.f32 %v3714, 0.0
        %v3767 = vmax.f32 %v3719, 0.0
        %v3768 = vmax.f32 %v3722, 0.0
        %v3769 = vmax.f32 %v3727, 0.0
        %v3770 = vmax.f32 %v3730, 0.0
        %v3771 = vmax.f32 %v3735, 0.0
        %v3772 = vmax.f32 %v3738, 0.0
        %v3773 = vmin.f32 %v3741, 6.0
        %v3774 = vmin.f32 %v3742, 6.0
        %v3775 = vmin.f32 %v3743, 6.0
        %v3776 = vmin.f32 %v3744, 6.0
        %v3777 = vmin.f32 %v3745, 6.0
        %v3778 = vmin.f32 %v3746, 6.0
        %v3779 = vmin.f32 %v3747, 6.0
        %v3780 = vmin.f32 %v3748, 6.0
        %v3781 = vmin.f32 %v3749, 6.0
        %v3782 = vmin.f32 %v3750, 6.0
        %v3783 = vmin.f32 %v3751, 6.0
        %v3784 = vmin.f32 %v3752, 6.0
        %v3785 = vmin.f32 %v3753, 6.0
        %v3786 = vmin.f32 %v3754, 6.0
        %v3787 = vmin.f32 %v3755, 6.0
        %v3788 = vmin.f32 %v3756, 6.0
        %v3789 = vmin.f32 %v3757, 6.0
        %v3790 = vmin.f32 %v3758, 6.0
        %v3791 = vmin.f32 %v3759, 6.0
        %v3792 = vmin.f32 %v3760, 6.0
        %v3793 = vmin.f32 %v3761, 6.0
        %v3794 = vmin.f32 %v3762, 6.0
        %v3795 = vmin.f32 %v3763, 6.0
        %v3796 = vmin.f32 %v3764, 6.0
        %v3797 = vmin.f32 %v3765, 6.0
        %v3798 = vmin.f32 %v3766, 6.0
        %v3799 = vmin.f32 %v3767, 6.0
        %v3800 = vmin.f32 %v3768, 6.0
        %v3801 = vmin.f32 %v3769, 6.0
        %v3802 = vmin.f32 %v3770, 6.0
        %v3803 = vmin.f32 %v3771, 6.0
        %v3804 = vmin.f32 %v3772, 6.0
        %v3805 = vpack.c.bf16 %v3774, %v3773
        %v3806 = vpack.c.bf16 %v3776, %v3775
        %v3807 = vpack.c.bf16 %v3778, %v3777
        %v3808 = vpack.c.bf16 %v3780, %v3779
        %v3809 = vpack.c.bf16 %v3782, %v3781
        %v3810 = vpack.c.bf16 %v3784, %v3783
        %v3811 = vpack.c.bf16 %v3786, %v3785
        %v3812 = vpack.c.bf16 %v3788, %v3787
        %v3813 = vpack.c.bf16 %v3790, %v3789
        %v3814 = vpack.c.bf16 %v3792, %v3791
        %v3815 = vpack.c.bf16 %v3794, %v3793
        %v3816 = vpack.c.bf16 %v3796, %v3795
        %v3817 = vpack.c.bf16 %v3798, %v3797
        %v3818 = vpack.c.bf16 %v3800, %v3799
        %v3819 = vpack.c.bf16 %v3802, %v3801
        %v3820 = vpack.c.bf16 %v3804, %v3803
        %v3821 = vld [vmem:[#allocation11] sm:$0xf]
        %v3822 = vld [vmem:[#allocation11 + $0x4] sm:$0xf]
        %v3823 = vld [vmem:[#allocation11 + $0x8] sm:$0xf]
        %v3824 = vld [vmem:[#allocation11 + $0xc] sm:$0xf]
        %v3825 = vld [vmem:[#allocation11 + $0x10] sm:$0xf]
        %v3826 = vld [vmem:[#allocation11 + $0x14] sm:$0xf]
        %v3827 = vld [vmem:[#allocation11 + $0x18] sm:$0xf]
        %v3828 = vld [vmem:[#allocation11 + $0x1c] sm:$0xf]
        %v3829 = vld [vmem:[#allocation11 + $0x20] sm:$0xf]
        %v3830 = vld [vmem:[#allocation11 + $0x24] sm:$0xf]
        %v3831 = vld [vmem:[#allocation11 + $0x28] sm:$0xf]
        %v3832 = vld [vmem:[#allocation11 + $0x2c] sm:$0xf]
        %v3833 = vld [vmem:[#allocation11 + $0x30] sm:$0xf]
        %v3834 = vld [vmem:[#allocation11 + $0x34] sm:$0xf]
        %v3835 = vld [vmem:[#allocation11 + $0x38] sm:$0xf]
        %v3836 = vld [vmem:[#allocation11 + $0x3c] sm:$0xf]
        %v3837 = vld [vmem:[%s8] sm:$0x1]
        %v3839 = vlaneseq
        %v3840 = vshrl.u32 %v3839, 7
        %v3841 = vsub.s32 0, %v3840
        %v3842 = vrot.slane %v3837, %v3841
        %v3860 = vunpack.c.l.b16 %v3821
        %v3861 = vunpack.c.l.b16 %v3822
        %v3862 = vunpack.c.l.b16 %v3823
        %v3863 = vunpack.c.l.b16 %v3824
        %v3864 = vunpack.c.l.b16 %v3825
        %v3865 = vunpack.c.l.b16 %v3826
        %v3866 = vunpack.c.l.b16 %v3827
        %v3867 = vunpack.c.l.b16 %v3828
        %v3868 = vunpack.c.l.b16 %v3829
        %v3869 = vunpack.c.l.b16 %v3830
        %v3870 = vunpack.c.l.b16 %v3831
        %v3871 = vunpack.c.l.b16 %v3832
        %v3872 = vunpack.c.l.b16 %v3833
        %v3873 = vunpack.c.l.b16 %v3834
        %v3874 = vunpack.c.l.b16 %v3835
        %v3875 = vunpack.c.l.b16 %v3836
        %v3876 = vpack.c.b16 %v3861, %v3860
        %v3877 = vpack.c.b16 %v3863, %v3862
        %v3878 = vpack.c.b16 %v3865, %v3864
        %v3879 = vpack.c.b16 %v3867, %v3866
        %v3880 = vpack.c.b16 %v3869, %v3868
        %v3881 = vpack.c.b16 %v3871, %v3870
        %v3882 = vpack.c.b16 %v3873, %v3872
        %v3883 = vpack.c.b16 %v3875, %v3874
        %3892 = vmatprep.subr.bf16.mxu0 0
        %3893 = vmatpush1.bf16.msra.mxu0 %v3883
        %3894 = vmatprep.subr.bf16.mxu0 0
        %3895 = vmatpush1.bf16.msra.mxu0 %v3882
        %3896 = vmatprep.subr.bf16.mxu0 0
        %3897 = vmatpush1.bf16.msra.mxu0 %v3881
        %3898 = vmatprep.subr.bf16.mxu0 0
        %3899 = vmatpush1.bf16.msra.mxu0 %v3880
        %3900 = vmatprep.subr.bf16.mxu0 0
        %3901 = vmatpush1.bf16.msra.mxu0 %v3879
        %3902 = vmatprep.subr.bf16.mxu0 0
        %3903 = vmatpush1.bf16.msra.mxu0 %v3878
        %3904 = vmatprep.subr.bf16.mxu0 0
        %3905 = vmatpush1.bf16.msra.mxu0 %v3877
        %3906 = vmatprep.subr.bf16.mxu0 0
        %3907 = vmatpush1.bf16.msra.mxu0 %v3876
        %3908 = vmatprep.subr.bf16.mxu0 0
        %3909 = vmatpush2.bf16.msra.mxu0 0
        %3910 = vmatprep.subr.bf16.mxu0 0
        %3911 = vmatpush2.bf16.msra.mxu0 0
        %3912 = vmatprep.subr.bf16.mxu0 0
        %3913 = vmatpush2.bf16.msra.mxu0 0
        %3914 = vmatprep.subr.bf16.mxu0 0
        %3915 = vmatpush2.bf16.msra.mxu0 0
        %3916 = vmatprep.subr.bf16.mxu0 0
        %3917 = vmatpush2.bf16.msra.mxu0 0
        %3918 = vmatprep.subr.bf16.mxu0 0
        %3919 = vmatpush2.bf16.msra.mxu0 0
        %3920 = vmatprep.subr.bf16.mxu0 0
        %3921 = vmatpush2.bf16.msra.mxu0 0
        %3922 = vmatprep.subr.bf16.mxu0 0
        %3923 = vmatpush2.bf16.msra.mxu0 0
        %3924 = vmatprep.mubr.bf16.mxu0 0
        %3925 = vmatmul.mubr.bf16.gmra.mxu0 %v3805
        %v3926 = vpop.f32.mrf.mxu0
        %v3927 = vadd.f32 %v3842, %v3926
        %v3928 = vpop.f32.mrf.mxu0
        %v3929 = vpop.f32.mrf.mxu0
        %v3930 = vadd.f32 %v3842, %v3929
        %v3931 = vpop.f32.mrf.mxu0
        %3932 = vmatprep.mubr.bf16.mxu0 0
        %3933 = vmatmul.mubr.bf16.gmra.mxu0 %v3806
        %v3934 = vpop.f32.mrf.mxu0
        %v3935 = vadd.f32 %v3842, %v3934
        %v3936 = vpop.f32.mrf.mxu0
        %v3937 = vpop.f32.mrf.mxu0
        %v3938 = vadd.f32 %v3842, %v3937
        %v3939 = vpop.f32.mrf.mxu0
        %3940 = vmatprep.mubr.bf16.mxu0 0
        %3941 = vmatmul.mubr.bf16.gmra.mxu0 %v3807
        %v3942 = vpop.f32.mrf.mxu0
        %v3943 = vadd.f32 %v3842, %v3942
        %v3944 = vpop.f32.mrf.mxu0
        %v3945 = vpop.f32.mrf.mxu0
        %v3946 = vadd.f32 %v3842, %v3945
        %v3947 = vpop.f32.mrf.mxu0
        %3948 = vmatprep.mubr.bf16.mxu0 0
        %3949 = vmatmul.mubr.bf16.gmra.mxu0 %v3808
        %v3950 = vpop.f32.mrf.mxu0
        %v3951 = vadd.f32 %v3842, %v3950
        %v3952 = vpop.f32.mrf.mxu0
        %v3953 = vpop.f32.mrf.mxu0
        %v3954 = vadd.f32 %v3842, %v3953
        %v3955 = vpop.f32.mrf.mxu0
        %3956 = vmatprep.mubr.bf16.mxu0 0
        %3957 = vmatmul.mubr.bf16.gmra.mxu0 %v3809
        %v3958 = vpop.f32.mrf.mxu0
        %v3959 = vadd.f32 %v3842, %v3958
        %v3960 = vpop.f32.mrf.mxu0
        %v3961 = vpop.f32.mrf.mxu0
        %v3962 = vadd.f32 %v3842, %v3961
        %v3963 = vpop.f32.mrf.mxu0
        %3964 = vmatprep.mubr.bf16.mxu0 0
        %3965 = vmatmul.mubr.bf16.gmra.mxu0 %v3810
        %v3966 = vpop.f32.mrf.mxu0
        %v3967 = vadd.f32 %v3842, %v3966
        %v3968 = vpop.f32.mrf.mxu0
        %v3969 = vpop.f32.mrf.mxu0
        %v3970 = vadd.f32 %v3842, %v3969
        %v3971 = vpop.f32.mrf.mxu0
        %3972 = vmatprep.mubr.bf16.mxu0 0
        %3973 = vmatmul.mubr.bf16.gmra.mxu0 %v3811
        %v3974 = vpop.f32.mrf.mxu0
        %v3975 = vadd.f32 %v3842, %v3974
        %v3976 = vpop.f32.mrf.mxu0
        %v3977 = vpop.f32.mrf.mxu0
        %v3978 = vadd.f32 %v3842, %v3977
        %v3979 = vpop.f32.mrf.mxu0
        %3980 = vmatprep.mubr.bf16.mxu0 0
        %3981 = vmatmul.mubr.bf16.gmra.mxu0 %v3812
        %v3982 = vpop.f32.mrf.mxu0
        %v3983 = vadd.f32 %v3842, %v3982
        %v3984 = vpop.f32.mrf.mxu0
        %v3985 = vpop.f32.mrf.mxu0
        %v3986 = vadd.f32 %v3842, %v3985
        %v3987 = vpop.f32.mrf.mxu0
        %3988 = vmatprep.mubr.bf16.mxu0 0
        %3989 = vmatmul.mubr.bf16.gmra.mxu0 %v3813
        %v3990 = vpop.f32.mrf.mxu0
        %v3991 = vadd.f32 %v3842, %v3990
        %v3992 = vpop.f32.mrf.mxu0
        %v3993 = vpop.f32.mrf.mxu0
        %v3994 = vadd.f32 %v3842, %v3993
        %v3995 = vpop.f32.mrf.mxu0
        %3996 = vmatprep.mubr.bf16.mxu0 0
        %3997 = vmatmul.mubr.bf16.gmra.mxu0 %v3814
        %v3998 = vpop.f32.mrf.mxu0
        %v3999 = vadd.f32 %v3842, %v3998
        %v4000 = vpop.f32.mrf.mxu0
        %v4001 = vpop.f32.mrf.mxu0
        %v4002 = vadd.f32 %v3842, %v4001
        %v4003 = vpop.f32.mrf.mxu0
        %4004 = vmatprep.mubr.bf16.mxu0 0
        %4005 = vmatmul.mubr.bf16.gmra.mxu0 %v3815
        %v4006 = vpop.f32.mrf.mxu0
        %v4007 = vadd.f32 %v3842, %v4006
        %v4008 = vpop.f32.mrf.mxu0
        %v4009 = vpop.f32.mrf.mxu0
        %v4010 = vadd.f32 %v3842, %v4009
        %v4011 = vpop.f32.mrf.mxu0
        %4012 = vmatprep.mubr.bf16.mxu0 0
        %4013 = vmatmul.mubr.bf16.gmra.mxu0 %v3816
        %v4014 = vpop.f32.mrf.mxu0
        %v4015 = vadd.f32 %v3842, %v4014
        %v4016 = vpop.f32.mrf.mxu0
        %v4017 = vpop.f32.mrf.mxu0
        %v4018 = vadd.f32 %v3842, %v4017
        %v4019 = vpop.f32.mrf.mxu0
        %4020 = vmatprep.mubr.bf16.mxu0 0
        %4021 = vmatmul.mubr.bf16.gmra.mxu0 %v3817
        %v4022 = vpop.f32.mrf.mxu0
        %v4023 = vadd.f32 %v3842, %v4022
        %v4024 = vpop.f32.mrf.mxu0
        %v4025 = vpop.f32.mrf.mxu0
        %v4026 = vadd.f32 %v3842, %v4025
        %v4027 = vpop.f32.mrf.mxu0
        %4028 = vmatprep.mubr.bf16.mxu0 0
        %4029 = vmatmul.mubr.bf16.gmra.mxu0 %v3818
        %v4030 = vpop.f32.mrf.mxu0
        %v4031 = vadd.f32 %v3842, %v4030
        %v4032 = vpop.f32.mrf.mxu0
        %v4033 = vpop.f32.mrf.mxu0
        %v4034 = vadd.f32 %v3842, %v4033
        %v4035 = vpop.f32.mrf.mxu0
        %4036 = vmatprep.mubr.bf16.mxu0 0
        %4037 = vmatmul.mubr.bf16.gmra.mxu0 %v3819
        %v4038 = vpop.f32.mrf.mxu0
        %v4039 = vadd.f32 %v3842, %v4038
        %v4040 = vpop.f32.mrf.mxu0
        %v4041 = vpop.f32.mrf.mxu0
        %v4042 = vadd.f32 %v3842, %v4041
        %v4043 = vpop.f32.mrf.mxu0
        %4044 = vmatprep.mubr.bf16.mxu0 0
        %4045 = vmatmul.mubr.bf16.gmra.mxu0 %v3820
        %v4046 = vpop.f32.mrf.mxu0
        %v4047 = vadd.f32 %v3842, %v4046
        %v4048 = vpop.f32.mrf.mxu0
        %v4049 = vpop.f32.mrf.mxu0
        %v4050 = vadd.f32 %v3842, %v4049
        %v4051 = vpop.f32.mrf.mxu0
        %4052 = vdwg.mxu0
        %v4053 = vadd.f32 %v3927, %v557
        %v4054 = vadd.f32 %v3930, %v558
        %v4055 = vadd.f32 %v3935, %v559
        %v4056 = vadd.f32 %v3938, %v560
        %v4057 = vadd.f32 %v3943, %v561
        %v4058 = vadd.f32 %v3946, %v562
        %v4059 = vadd.f32 %v3951, %v563
        %v4060 = vadd.f32 %v3954, %v564
        %v4061 = vadd.f32 %v3959, %v565
        %v4062 = vadd.f32 %v3962, %v566
        %v4063 = vadd.f32 %v3967, %v567
        %v4064 = vadd.f32 %v3970, %v568
        %v4065 = vadd.f32 %v3975, %v569
        %v4066 = vadd.f32 %v3978, %v570
        %v4067 = vadd.f32 %v3983, %v571
        %v4068 = vadd.f32 %v3986, %v572
        %v4069 = vadd.f32 %v3991, %v573
        %v4070 = vadd.f32 %v3994, %v574
        %v4071 = vadd.f32 %v3999, %v575
        %v4072 = vadd.f32 %v4002, %v576
        %v4073 = vadd.f32 %v4007, %v577
        %v4074 = vadd.f32 %v4010, %v578
        %v4075 = vadd.f32 %v4015, %v579
        %v4076 = vadd.f32 %v4018, %v580
        %v4077 = vadd.f32 %v4023, %v581
        %v4078 = vadd.f32 %v4026, %v582
        %v4079 = vadd.f32 %v4031, %v583
        %v4080 = vadd.f32 %v4034, %v584
        %v4081 = vadd.f32 %v4039, %v585
        %v4082 = vadd.f32 %v4042, %v586
        %v4083 = vadd.f32 %v4047, %v587
        %v4084 = vadd.f32 %v4050, %v588
        %4085 = vst [vmem:[%s357] sm:$0xff] %v4053
        %4086 = vst [vmem:[%s357 + $0x8] sm:$0xff] %v4054
        %4087 = vst [vmem:[%s357 + $0x10] sm:$0xff] %v4055
        %4088 = vst [vmem:[%s357 + $0x18] sm:$0xff] %v4056
        %4089 = vst [vmem:[%s357 + $0x20] sm:$0xff] %v4057
        %4090 = vst [vmem:[%s357 + $0x28] sm:$0xff] %v4058
        %4091 = vst [vmem:[%s357 + $0x30] sm:$0xff] %v4059
        %4092 = vst [vmem:[%s357 + $0x38] sm:$0xff] %v4060
        %4093 = vst [vmem:[%s357 + $0x40] sm:$0xff] %v4061
        %4094 = vst [vmem:[%s357 + $0x48] sm:$0xff] %v4062
        %4095 = vst [vmem:[%s357 + $0x50] sm:$0xff] %v4063
        %4096 = vst [vmem:[%s357 + $0x58] sm:$0xff] %v4064
        %4097 = vst [vmem:[%s357 + $0x60] sm:$0xff] %v4065
        %4098 = vst [vmem:[%s357 + $0x68] sm:$0xff] %v4066
        %4099 = vst [vmem:[%s357 + $0x70] sm:$0xff] %v4067
        %4100 = vst [vmem:[%s357 + $0x78] sm:$0xff] %v4068
        %4101 = vst [vmem:[%s357 + $0x80] sm:$0xff] %v4069
        %4102 = vst [vmem:[%s357 + $0x88] sm:$0xff] %v4070
        %4103 = vst [vmem:[%s357 + $0x90] sm:$0xff] %v4071
        %4104 = vst [vmem:[%s357 + $0x98] sm:$0xff] %v4072
        %4105 = vst [vmem:[%s357 + $0xa0] sm:$0xff] %v4073
        %4106 = vst [vmem:[%s357 + $0xa8] sm:$0xff] %v4074
        %4107 = vst [vmem:[%s357 + $0xb0] sm:$0xff] %v4075
        %4108 = vst [vmem:[%s357 + $0xb8] sm:$0xff] %v4076
        %4109 = vst [vmem:[%s357 + $0xc0] sm:$0xff] %v4077
        %4110 = vst [vmem:[%s357 + $0xc8] sm:$0xff] %v4078
        %4111 = vst [vmem:[%s357 + $0xd0] sm:$0xff] %v4079
        %4112 = vst [vmem:[%s357 + $0xd8] sm:$0xff] %v4080
        %4113 = vst [vmem:[%s357 + $0xe0] sm:$0xff] %v4081
        %4114 = vst [vmem:[%s357 + $0xe8] sm:$0xff] %v4082
        %4115 = vst [vmem:[%s357 + $0xf0] sm:$0xff] %v4083
        %4116 = vst [vmem:[%s357 + $0xf8] sm:$0xff] %v4084
        %s4117 = sand.u32 %s216, 1
        %s4118 = scalar_lea.sflag [#allocation7], %s4117
        %s4119 = sand.u32 %s216, 1
        %s4120 = smul.addr %s4119, 256
        %s4121 = scalar_lea.vmem [#allocation13], %s4120
        // Predicated region
        $region93: #{tpu_custom_call.1} parent=51 // pred_check
          %p4122 = pneg %p226
        $region94: #{tpu_custom_call.1} parent=51 // pred_check_branch
          %4124 = sbr.rel (%p4122) target = $region96
        $region95: #{tpu_custom_call.1} parent=51 // pred_region
          %s4125 = smul.u32 16, %s31
          %s4127 = ssub.s32 4096, 4096
          %4128 = vsyncadd %s4118, %s4127
          %s4129 = smul.addr %s4125, 2
          %s4130 = smul.addr %s30, 32
          %s4131 = sadd.s32 %s4129, %s4130
          %s4132 = smul.addr %s4131, 128
          %s4133 = scalar_lea.hbm %s9, %s4132
          %s4134 = sshll.u32 %s4121, 4
          %s4135 = int_to_ptr.vmem [resolvable:$true] %s4134
          %4140 = dma.vmem_to_hbm [thread:$0]  %s4135, 4096, %s4133, %s4118, 128, 128, 8
        $region96: #{tpu_custom_call.1} parent=51 // pred_fallthru
          _
      $region52: #{tpu_custom_call.1} parent=5 // pred_fallthru
        _
      %p4141 = scmp.le.s32.totalorder 2, %s21
      // Predicated region
      $region97: #{tpu_custom_call.1} parent=5 // pred_check
        %p4142 = pneg %p4141
      $region98: #{tpu_custom_call.1} parent=5 // pred_check_branch
        %4144 = sbr.rel (%p4142) target = $region100
      $region99: #{tpu_custom_call.1} parent=5 // pred_region
        %s4145 = ssub.s32 %s21, 2
        // Predicated region
        $region101: #{tpu_custom_call.1} parent=99 // pred_check
          %p4146 = pneg %p232
        $region102: #{tpu_custom_call.1} parent=99 // pred_check_branch
          %4148 = sbr.rel (%p4146) target = $region104
        $region103: #{tpu_custom_call.1} parent=99 // pred_region
          %s4149 = sand.u32 %s217, 1
          %s4150 = scalar_lea.sflag [#allocation7], %s4149
          %s4151 = sand.u32 %s217, 1
          %s4152 = smul.addr %s4151, 256
          %s4153 = scalar_lea.vmem [#allocation13], %s4152
          %4154 = dma.done %s4150, 4096
        $region104: #{tpu_custom_call.1} parent=99 // pred_fallthru
          _
      $region100: #{tpu_custom_call.1} parent=5 // pred_fallthru
        _
    $region6: #{tpu_custom_call.1} parent=1 // loop_footer
      %s25 = sadd.s32 1, %s21
    $region7: #{tpu_custom_call.1} parent=1 // loop_footer_branch
      %20 = sbr.rel target = $region3
    $region8: #{tpu_custom_call.1} parent=1 // loop_exit
      _
    %4155 = vsyncpa [#allocation6], 1
    %s4156 = scalar_lea.sflag [#allocation6], 1
    %4157 = vsyncpa %s4156, 1
    %4158 = vsyncpa [#allocation9], 1
    %4159 = vsyncpa [#allocation12], 1
    %4160 = vsyncpa [#allocation7], 1
    %s4161 = scalar_lea.sflag [#allocation7], 1
    %4162 = vsyncpa %s4161, 1
  %4163 = vsyncmov [#allocation4]
  %s4164 = vpop.sfrf %4163
  %p4165 = scmp.eq.s32.totalorder %s4164, 0
  %p4166 = pneg %p4165
  %4168 = shalt.err (%p4166)
  %s4169 = scalar_lea.sflag [#allocation4], 1
  %4170 = vsyncmov %s4169
  %s4171 = vpop.sfrf %4170
  %p4172 = scmp.eq.s32.totalorder %s4171, 0
  %p4173 = pneg %p4172
  %4175 = shalt.err (%p4173)

</llo_original>
